<compile_context>
chip_gen: v6e
topology: v6e:2x2x1
jax: 0.10.0
libtpu: 0.0.40
codegen_flags: <defaults>
</compile_context>

<pallas_src>
import jax
import jax.numpy as jnp
from jax.experimental import pallas as pl
from jax.experimental.pallas import tpu as pltpu


def _round_up(x, m):
    return (x + m - 1) // m * m


# ---------------------------------------------------------------------------
# Pallas kernels
# ---------------------------------------------------------------------------

def _conv_pool_kernel(c00_ref, c01_ref, c10_ref, c11_ref, w_ref, b_ref, o_ref):
    """relu(maxpool2x2(conv3x3(x) + b)) for one tile of pooled output rows.

    c*_ref : (TM, K) bf16  -- im2col rows for the 4 positions of each 2x2 window
    w_ref  : (K, Cout) bf16
    b_ref  : (1, Cout) f32
    o_ref  : (TM, Cout) bf16
    """
    w = w_ref[...]

    def tap(c_ref):
        return jnp.dot(c_ref[...], w, preferred_element_type=jnp.float32)

    m = jnp.maximum(jnp.maximum(tap(c00_ref), tap(c01_ref)),
                    jnp.maximum(tap(c10_ref), tap(c11_ref)))
    # bias is identical across the 4 window positions and relu is monotone, so
    # max -> +bias -> relu  ==  pool(relu(conv + bias))
    o_ref[...] = jnp.maximum(m + b_ref[...], 0.0).astype(o_ref.dtype)


def _mlp_kernel(x_ref, w1_ref, b1_ref, w2_ref, b2_ref, o_ref):
    """fc2(relu(fc1(x))) fused in one kernel (f32 accumulate, bf16 MXU operands)."""
    h = jnp.dot(x_ref[...], w1_ref[...], preferred_element_type=jnp.float32)
    h = jnp.maximum(h + b1_ref[...], 0.0).astype(jnp.bfloat16)
    o = jnp.dot(h, w2_ref[...], preferred_element_type=jnp.float32) + b2_ref[...]
    o_ref[...] = o.astype(o_ref.dtype)


# ---------------------------------------------------------------------------
# Wrappers (layout plumbing in XLA, compute in Pallas)
# ---------------------------------------------------------------------------

def _im2col_pool_positions(x_nhwc):
    """3x3 / stride-1 / pad-1 im2col, split into the 4 positions of each 2x2 pool
    window.  Returns 4 arrays of shape (N*Ho*Wo, 9*Cin), column order (kh, kw, cin)."""
    N, H, W, C = x_nhwc.shape
    Ho, Wo = H // 2, W // 2
    xp = jnp.pad(x_nhwc, ((0, 0), (1, 1), (1, 1), (0, 0)))
    cols = []
    for di in range(2):
        for dj in range(2):
            taps = []
            for kh in range(3):
                for kw in range(3):
                    h0, w0 = di + kh, dj + kw
                    taps.append(xp[:, h0:h0 + 2 * Ho:2, w0:w0 + 2 * Wo:2, :])
            t = jnp.stack(taps, axis=3)                       # (N, Ho, Wo, 9, C)
            cols.append(t.reshape(N * Ho * Wo, 9 * C))
    return cols


def conv3x3_relu_pool(x_nhwc, w_km, b, *, block_rows=512):
    """y = maxpool2x2(relu(conv3x3(x) + b)); NHWC in/out; bf16 MXU / f32 accumulate."""
    N, H, W, _ = x_nhwc.shape
    Ho, Wo = H // 2, W // 2
    K, Cout = w_km.shape

    cols = _im2col_pool_positions(x_nhwc.astype(jnp.bfloat16))

    M = N * Ho * Wo
    TM = min(block_rows, _round_up(M, 8))        # multiple of 8, VMEM-bounded (v7x ok)
    Mp = _round_up(M, TM)
    if Mp != M:
        cols = [jnp.pad(c, ((0, Mp - M), (0, 0))) for c in cols]

    out = pl.pallas_call(
        _conv_pool_kernel,
        out_shape=jax.ShapeDtypeStruct((Mp, Cout), jnp.bfloat16),
        grid=(Mp // TM,),
        in_specs=[pl.BlockSpec((TM, K), lambda i: (i, 0)) for _ in range(4)]
        + [pl.BlockSpec((K, Cout), lambda i: (0, 0)),
           pl.BlockSpec((1, Cout), lambda i: (0, 0))],
        out_specs=pl.BlockSpec((TM, Cout), lambda i: (i, 0)),
        compiler_params=pltpu.CompilerParams(dimension_semantics=("parallel",)),
    )(*cols, w_km.astype(jnp.bfloat16), b.reshape(1, Cout).astype(jnp.float32))

    return out[:M].reshape(N, Ho, Wo, Cout)


def mlp_head(x, w1, b1, w2, b2, *, block_rows=256):
    """fc2(relu(fc1(x) + b1)) + b2.  x:(M,K1), w1:(K1,H1), w2:(H1,O) -> (M,O) f32."""
    M, K1 = x.shape
    H1 = w1.shape[1]
    O = w2.shape[1]

    TM = min(block_rows, _round_up(M, 8))
    Mp = _round_up(M, TM)
    xb = x.astype(jnp.bfloat16)
    if Mp != M:
        xb = jnp.pad(xb, ((0, Mp - M), (0, 0)))

    out = pl.pallas_call(
        _mlp_kernel,
        out_shape=jax.ShapeDtypeStruct((Mp, O), jnp.float32),
        grid=(Mp // TM,),
        in_specs=[pl.BlockSpec((TM, K1), lambda i: (i, 0)),
                  pl.BlockSpec((K1, H1), lambda i: (0, 0)),
                  pl.BlockSpec((1, H1), lambda i: (0, 0)),
                  pl.BlockSpec((H1, O), lambda i: (0, 0)),
                  pl.BlockSpec((1, O), lambda i: (0, 0))],
        out_specs=pl.BlockSpec((TM, O), lambda i: (i, 0)),
        compiler_params=pltpu.CompilerParams(dimension_semantics=("parallel",)),
    )(xb, w1.astype(jnp.bfloat16), b1.reshape(1, H1).astype(jnp.float32),
      w2.astype(jnp.bfloat16), b2.reshape(1, O).astype(jnp.float32))

    return out[:M]


# ---------------------------------------------------------------------------
# Model
# ---------------------------------------------------------------------------

def init_params(key):
    """PyTorch-default-style uniform(-1/sqrt(fan_in), 1/sqrt(fan_in)) parameters."""
    ks = jax.random.split(key, 8)

    def unif(k, shape, fan_in):
        bound = 1.0 / jnp.sqrt(fan_in)
        return jax.random.uniform(k, shape, jnp.float32, -bound, bound)

    return {
        "conv1_w": unif(ks[0], (16, 1, 3, 3), 1 * 9),          # (Cout, Cin, kh, kw)
        "conv1_b": unif(ks[1], (16,), 1 * 9),
        "conv2_w": unif(ks[2], (32, 16, 3, 3), 16 * 9),
        "conv2_b": unif(ks[3], (32,), 16 * 9),
        "fc1_w":   unif(ks[4], (128, 7 * 7 * 32), 7 * 7 * 32),  # (out, in) like nn.Linear
        "fc1_b":   unif(ks[5], (128,), 7 * 7 * 32),
        "fc2_w":   unif(ks[6], (10, 128), 128),
        "fc2_b":   unif(ks[7], (10,), 128),
    }


def cnn_mnist_forward(x_nchw, params):
    """Pallas CNNMNIST.forward.  x_nchw: (N, 1, 28, 28) f32 -> (N, 10) f32 logits."""
    N = x_nchw.shape[0]
    x = jnp.transpose(x_nchw, (0, 2, 3, 1))                     # NCHW -> NHWC

    # conv1 (1->16, 3x3, pad 1) + ReLU + MaxPool 2x2, fused
    w1 = params["conv1_w"].transpose(2, 3, 1, 0).reshape(9 * 1, 16)
    y = conv3x3_relu_pool(x, w1, params["conv1_b"])             # (N,14,14,16) bf16

    # conv2 (16->32, 3x3, pad 1) + ReLU + MaxPool 2x2, fused
    w2 = params["conv2_w"].transpose(2, 3, 1, 0).reshape(9 * 16, 32)
    y = conv3x3_relu_pool(y, w2, params["conv2_b"])             # (N,7,7,32) bf16

    # PyTorch flattens in NCHW (c,h,w) order; fold that permutation into fc1's
    # weight columns (one small weight transpose) instead of transposing activations.
    y = y.reshape(N, 7 * 7 * 32)                                # (h, w, c) order
    fc1_w_hwc = (params["fc1_w"].reshape(128, 32, 7, 7)
                 .transpose(0, 2, 3, 1).reshape(128, 7 * 7 * 32))

    # fc1 + ReLU + fc2, fused into one kernel
    return mlp_head(y, fc1_w_hwc.T, params["fc1_b"],
                    params["fc2_w"].T, params["fc2_b"])


# ---------------------------------------------------------------------------
# Reference (pure JAX/XLA) mirroring the bf16-operand / f32-accumulate numerics
# ---------------------------------------------------------------------------

def reference_forward(x_nchw, params):
    f32, bf16 = jnp.float32, jnp.bfloat16

    def conv(x, w, b):
        dn = jax.lax.conv_dimension_numbers(x.shape, w.shape, ("NCHW", "OIHW", "NCHW"))
        y = jax.lax.conv_general_dilated(
            x.astype(bf16), w.astype(bf16), window_strides=(1, 1),
            padding=((1, 1), (1, 1)), dimension_numbers=dn,
            preferred_element_type=f32)
        return y + b.reshape(1, -1, 1, 1)

    def pool(x):
        return jax.lax.reduce_window(x, -jnp.inf, jax.lax.max,
                                     (1, 1, 2, 2), (1, 1, 2, 2), "VALID")

    y = pool(jax.nn.relu(conv(x_nchw, params["conv1_w"], params["conv1_b"])))
    y = y.astype(bf16).astype(f32)          # kernels hand activations off in bf16
    y = pool(jax.nn.relu(conv(y, params["conv2_w"], params["conv2_b"])))
    y = y.astype(bf16)
    y = y.reshape(y.shape[0], -1)           # NCHW-order flatten
    h = jnp.dot(y, params["fc1_w"].T.astype(bf16), preferred_element_type=f32)
    h = jax.nn.relu(h + params["fc1_b"]).astype(bf16)
    return (jnp.dot(h, params["fc2_w"].T.astype(bf16), preferred_element_type=f32)
            + params["fc2_b"])


if __name__ == "__main__":
    key = jax.random.PRNGKey(0)
    kx, kp = jax.random.split(key)

    # MNIST-shaped deterministic input, small batch.
    x = jax.random.normal(kx, (2, 1, 28, 28), dtype=jnp.float32)
    params = init_params(kp)

    out = jax.block_until_ready(jax.jit(cnn_mnist_forward)(x, params))
    ref = jax.block_until_ready(jax.jit(reference_forward)(x, params))

    assert out.shape == (2, 10), out.shape
    max_err = jnp.max(jnp.abs(out - ref))
    assert jnp.allclose(out, ref, rtol=1e-2, atol=1e-2), f"max abs err {max_err}"

    print("KERNEL_OK")
</pallas_src>

<mosaic_0001>
module attributes {stable_mosaic.version = 11 : i64} {
  func.func @_conv_pool_kernel(%arg0: i32, %arg1: memref<392x9xbf16, #tpu.memory_space<vmem>>, %arg2: memref<392x9xbf16, #tpu.memory_space<vmem>>, %arg3: memref<392x9xbf16, #tpu.memory_space<vmem>>, %arg4: memref<392x9xbf16, #tpu.memory_space<vmem>>, %arg5: memref<9x16xbf16, #tpu.memory_space<vmem>>, %arg6: memref<1x16xf32, #tpu.memory_space<vmem>>, %arg7: memref<392x16xbf16, #tpu.memory_space<vmem>>) attributes {dimension_semantics = [#tpu.dimension_semantics<parallel>], iteration_bounds = array<i64: 1>, scalar_prefetch = 0 : i64, scratch_operands = 0 : i64, tpu.core_type = #tpu.core_type<tc>, window_params = [{transform_indices = @transform_0, window_bounds = array<i64: 392, 9>}, {transform_indices = @transform_1, window_bounds = array<i64: 392, 9>}, {transform_indices = @transform_2, window_bounds = array<i64: 392, 9>}, {transform_indices = @transform_3, window_bounds = array<i64: 392, 9>}, {pipeline_mode = #tpu.pipeline_mode<synchronous>, transform_indices = @transform_4, window_bounds = array<i64: 9, 16>}, {pipeline_mode = #tpu.pipeline_mode<synchronous>, transform_indices = @transform_5, window_bounds = array<i64: 1, 16>}, {transform_indices = @transform_6, window_bounds = array<i64: 392, 16>}]} {
    %c0 = arith.constant 0 : index
    %c0_0 = arith.constant 0 : index
    %0 = vector.load %arg5[%c0, %c0_0] : memref<9x16xbf16, #tpu.memory_space<vmem>>, vector<9x16xbf16>
    %c0_1 = arith.constant 0 : index
    %c0_2 = arith.constant 0 : index
    %1 = vector.load %arg1[%c0_1, %c0_2] : memref<392x9xbf16, #tpu.memory_space<vmem>>, vector<392x9xbf16>
    %cst = arith.constant dense<0.000000e+00> : vector<392x16xf32>
    %2 = tpu.matmul %1, %0, %cst {dimension_numbers = #tpu.dot_dimension_numbers<[1], [0], [0], [1], [0, 0, 1, 1], [], []>} : vector<392x9xbf16>, vector<9x16xbf16>, vector<392x16xf32> -> vector<392x16xf32>
    %c0_3 = arith.constant 0 : index
    %c0_4 = arith.constant 0 : index
    %3 = vector.load %arg2[%c0_3, %c0_4] : memref<392x9xbf16, #tpu.memory_space<vmem>>, vector<392x9xbf16>
    %cst_5 = arith.constant dense<0.000000e+00> : vector<392x16xf32>
    %4 = tpu.matmul %3, %0, %cst_5 {dimension_numbers = #tpu.dot_dimension_numbers<[1], [0], [0], [1], [0, 0, 1, 1], [], []>} : vector<392x9xbf16>, vector<9x16xbf16>, vector<392x16xf32> -> vector<392x16xf32>
    %5 = arith.maximumf %2, %4 : vector<392x16xf32>
    %c0_6 = arith.constant 0 : index
    %c0_7 = arith.constant 0 : index
    %6 = vector.load %arg3[%c0_6, %c0_7] : memref<392x9xbf16, #tpu.memory_space<vmem>>, vector<392x9xbf16>
    %cst_8 = arith.constant dense<0.000000e+00> : vector<392x16xf32>
    %7 = tpu.matmul %6, %0, %cst_8 {dimension_numbers = #tpu.dot_dimension_numbers<[1], [0], [0], [1], [0, 0, 1, 1], [], []>} : vector<392x9xbf16>, vector<9x16xbf16>, vector<392x16xf32> -> vector<392x16xf32>
    %c0_9 = arith.constant 0 : index
    %c0_10 = arith.constant 0 : index
    %8 = vector.load %arg4[%c0_9, %c0_10] : memref<392x9xbf16, #tpu.memory_space<vmem>>, vector<392x9xbf16>
    %cst_11 = arith.constant dense<0.000000e+00> : vector<392x16xf32>
    %9 = tpu.matmul %8, %0, %cst_11 {dimension_numbers = #tpu.dot_dimension_numbers<[1], [0], [0], [1], [0, 0, 1, 1], [], []>} : vector<392x9xbf16>, vector<9x16xbf16>, vector<392x16xf32> -> vector<392x16xf32>
    %10 = arith.maximumf %7, %9 : vector<392x16xf32>
    %11 = arith.maximumf %5, %10 : vector<392x16xf32>
    %c0_12 = arith.constant 0 : index
    %c0_13 = arith.constant 0 : index
    %12 = vector.load %arg6[%c0_12, %c0_13] : memref<1x16xf32, #tpu.memory_space<vmem>>, vector<1x16xf32>
    %13 = vector.broadcast %12 : vector<1x16xf32> to vector<392x16xf32>
    %14 = arith.addf %11, %13 : vector<392x16xf32>
    %cst_14 = arith.constant 0.000000e+00 : f32
    %15 = vector.broadcast %cst_14 : f32 to vector<392x16xf32>
    %16 = arith.maximumf %14, %15 : vector<392x16xf32>
    %17 = arith.truncf %16 : vector<392x16xf32> to vector<392x16xbf16>
    %c0_15 = arith.constant 0 : index
    %c0_16 = arith.constant 0 : index
    %18 = vector.load %arg7[%c0_15, %c0_16] : memref<392x16xbf16, #tpu.memory_space<vmem>>, vector<392x16xbf16>
    tpu.vector_store %arg7[%c0_15, %c0_16], %17 {strides = array<i32>} : memref<392x16xbf16, #tpu.memory_space<vmem>>, vector<392x16xbf16>,
    return
  }
  func.func @transform_0(%arg0: i32) -> (i32, i32) {
    %c0_i32 = arith.constant 0 : i32
    %c0_i32_0 = arith.constant 0 : i32
    return %arg0, %c0_i32 : i32, i32
  }
  func.func @transform_1(%arg0: i32) -> (i32, i32) {
    %c0_i32 = arith.constant 0 : i32
    %c0_i32_0 = arith.constant 0 : i32
    return %arg0, %c0_i32 : i32, i32
  }
  func.func @transform_2(%arg0: i32) -> (i32, i32) {
    %c0_i32 = arith.constant 0 : i32
    %c0_i32_0 = arith.constant 0 : i32
    return %arg0, %c0_i32 : i32, i32
  }
  func.func @transform_3(%arg0: i32) -> (i32, i32) {
    %c0_i32 = arith.constant 0 : i32
    %c0_i32_0 = arith.constant 0 : i32
    return %arg0, %c0_i32 : i32, i32
  }
  func.func @transform_4(%arg0: i32) -> (i32, i32) {
    %c0_i32 = arith.constant 0 : i32
    %c0_i32_0 = arith.constant 0 : i32
    %c0_i32_1 = arith.constant 0 : i32
    return %c0_i32, %c0_i32_0 : i32, i32
  }
  func.func @transform_5(%arg0: i32) -> (i32, i32) {
    %c0_i32 = arith.constant 0 : i32
    %c0_i32_0 = arith.constant 0 : i32
    %c0_i32_1 = arith.constant 0 : i32
    return %c0_i32, %c0_i32_0 : i32, i32
  }
  func.func @transform_6(%arg0: i32) -> (i32, i32) {
    %c0_i32 = arith.constant 0 : i32
    %c0_i32_0 = arith.constant 0 : i32
    return %arg0, %c0_i32 : i32, i32
  }
}

module attributes {stable_mosaic.version = 11 : i64} {
  func.func @_conv_pool_kernel(%arg0: i32, %arg1: memref<104x144xbf16, #tpu.memory_space<vmem>>, %arg2: memref<104x144xbf16, #tpu.memory_space<vmem>>, %arg3: memref<104x144xbf16, #tpu.memory_space<vmem>>, %arg4: memref<104x144xbf16, #tpu.memory_space<vmem>>, %arg5: memref<144x32xbf16, #tpu.memory_space<vmem>>, %arg6: memref<1x32xf32, #tpu.memory_space<vmem>>, %arg7: memref<104x32xbf16, #tpu.memory_space<vmem>>) attributes {dimension_semantics = [#tpu.dimension_semantics<parallel>], iteration_bounds = array<i64: 1>, scalar_prefetch = 0 : i64, scratch_operands = 0 : i64, tpu.core_type = #tpu.core_type<tc>, window_params = [{transform_indices = @transform_0, window_bounds = array<i64: 104, 144>}, {transform_indices = @transform_1, window_bounds = array<i64: 104, 144>}, {transform_indices = @transform_2, window_bounds = array<i64: 104, 144>}, {transform_indices = @transform_3, window_bounds = array<i64: 104, 144>}, {pipeline_mode = #tpu.pipeline_mode<synchronous>, transform_indices = @transform_4, window_bounds = array<i64: 144, 32>}, {pipeline_mode = #tpu.pipeline_mode<synchronous>, transform_indices = @transform_5, window_bounds = array<i64: 1, 32>}, {transform_indices = @transform_6, window_bounds = array<i64: 104, 32>}]} {
    %c0 = arith.constant 0 : index
    %c0_0 = arith.constant 0 : index
    %0 = vector.load %arg5[%c0, %c0_0] : memref<144x32xbf16, #tpu.memory_space<vmem>>, vector<144x32xbf16>
    %c0_1 = arith.constant 0 : index
    %c0_2 = arith.constant 0 : index
    %1 = vector.load %arg1[%c0_1, %c0_2] : memref<104x144xbf16, #tpu.memory_space<vmem>>, vector<104x144xbf16>
    %cst = arith.constant dense<0.000000e+00> : vector<104x32xf32>
    %2 = tpu.matmul %1, %0, %cst {dimension_numbers = #tpu.dot_dimension_numbers<[1], [0], [0], [1], [0, 0, 1, 1], [], []>} : vector<104x144xbf16>, vector<144x32xbf16>, vector<104x32xf32> -> vector<104x32xf32>
    %c0_3 = arith.constant 0 : index
    %c0_4 = arith.constant 0 : index
    %3 = vector.load %arg2[%c0_3, %c0_4] : memref<104x144xbf16, #tpu.memory_space<vmem>>, vector<104x144xbf16>
    %cst_5 = arith.constant dense<0.000000e+00> : vector<104x32xf32>
    %4 = tpu.matmul %3, %0, %cst_5 {dimension_numbers = #tpu.dot_dimension_numbers<[1], [0], [0], [1], [0, 0, 1, 1], [], []>} : vector<104x144xbf16>, vector<144x32xbf16>, vector<104x32xf32> -> vector<104x32xf32>
    %5 = arith.maximumf %2, %4 : vector<104x32xf32>
    %c0_6 = arith.constant 0 : index
    %c0_7 = arith.constant 0 : index
    %6 = vector.load %arg3[%c0_6, %c0_7] : memref<104x144xbf16, #tpu.memory_space<vmem>>, vector<104x144xbf16>
    %cst_8 = arith.constant dense<0.000000e+00> : vector<104x32xf32>
    %7 = tpu.matmul %6, %0, %cst_8 {dimension_numbers = #tpu.dot_dimension_numbers<[1], [0], [0], [1], [0, 0, 1, 1], [], []>} : vector<104x144xbf16>, vector<144x32xbf16>, vector<104x32xf32> -> vector<104x32xf32>
    %c0_9 = arith.constant 0 : index
    %c0_10 = arith.constant 0 : index
    %8 = vector.load %arg4[%c0_9, %c0_10] : memref<104x144xbf16, #tpu.memory_space<vmem>>, vector<104x144xbf16>
    %cst_11 = arith.constant dense<0.000000e+00> : vector<104x32xf32>
    %9 = tpu.matmul %8, %0, %cst_11 {dimension_numbers = #tpu.dot_dimension_numbers<[1], [0], [0], [1], [0, 0, 1, 1], [], []>} : vector<104x144xbf16>, vector<144x32xbf16>, vector<104x32xf32> -> vector<104x32xf32>
    %10 = arith.maximumf %7, %9 : vector<104x32xf32>
    %11 = arith.maximumf %5, %10 : vector<104x32xf32>
    %c0_12 = arith.constant 0 : index
    %c0_13 = arith.constant 0 : index
    %12 = vector.load %arg6[%c0_12, %c0_13] : memref<1x32xf32, #tpu.memory_space<vmem>>, vector<1x32xf32>
    %13 = vector.broadcast %12 : vector<1x32xf32> to vector<104x32xf32>
    %14 = arith.addf %11, %13 : vector<104x32xf32>
    %cst_14 = arith.constant 0.000000e+00 : f32
    %15 = vector.broadcast %cst_14 : f32 to vector<104x32xf32>
    %16 = arith.maximumf %14, %15 : vector<104x32xf32>
    %17 = arith.truncf %16 : vector<104x32xf32> to vector<104x32xbf16>
    %c0_15 = arith.constant 0 : index
    %c0_16 = arith.constant 0 : index
    %18 = vector.load %arg7[%c0_15, %c0_16] : memref<104x32xbf16, #tpu.memory_space<vmem>>, vector<104x32xbf16>
    tpu.vector_store %arg7[%c0_15, %c0_16], %17 {strides = array<i32>} : memref<104x32xbf16, #tpu.memory_space<vmem>>, vector<104x32xbf16>,
    return
  }
  func.func @transform_0(%arg0: i32) -> (i32, i32) {
    %c0_i32 = arith.constant 0 : i32
    %c0_i32_0 = arith.constant 0 : i32
    return %arg0, %c0_i32 : i32, i32
  }
  func.func @transform_1(%arg0: i32) -> (i32, i32) {
    %c0_i32 = arith.constant 0 : i32
    %c0_i32_0 = arith.constant 0 : i32
    return %arg0, %c0_i32 : i32, i32
  }
  func.func @transform_2(%arg0: i32) -> (i32, i32) {
    %c0_i32 = arith.constant 0 : i32
    %c0_i32_0 = arith.constant 0 : i32
    return %arg0, %c0_i32 : i32, i32
  }
  func.func @transform_3(%arg0: i32) -> (i32, i32) {
    %c0_i32 = arith.constant 0 : i32
    %c0_i32_0 = arith.constant 0 : i32
    return %arg0, %c0_i32 : i32, i32
  }
  func.func @transform_4(%arg0: i32) -> (i32, i32) {
    %c0_i32 = arith.constant 0 : i32
    %c0_i32_0 = arith.constant 0 : i32
    %c0_i32_1 = arith.constant 0 : i32
    return %c0_i32, %c0_i32_0 : i32, i32
  }
  func.func @transform_5(%arg0: i32) -> (i32, i32) {
    %c0_i32 = arith.constant 0 : i32
    %c0_i32_0 = arith.constant 0 : i32
    %c0_i32_1 = arith.constant 0 : i32
    return %c0_i32, %c0_i32_0 : i32, i32
  }
  func.func @transform_6(%arg0: i32) -> (i32, i32) {
    %c0_i32 = arith.constant 0 : i32
    %c0_i32_0 = arith.constant 0 : i32
    return %arg0, %c0_i32 : i32, i32
  }
}

module attributes {stable_mosaic.version = 11 : i64} {
  func.func @_mlp_kernel(%arg0: i32, %arg1: memref<8x1568xbf16, #tpu.memory_space<vmem>>, %arg2: memref<1568x128xbf16, #tpu.memory_space<vmem>>, %arg3: memref<1x128xf32, #tpu.memory_space<vmem>>, %arg4: memref<128x10xbf16, #tpu.memory_space<vmem>>, %arg5: memref<1x10xf32, #tpu.memory_space<vmem>>, %arg6: memref<8x10xf32, #tpu.memory_space<vmem>>) attributes {dimension_semantics = [#tpu.dimension_semantics<parallel>], iteration_bounds = array<i64: 1>, scalar_prefetch = 0 : i64, scratch_operands = 0 : i64, tpu.core_type = #tpu.core_type<tc>, window_params = [{transform_indices = @transform_0, window_bounds = array<i64: 8, 1568>}, {pipeline_mode = #tpu.pipeline_mode<synchronous>, transform_indices = @transform_1, window_bounds = array<i64: 1568, 128>}, {pipeline_mode = #tpu.pipeline_mode<synchronous>, transform_indices = @transform_2, window_bounds = array<i64: 1, 128>}, {pipeline_mode = #tpu.pipeline_mode<synchronous>, transform_indices = @transform_3, window_bounds = array<i64: 128, 10>}, {pipeline_mode = #tpu.pipeline_mode<synchronous>, transform_indices = @transform_4, window_bounds = array<i64: 1, 10>}, {transform_indices = @transform_5, window_bounds = array<i64: 8, 10>}]} {
    %c0 = arith.constant 0 : index
    %c0_0 = arith.constant 0 : index
    %0 = vector.load %arg1[%c0, %c0_0] : memref<8x1568xbf16, #tpu.memory_space<vmem>>, vector<8x1568xbf16>
    %c0_1 = arith.constant 0 : index
    %c0_2 = arith.constant 0 : index
    %1 = vector.load %arg2[%c0_1, %c0_2] : memref<1568x128xbf16, #tpu.memory_space<vmem>>, vector<1568x128xbf16>
    %cst = arith.constant dense<0.000000e+00> : vector<8x128xf32>
    %2 = tpu.matmul %0, %1, %cst {dimension_numbers = #tpu.dot_dimension_numbers<[1], [0], [0], [1], [0, 0, 1, 1], [], []>} : vector<8x1568xbf16>, vector<1568x128xbf16>, vector<8x128xf32> -> vector<8x128xf32>
    %c0_3 = arith.constant 0 : index
    %c0_4 = arith.constant 0 : index
    %3 = vector.load %arg3[%c0_3, %c0_4] : memref<1x128xf32, #tpu.memory_space<vmem>>, vector<1x128xf32>
    %4 = vector.broadcast %3 : vector<1x128xf32> to vector<8x128xf32>
    %5 = arith.addf %2, %4 : vector<8x128xf32>
    %cst_5 = arith.constant 0.000000e+00 : f32
    %6 = vector.broadcast %cst_5 : f32 to vector<8x128xf32>
    %7 = arith.maximumf %5, %6 : vector<8x128xf32>
    %8 = arith.truncf %7 : vector<8x128xf32> to vector<8x128xbf16>
    %c0_6 = arith.constant 0 : index
    %c0_7 = arith.constant 0 : index
    %9 = vector.load %arg4[%c0_6, %c0_7] : memref<128x10xbf16, #tpu.memory_space<vmem>>, vector<128x10xbf16>
    %cst_8 = arith.constant dense<0.000000e+00> : vector<8x10xf32>
    %10 = tpu.matmul %8, %9, %cst_8 {dimension_numbers = #tpu.dot_dimension_numbers<[1], [0], [0], [1], [0, 0, 1, 1], [], []>} : vector<8x128xbf16>, vector<128x10xbf16>, vector<8x10xf32> -> vector<8x10xf32>
    %c0_9 = arith.constant 0 : index
    %c0_10 = arith.constant 0 : index
    %11 = vector.load %arg5[%c0_9, %c0_10] : memref<1x10xf32, #tpu.memory_space<vmem>>, vector<1x10xf32>
    %12 = vector.broadcast %11 : vector<1x10xf32> to vector<8x10xf32>
    %13 = arith.addf %10, %12 : vector<8x10xf32>
    %c0_11 = arith.constant 0 : index
    %c0_12 = arith.constant 0 : index
    %14 = vector.load %arg6[%c0_11, %c0_12] : memref<8x10xf32, #tpu.memory_space<vmem>>, vector<8x10xf32>
    tpu.vector_store %arg6[%c0_11, %c0_12], %13 {strides = array<i32>} : memref<8x10xf32, #tpu.memory_space<vmem>>, vector<8x10xf32>,
    return
  }
  func.func @transform_0(%arg0: i32) -> (i32, i32) {
    %c0_i32 = arith.constant 0 : i32
    %c0_i32_0 = arith.constant 0 : i32
    return %arg0, %c0_i32 : i32, i32
  }
  func.func @transform_1(%arg0: i32) -> (i32, i32) {
    %c0_i32 = arith.constant 0 : i32
    %c0_i32_0 = arith.constant 0 : i32
    %c0_i32_1 = arith.constant 0 : i32
    return %c0_i32, %c0_i32_0 : i32, i32
  }
  func.func @transform_2(%arg0: i32) -> (i32, i32) {
    %c0_i32 = arith.constant 0 : i32
    %c0_i32_0 = arith.constant 0 : i32
    %c0_i32_1 = arith.constant 0 : i32
    return %c0_i32, %c0_i32_0 : i32, i32
  }
  func.func @transform_3(%arg0: i32) -> (i32, i32) {
    %c0_i32 = arith.constant 0 : i32
    %c0_i32_0 = arith.constant 0 : i32
    %c0_i32_1 = arith.constant 0 : i32
    return %c0_i32, %c0_i32_0 : i32, i32
  }
  func.func @transform_4(%arg0: i32) -> (i32, i32) {
    %c0_i32 = arith.constant 0 : i32
    %c0_i32_0 = arith.constant 0 : i32
    %c0_i32_1 = arith.constant 0 : i32
    return %c0_i32, %c0_i32_0 : i32, i32
  }
  func.func @transform_5(%arg0: i32) -> (i32, i32) {
    %c0_i32 = arith.constant 0 : i32
    %c0_i32_0 = arith.constant 0 : i32
    return %arg0, %c0_i32 : i32, i32
  }
}

</mosaic_0001>

<llo_original>
// kernel: cnn_mnist_forward.3
$region0: #{cnn_mnist_forward.3}
  #allocation0 [shape = 'u32[]', space=smem, size = 0x4, offset = 0x4, fixed_abs, tag = 'smem constant byte address 0x4 - core index']
  #allocation1 [shape = 'u32[144,128]{1,0:T(1,128)}', space=vmem, size = 0x12000, scoped, tag = 'internal scratch']
  %s0 = inlined_call_operand.vmem [shape: bf16[392,9], index: 0, kind: input, shape index: {}]
  %s1 = inlined_call_operand.vmem [shape: bf16[392,9], index: 1, kind: input, shape index: {}]
  %s2 = inlined_call_operand.vmem [shape: bf16[392,9], index: 2, kind: input, shape index: {}]
  %s3 = inlined_call_operand.vmem [shape: bf16[392,9], index: 3, kind: input, shape index: {}]
  %s4 = inlined_call_operand.vmem [shape: bf16[9,16], index: 4, kind: input, shape index: {}]
  %s5 = inlined_call_operand.vmem [shape: f32[1,16], index: 5, kind: input, shape index: {}]
  %s6 = inlined_call_operand.vmem [shape: bf16[392,16], index: 6, kind: output, shape index: {}]
  %s7 = sld [smem:[#allocation0]]
  $region34: #{cnn_mnist_forward.3} parent=0
    _
  %s9 = ssub.s32 1, %s7
  %s10 = scalar_select 0, %s9, %s7
  // Predicated region
  $region2: #{cnn_mnist_forward.3} parent=0 // pred_check
    _
  $region3: #{cnn_mnist_forward.3} parent=0 // pred_check_branch
    %12 = sbr.rel (0) target = $region5
  $region4: #{cnn_mnist_forward.3} parent=0 // pred_region
    _
  $region5: #{cnn_mnist_forward.3} parent=0 // pred_fallthru
    _
  // Predicated region
  $region6: #{cnn_mnist_forward.3} parent=0 // pred_check
    _
  $region7: #{cnn_mnist_forward.3} parent=0 // pred_check_branch
    %14 = sbr.rel (0) target = $region9
  $region8: #{cnn_mnist_forward.3} parent=0 // pred_region
    _
  $region9: #{cnn_mnist_forward.3} parent=0 // pred_fallthru
    _
  // Predicated region
  $region10: #{cnn_mnist_forward.3} parent=0 // pred_check
    _
  $region11: #{cnn_mnist_forward.3} parent=0 // pred_check_branch
    %16 = sbr.rel (0) target = $region13
  $region12: #{cnn_mnist_forward.3} parent=0 // pred_region
    _
  $region13: #{cnn_mnist_forward.3} parent=0 // pred_fallthru
    _
  // Predicated region
  $region14: #{cnn_mnist_forward.3} parent=0 // pred_check
    _
  $region15: #{cnn_mnist_forward.3} parent=0 // pred_check_branch
    %18 = sbr.rel (0) target = $region17
  $region16: #{cnn_mnist_forward.3} parent=0 // pred_region
    _
  $region17: #{cnn_mnist_forward.3} parent=0 // pred_fallthru
    _
  // Predicated region
  $region18: #{cnn_mnist_forward.3} parent=0 // pred_check
    _
  $region19: #{cnn_mnist_forward.3} parent=0 // pred_check_branch
    %20 = sbr.rel (0) target = $region21
  $region20: #{cnn_mnist_forward.3} parent=0 // pred_region
    _
  $region21: #{cnn_mnist_forward.3} parent=0 // pred_fallthru
    _
  // Predicated region
  $region22: #{cnn_mnist_forward.3} parent=0 // pred_check
    _
  $region23: #{cnn_mnist_forward.3} parent=0 // pred_check_branch
    %22 = sbr.rel (0) target = $region25
  $region24: #{cnn_mnist_forward.3} parent=0 // pred_region
    _
  $region25: #{cnn_mnist_forward.3} parent=0 // pred_fallthru
    _
  %v24 = vld [vmem:[%s4] sm:$0xf]
  %v25 = vld [vmem:[%s4 + $0x4] sm:$0x1]
  %v26 = vld [vmem:[%s0] sm:$0xf]
  %v27 = vld [vmem:[%s0 + $0x4] sm:$0xf]
  %v28 = vld [vmem:[%s0 + $0x8] sm:$0xf]
  %v29 = vld [vmem:[%s0 + $0xc] sm:$0xf]
  %v30 = vld [vmem:[%s0 + $0x10] sm:$0xf]
  %v31 = vld [vmem:[%s0 + $0x14] sm:$0xf]
  %v32 = vld [vmem:[%s0 + $0x18] sm:$0xf]
  %v33 = vld [vmem:[%s0 + $0x1c] sm:$0xf]
  %v34 = vld [vmem:[%s0 + $0x20] sm:$0xf]
  %v35 = vld [vmem:[%s0 + $0x24] sm:$0xf]
  %v36 = vld [vmem:[%s0 + $0x28] sm:$0xf]
  %v37 = vld [vmem:[%s0 + $0x2c] sm:$0xf]
  %v38 = vld [vmem:[%s0 + $0x30] sm:$0xf]
  %v39 = vld [vmem:[%s0 + $0x34] sm:$0xf]
  %v40 = vld [vmem:[%s0 + $0x38] sm:$0xf]
  %v41 = vld [vmem:[%s0 + $0x3c] sm:$0xf]
  %v42 = vld [vmem:[%s0 + $0x40] sm:$0xf]
  %v43 = vld [vmem:[%s0 + $0x44] sm:$0xf]
  %v44 = vld [vmem:[%s0 + $0x48] sm:$0xf]
  %v45 = vld [vmem:[%s0 + $0x4c] sm:$0xf]
  %v46 = vld [vmem:[%s0 + $0x50] sm:$0xf]
  %v47 = vld [vmem:[%s0 + $0x54] sm:$0xf]
  %v48 = vld [vmem:[%s0 + $0x58] sm:$0xf]
  %v49 = vld [vmem:[%s0 + $0x5c] sm:$0xf]
  %v50 = vld [vmem:[%s0 + $0x60] sm:$0xf]
  %v51 = vld [vmem:[%s0 + $0x64] sm:$0xf]
  %v52 = vld [vmem:[%s0 + $0x68] sm:$0xf]
  %v53 = vld [vmem:[%s0 + $0x6c] sm:$0xf]
  %v54 = vld [vmem:[%s0 + $0x70] sm:$0xf]
  %v55 = vld [vmem:[%s0 + $0x74] sm:$0xf]
  %v56 = vld [vmem:[%s0 + $0x78] sm:$0xf]
  %v57 = vld [vmem:[%s0 + $0x7c] sm:$0xf]
  %v58 = vld [vmem:[%s0 + $0x80] sm:$0xf]
  %v59 = vld [vmem:[%s0 + $0x84] sm:$0xf]
  %v60 = vld [vmem:[%s0 + $0x88] sm:$0xf]
  %v61 = vld [vmem:[%s0 + $0x8c] sm:$0xf]
  %v62 = vld [vmem:[%s0 + $0x90] sm:$0xf]
  %v63 = vld [vmem:[%s0 + $0x94] sm:$0xf]
  %v64 = vld [vmem:[%s0 + $0x98] sm:$0xf]
  %v65 = vld [vmem:[%s0 + $0x9c] sm:$0xf]
  %v66 = vld [vmem:[%s0 + $0xa0] sm:$0xf]
  %v67 = vld [vmem:[%s0 + $0xa4] sm:$0xf]
  %v68 = vld [vmem:[%s0 + $0xa8] sm:$0xf]
  %v69 = vld [vmem:[%s0 + $0xac] sm:$0xf]
  %v70 = vld [vmem:[%s0 + $0xb0] sm:$0xf]
  %v71 = vld [vmem:[%s0 + $0xb4] sm:$0xf]
  %v72 = vld [vmem:[%s0 + $0xb8] sm:$0xf]
  %v73 = vld [vmem:[%s0 + $0xbc] sm:$0xf]
  %v74 = vld [vmem:[%s0 + $0xc0] sm:$0xf]
  %v124 = vunpack.c.l.b16 %v26
  %v125 = vunpack.c.l.b16 %v27
  %v126 = vunpack.c.l.b16 %v28
  %v127 = vunpack.c.l.b16 %v29
  %v128 = vunpack.c.l.b16 %v30
  %v129 = vunpack.c.l.b16 %v31
  %v130 = vunpack.c.l.b16 %v32
  %v131 = vunpack.c.l.b16 %v33
  %v132 = vunpack.c.l.b16 %v34
  %v133 = vunpack.c.l.b16 %v35
  %v134 = vunpack.c.l.b16 %v36
  %v135 = vunpack.c.l.b16 %v37
  %v136 = vunpack.c.l.b16 %v38
  %v137 = vunpack.c.l.b16 %v39
  %v138 = vunpack.c.l.b16 %v40
  %v139 = vunpack.c.l.b16 %v41
  %v140 = vunpack.c.l.b16 %v42
  %v141 = vunpack.c.l.b16 %v43
  %v142 = vunpack.c.l.b16 %v44
  %v143 = vunpack.c.l.b16 %v45
  %v144 = vunpack.c.l.b16 %v46
  %v145 = vunpack.c.l.b16 %v47
  %v146 = vunpack.c.l.b16 %v48
  %v147 = vunpack.c.l.b16 %v49
  %v148 = vunpack.c.l.b16 %v50
  %v149 = vunpack.c.l.b16 %v51
  %v150 = vunpack.c.l.b16 %v52
  %v151 = vunpack.c.l.b16 %v53
  %v152 = vunpack.c.l.b16 %v54
  %v153 = vunpack.c.l.b16 %v55
  %v154 = vunpack.c.l.b16 %v56
  %v155 = vunpack.c.l.b16 %v57
  %v156 = vunpack.c.l.b16 %v58
  %v157 = vunpack.c.l.b16 %v59
  %v158 = vunpack.c.l.b16 %v60
  %v159 = vunpack.c.l.b16 %v61
  %v160 = vunpack.c.l.b16 %v62
  %v161 = vunpack.c.l.b16 %v63
  %v162 = vunpack.c.l.b16 %v64
  %v163 = vunpack.c.l.b16 %v65
  %v164 = vunpack.c.l.b16 %v66
  %v165 = vunpack.c.l.b16 %v67
  %v166 = vunpack.c.l.b16 %v68
  %v167 = vunpack.c.l.b16 %v69
  %v168 = vunpack.c.l.b16 %v70
  %v169 = vunpack.c.l.b16 %v71
  %v170 = vunpack.c.l.b16 %v72
  %v171 = vunpack.c.l.b16 %v73
  %v172 = vunpack.c.l.b16 %v74
  %v173 = vpack.c.b16 %v125, %v124
  %v174 = vpack.c.b16 %v127, %v126
  %v175 = vpack.c.b16 %v129, %v128
  %v176 = vpack.c.b16 %v131, %v130
  %v177 = vpack.c.b16 %v133, %v132
  %v178 = vpack.c.b16 %v135, %v134
  %v179 = vpack.c.b16 %v137, %v136
  %v180 = vpack.c.b16 %v139, %v138
  %v181 = vpack.c.b16 %v141, %v140
  %v182 = vpack.c.b16 %v143, %v142
  %v183 = vpack.c.b16 %v145, %v144
  %v184 = vpack.c.b16 %v147, %v146
  %v185 = vpack.c.b16 %v149, %v148
  %v186 = vpack.c.b16 %v151, %v150
  %v187 = vpack.c.b16 %v153, %v152
  %v188 = vpack.c.b16 %v155, %v154
  %v189 = vpack.c.b16 %v157, %v156
  %v190 = vpack.c.b16 %v159, %v158
  %v191 = vpack.c.b16 %v161, %v160
  %v192 = vpack.c.b16 %v163, %v162
  %v193 = vpack.c.b16 %v165, %v164
  %v194 = vpack.c.b16 %v167, %v166
  %v195 = vpack.c.b16 %v169, %v168
  %v196 = vpack.c.b16 %v171, %v170
  %v197 = vpack.c.b16 %v172, %v172
  %v200 = vunpack.c.l.b16 %v24
  %v201 = vunpack.c.l.b16 %v25
  %v202 = vpack.c.b16 %v201, %v200
  %vm203 = vcmask 72704
  %v205 = vsel %vm203, %v173, 0
  %v208 = vsel %vm203, %v174, 0
  %v211 = vsel %vm203, %v175, 0
  %v214 = vsel %vm203, %v176, 0
  %v217 = vsel %vm203, %v177, 0
  %v220 = vsel %vm203, %v178, 0
  %v223 = vsel %vm203, %v179, 0
  %v226 = vsel %vm203, %v180, 0
  %v229 = vsel %vm203, %v181, 0
  %v232 = vsel %vm203, %v182, 0
  %v235 = vsel %vm203, %v183, 0
  %v238 = vsel %vm203, %v184, 0
  %v241 = vsel %vm203, %v185, 0
  %v244 = vsel %vm203, %v186, 0
  %v247 = vsel %vm203, %v187, 0
  %v250 = vsel %vm203, %v188, 0
  %v253 = vsel %vm203, %v189, 0
  %v256 = vsel %vm203, %v190, 0
  %v259 = vsel %vm203, %v191, 0
  %v262 = vsel %vm203, %v192, 0
  %v265 = vsel %vm203, %v193, 0
  %v268 = vsel %vm203, %v194, 0
  %v271 = vsel %vm203, %v195, 0
  %v274 = vsel %vm203, %v196, 0
  %v277 = vsel %vm203, %v197, 0
  %vm279 = vcmask 1043456
  %vm280 = vcmask 1044480
  %v281 = vsel %vm279, 4294967295, 65535
  %v282 = vsel %vm280, %v281, 0
  %v284 = vand.u32 %v202, %v282
  %286 = vmatprep.subr.bf16.mxu0 0
  %287 = vmatpush1.bf16.msra.mxu0 0
  %288 = vmatprep.subr.bf16.mxu0 0
  %289 = vmatpush1.bf16.msra.mxu0 0
  %290 = vmatprep.subr.bf16.mxu0 0
  %291 = vmatpush1.bf16.msra.mxu0 0
  %292 = vmatprep.subr.bf16.mxu0 0
  %293 = vmatpush1.bf16.msra.mxu0 0
  %294 = vmatprep.subr.bf16.mxu0 0
  %295 = vmatpush1.bf16.msra.mxu0 0
  %296 = vmatprep.subr.bf16.mxu0 0
  %297 = vmatpush1.bf16.msra.mxu0 0
  %298 = vmatprep.subr.bf16.mxu0 0
  %299 = vmatpush1.bf16.msra.mxu0 0
  %300 = vmatprep.subr.bf16.mxu0 0
  %301 = vmatpush1.bf16.msra.mxu0 %v284
  %302 = vmatprep.subr.bf16.mxu0 0
  %303 = vmatpush2.bf16.msra.mxu0 0
  %304 = vmatprep.subr.bf16.mxu0 0
  %305 = vmatpush2.bf16.msra.mxu0 0
  %306 = vmatprep.subr.bf16.mxu0 0
  %307 = vmatpush2.bf16.msra.mxu0 0
  %308 = vmatprep.subr.bf16.mxu0 0
  %309 = vmatpush2.bf16.msra.mxu0 0
  %310 = vmatprep.subr.bf16.mxu0 0
  %311 = vmatpush2.bf16.msra.mxu0 0
  %312 = vmatprep.subr.bf16.mxu0 0
  %313 = vmatpush2.bf16.msra.mxu0 0
  %314 = vmatprep.subr.bf16.mxu0 0
  %315 = vmatpush2.bf16.msra.mxu0 0
  %316 = vmatprep.subr.bf16.mxu0 0
  %317 = vmatpush2.bf16.msra.mxu0 0
  %318 = vmatprep.mubr.bf16.mxu0 0
  %319 = vmatmul.mubr.bf16.gmra.mxu0 %v205
  %v320 = vpop.f32.mrf.mxu0
  %v321 = vadd.f32 0.0, %v320
  %v322 = vpop.f32.mrf.mxu0
  %v323 = vpop.f32.mrf.mxu0
  %v324 = vadd.f32 0.0, %v323
  %v325 = vpop.f32.mrf.mxu0
  %326 = vmatprep.mubr.bf16.mxu0 0
  %327 = vmatmul.mubr.bf16.gmra.mxu0 %v208
  %v328 = vpop.f32.mrf.mxu0
  %v329 = vadd.f32 0.0, %v328
  %v330 = vpop.f32.mrf.mxu0
  %v331 = vpop.f32.mrf.mxu0
  %v332 = vadd.f32 0.0, %v331
  %v333 = vpop.f32.mrf.mxu0
  %334 = vmatprep.mubr.bf16.mxu0 0
  %335 = vmatmul.mubr.bf16.gmra.mxu0 %v211
  %v336 = vpop.f32.mrf.mxu0
  %v337 = vadd.f32 0.0, %v336
  %v338 = vpop.f32.mrf.mxu0
  %v339 = vpop.f32.mrf.mxu0
  %v340 = vadd.f32 0.0, %v339
  %v341 = vpop.f32.mrf.mxu0
  %342 = vmatprep.mubr.bf16.mxu0 0
  %343 = vmatmul.mubr.bf16.gmra.mxu0 %v214
  %v344 = vpop.f32.mrf.mxu0
  %v345 = vadd.f32 0.0, %v344
  %v346 = vpop.f32.mrf.mxu0
  %v347 = vpop.f32.mrf.mxu0
  %v348 = vadd.f32 0.0, %v347
  %v349 = vpop.f32.mrf.mxu0
  %350 = vmatprep.mubr.bf16.mxu0 0
  %351 = vmatmul.mubr.bf16.gmra.mxu0 %v217
  %v352 = vpop.f32.mrf.mxu0
  %v353 = vadd.f32 0.0, %v352
  %v354 = vpop.f32.mrf.mxu0
  %v355 = vpop.f32.mrf.mxu0
  %v356 = vadd.f32 0.0, %v355
  %v357 = vpop.f32.mrf.mxu0
  %358 = vmatprep.mubr.bf16.mxu0 0
  %359 = vmatmul.mubr.bf16.gmra.mxu0 %v220
  %v360 = vpop.f32.mrf.mxu0
  %v361 = vadd.f32 0.0, %v360
  %v362 = vpop.f32.mrf.mxu0
  %v363 = vpop.f32.mrf.mxu0
  %v364 = vadd.f32 0.0, %v363
  %v365 = vpop.f32.mrf.mxu0
  %366 = vmatprep.mubr.bf16.mxu0 0
  %367 = vmatmul.mubr.bf16.gmra.mxu0 %v223
  %v368 = vpop.f32.mrf.mxu0
  %v369 = vadd.f32 0.0, %v368
  %v370 = vpop.f32.mrf.mxu0
  %v371 = vpop.f32.mrf.mxu0
  %v372 = vadd.f32 0.0, %v371
  %v373 = vpop.f32.mrf.mxu0
  %374 = vmatprep.mubr.bf16.mxu0 0
  %375 = vmatmul.mubr.bf16.gmra.mxu0 %v226
  %v376 = vpop.f32.mrf.mxu0
  %v377 = vadd.f32 0.0, %v376
  %v378 = vpop.f32.mrf.mxu0
  %v379 = vpop.f32.mrf.mxu0
  %v380 = vadd.f32 0.0, %v379
  %v381 = vpop.f32.mrf.mxu0
  %382 = vmatprep.mubr.bf16.mxu0 0
  %383 = vmatmul.mubr.bf16.gmra.mxu0 %v229
  %v384 = vpop.f32.mrf.mxu0
  %v385 = vadd.f32 0.0, %v384
  %v386 = vpop.f32.mrf.mxu0
  %v387 = vpop.f32.mrf.mxu0
  %v388 = vadd.f32 0.0, %v387
  %v389 = vpop.f32.mrf.mxu0
  %390 = vmatprep.mubr.bf16.mxu0 0
  %391 = vmatmul.mubr.bf16.gmra.mxu0 %v232
  %v392 = vpop.f32.mrf.mxu0
  %v393 = vadd.f32 0.0, %v392
  %v394 = vpop.f32.mrf.mxu0
  %v395 = vpop.f32.mrf.mxu0
  %v396 = vadd.f32 0.0, %v395
  %v397 = vpop.f32.mrf.mxu0
  %398 = vmatprep.mubr.bf16.mxu0 0
  %399 = vmatmul.mubr.bf16.gmra.mxu0 %v235
  %v400 = vpop.f32.mrf.mxu0
  %v401 = vadd.f32 0.0, %v400
  %v402 = vpop.f32.mrf.mxu0
  %v403 = vpop.f32.mrf.mxu0
  %v404 = vadd.f32 0.0, %v403
  %v405 = vpop.f32.mrf.mxu0
  %406 = vmatprep.mubr.bf16.mxu0 0
  %407 = vmatmul.mubr.bf16.gmra.mxu0 %v238
  %v408 = vpop.f32.mrf.mxu0
  %v409 = vadd.f32 0.0, %v408
  %v410 = vpop.f32.mrf.mxu0
  %v411 = vpop.f32.mrf.mxu0
  %v412 = vadd.f32 0.0, %v411
  %v413 = vpop.f32.mrf.mxu0
  %414 = vmatprep.mubr.bf16.mxu0 0
  %415 = vmatmul.mubr.bf16.gmra.mxu0 %v241
  %v416 = vpop.f32.mrf.mxu0
  %v417 = vadd.f32 0.0, %v416
  %v418 = vpop.f32.mrf.mxu0
  %v419 = vpop.f32.mrf.mxu0
  %v420 = vadd.f32 0.0, %v419
  %v421 = vpop.f32.mrf.mxu0
  %422 = vmatprep.mubr.bf16.mxu0 0
  %423 = vmatmul.mubr.bf16.gmra.mxu0 %v244
  %v424 = vpop.f32.mrf.mxu0
  %v425 = vadd.f32 0.0, %v424
  %v426 = vpop.f32.mrf.mxu0
  %v427 = vpop.f32.mrf.mxu0
  %v428 = vadd.f32 0.0, %v427
  %v429 = vpop.f32.mrf.mxu0
  %430 = vmatprep.mubr.bf16.mxu0 0
  %431 = vmatmul.mubr.bf16.gmra.mxu0 %v247
  %v432 = vpop.f32.mrf.mxu0
  %v433 = vadd.f32 0.0, %v432
  %v434 = vpop.f32.mrf.mxu0
  %v435 = vpop.f32.mrf.mxu0
  %v436 = vadd.f32 0.0, %v435
  %v437 = vpop.f32.mrf.mxu0
  %438 = vmatprep.mubr.bf16.mxu0 0
  %439 = vmatmul.mubr.bf16.gmra.mxu0 %v250
  %v440 = vpop.f32.mrf.mxu0
  %v441 = vadd.f32 0.0, %v440
  %v442 = vpop.f32.mrf.mxu0
  %v443 = vpop.f32.mrf.mxu0
  %v444 = vadd.f32 0.0, %v443
  %v445 = vpop.f32.mrf.mxu0
  %446 = vmatprep.mubr.bf16.mxu0 0
  %447 = vmatmul.mubr.bf16.gmra.mxu0 %v253
  %v448 = vpop.f32.mrf.mxu0
  %v449 = vadd.f32 0.0, %v448
  %v450 = vpop.f32.mrf.mxu0
  %v451 = vpop.f32.mrf.mxu0
  %v452 = vadd.f32 0.0, %v451
  %v453 = vpop.f32.mrf.mxu0
  %454 = vmatprep.mubr.bf16.mxu0 0
  %455 = vmatmul.mubr.bf16.gmra.mxu0 %v256
  %v456 = vpop.f32.mrf.mxu0
  %v457 = vadd.f32 0.0, %v456
  %v458 = vpop.f32.mrf.mxu0
  %v459 = vpop.f32.mrf.mxu0
  %v460 = vadd.f32 0.0, %v459
  %v461 = vpop.f32.mrf.mxu0
  %462 = vmatprep.mubr.bf16.mxu0 0
  %463 = vmatmul.mubr.bf16.gmra.mxu0 %v259
  %v464 = vpop.f32.mrf.mxu0
  %v465 = vadd.f32 0.0, %v464
  %v466 = vpop.f32.mrf.mxu0
  %v467 = vpop.f32.mrf.mxu0
  %v468 = vadd.f32 0.0, %v467
  %v469 = vpop.f32.mrf.mxu0
  %470 = vmatprep.mubr.bf16.mxu0 0
  %471 = vmatmul.mubr.bf16.gmra.mxu0 %v262
  %v472 = vpop.f32.mrf.mxu0
  %v473 = vadd.f32 0.0, %v472
  %v474 = vpop.f32.mrf.mxu0
  %v475 = vpop.f32.mrf.mxu0
  %v476 = vadd.f32 0.0, %v475
  %v477 = vpop.f32.mrf.mxu0
  %478 = vmatprep.mubr.bf16.mxu0 0
  %479 = vmatmul.mubr.bf16.gmra.mxu0 %v265
  %v480 = vpop.f32.mrf.mxu0
  %v481 = vadd.f32 0.0, %v480
  %v482 = vpop.f32.mrf.mxu0
  %v483 = vpop.f32.mrf.mxu0
  %v484 = vadd.f32 0.0, %v483
  %v485 = vpop.f32.mrf.mxu0
  %486 = vmatprep.mubr.bf16.mxu0 0
  %487 = vmatmul.mubr.bf16.gmra.mxu0 %v268
  %v488 = vpop.f32.mrf.mxu0
  %v489 = vadd.f32 0.0, %v488
  %v490 = vpop.f32.mrf.mxu0
  %v491 = vpop.f32.mrf.mxu0
  %v492 = vadd.f32 0.0, %v491
  %v493 = vpop.f32.mrf.mxu0
  %494 = vmatprep.mubr.bf16.mxu0 0
  %495 = vmatmul.mubr.bf16.gmra.mxu0 %v271
  %v496 = vpop.f32.mrf.mxu0
  %v497 = vadd.f32 0.0, %v496
  %v498 = vpop.f32.mrf.mxu0
  %v499 = vpop.f32.mrf.mxu0
  %v500 = vadd.f32 0.0, %v499
  %v501 = vpop.f32.mrf.mxu0
  %502 = vmatprep.mubr.bf16.mxu0 0
  %503 = vmatmul.mubr.bf16.gmra.mxu0 %v274
  %v504 = vpop.f32.mrf.mxu0
  %v505 = vadd.f32 0.0, %v504
  %v506 = vpop.f32.mrf.mxu0
  %v507 = vpop.f32.mrf.mxu0
  %v508 = vadd.f32 0.0, %v507
  %v509 = vpop.f32.mrf.mxu0
  %510 = vmatprep.mubr.bf16.mxu0 0
  %511 = vmatmul.mubr.bf16.gmra.mxu0 %v277
  %v512 = vpop.f32.mrf.mxu0
  %v513 = vadd.f32 0.0, %v512
  %v514 = vpop.f32.mrf.mxu0
  %v515 = vpop.f32.mrf.mxu0
  %v516 = vpop.f32.mrf.mxu0
  %517 = vdwg.mxu0
  %v518 = vld [vmem:[%s1] sm:$0xf]
  %v519 = vld [vmem:[%s1 + $0x4] sm:$0xf]
  %v520 = vld [vmem:[%s1 + $0x8] sm:$0xf]
  %v521 = vld [vmem:[%s1 + $0xc] sm:$0xf]
  %v522 = vld [vmem:[%s1 + $0x10] sm:$0xf]
  %v523 = vld [vmem:[%s1 + $0x14] sm:$0xf]
  %v524 = vld [vmem:[%s1 + $0x18] sm:$0xf]
  %v525 = vld [vmem:[%s1 + $0x1c] sm:$0xf]
  %v526 = vld [vmem:[%s1 + $0x20] sm:$0xf]
  %v527 = vld [vmem:[%s1 + $0x24] sm:$0xf]
  %v528 = vld [vmem:[%s1 + $0x28] sm:$0xf]
  %v529 = vld [vmem:[%s1 + $0x2c] sm:$0xf]
  %v530 = vld [vmem:[%s1 + $0x30] sm:$0xf]
  %v531 = vld [vmem:[%s1 + $0x34] sm:$0xf]
  %v532 = vld [vmem:[%s1 + $0x38] sm:$0xf]
  %v533 = vld [vmem:[%s1 + $0x3c] sm:$0xf]
  %v534 = vld [vmem:[%s1 + $0x40] sm:$0xf]
  %v535 = vld [vmem:[%s1 + $0x44] sm:$0xf]
  %v536 = vld [vmem:[%s1 + $0x48] sm:$0xf]
  %v537 = vld [vmem:[%s1 + $0x4c] sm:$0xf]
  %v538 = vld [vmem:[%s1 + $0x50] sm:$0xf]
  %v539 = vld [vmem:[%s1 + $0x54] sm:$0xf]
  %v540 = vld [vmem:[%s1 + $0x58] sm:$0xf]
  %v541 = vld [vmem:[%s1 + $0x5c] sm:$0xf]
  %v542 = vld [vmem:[%s1 + $0x60] sm:$0xf]
  %v543 = vld [vmem:[%s1 + $0x64] sm:$0xf]
  %v544 = vld [vmem:[%s1 + $0x68] sm:$0xf]
  %v545 = vld [vmem:[%s1 + $0x6c] sm:$0xf]
  %v546 = vld [vmem:[%s1 + $0x70] sm:$0xf]
  %v547 = vld [vmem:[%s1 + $0x74] sm:$0xf]
  %v548 = vld [vmem:[%s1 + $0x78] sm:$0xf]
  %v549 = vld [vmem:[%s1 + $0x7c] sm:$0xf]
  %v550 = vld [vmem:[%s1 + $0x80] sm:$0xf]
  %v551 = vld [vmem:[%s1 + $0x84] sm:$0xf]
  %v552 = vld [vmem:[%s1 + $0x88] sm:$0xf]
  %v553 = vld [vmem:[%s1 + $0x8c] sm:$0xf]
  %v554 = vld [vmem:[%s1 + $0x90] sm:$0xf]
  %v555 = vld [vmem:[%s1 + $0x94] sm:$0xf]
  %v556 = vld [vmem:[%s1 + $0x98] sm:$0xf]
  %v557 = vld [vmem:[%s1 + $0x9c] sm:$0xf]
  %v558 = vld [vmem:[%s1 + $0xa0] sm:$0xf]
  %v559 = vld [vmem:[%s1 + $0xa4] sm:$0xf]
  %v560 = vld [vmem:[%s1 + $0xa8] sm:$0xf]
  %v561 = vld [vmem:[%s1 + $0xac] sm:$0xf]
  %v562 = vld [vmem:[%s1 + $0xb0] sm:$0xf]
  %v563 = vld [vmem:[%s1 + $0xb4] sm:$0xf]
  %v564 = vld [vmem:[%s1 + $0xb8] sm:$0xf]
  %v565 = vld [vmem:[%s1 + $0xbc] sm:$0xf]
  %v566 = vld [vmem:[%s1 + $0xc0] sm:$0xf]
  %v616 = vunpack.c.l.b16 %v518
  %v617 = vunpack.c.l.b16 %v519
  %v618 = vunpack.c.l.b16 %v520
  %v619 = vunpack.c.l.b16 %v521
  %v620 = vunpack.c.l.b16 %v522
  %v621 = vunpack.c.l.b16 %v523
  %v622 = vunpack.c.l.b16 %v524
  %v623 = vunpack.c.l.b16 %v525
  %v624 = vunpack.c.l.b16 %v526
  %v625 = vunpack.c.l.b16 %v527
  %v626 = vunpack.c.l.b16 %v528
  %v627 = vunpack.c.l.b16 %v529
  %v628 = vunpack.c.l.b16 %v530
  %v629 = vunpack.c.l.b16 %v531
  %v630 = vunpack.c.l.b16 %v532
  %v631 = vunpack.c.l.b16 %v533
  %v632 = vunpack.c.l.b16 %v534
  %v633 = vunpack.c.l.b16 %v535
  %v634 = vunpack.c.l.b16 %v536
  %v635 = vunpack.c.l.b16 %v537
  %v636 = vunpack.c.l.b16 %v538
  %v637 = vunpack.c.l.b16 %v539
  %v638 = vunpack.c.l.b16 %v540
  %v639 = vunpack.c.l.b16 %v541
  %v640 = vunpack.c.l.b16 %v542
  %v641 = vunpack.c.l.b16 %v543
  %v642 = vunpack.c.l.b16 %v544
  %v643 = vunpack.c.l.b16 %v545
  %v644 = vunpack.c.l.b16 %v546
  %v645 = vunpack.c.l.b16 %v547
  %v646 = vunpack.c.l.b16 %v548
  %v647 = vunpack.c.l.b16 %v549
  %v648 = vunpack.c.l.b16 %v550
  %v649 = vunpack.c.l.b16 %v551
  %v650 = vunpack.c.l.b16 %v552
  %v651 = vunpack.c.l.b16 %v553
  %v652 = vunpack.c.l.b16 %v554
  %v653 = vunpack.c.l.b16 %v555
  %v654 = vunpack.c.l.b16 %v556
  %v655 = vunpack.c.l.b16 %v557
  %v656 = vunpack.c.l.b16 %v558
  %v657 = vunpack.c.l.b16 %v559
  %v658 = vunpack.c.l.b16 %v560
  %v659 = vunpack.c.l.b16 %v561
  %v660 = vunpack.c.l.b16 %v562
  %v661 = vunpack.c.l.b16 %v563
  %v662 = vunpack.c.l.b16 %v564
  %v663 = vunpack.c.l.b16 %v565
  %v664 = vunpack.c.l.b16 %v566
  %v665 = vpack.c.b16 %v617, %v616
  %v666 = vpack.c.b16 %v619, %v618
  %v667 = vpack.c.b16 %v621, %v620
  %v668 = vpack.c.b16 %v623, %v622
  %v669 = vpack.c.b16 %v625, %v624
  %v670 = vpack.c.b16 %v627, %v626
  %v671 = vpack.c.b16 %v629, %v628
  %v672 = vpack.c.b16 %v631, %v630
  %v673 = vpack.c.b16 %v633, %v632
  %v674 = vpack.c.b16 %v635, %v634
  %v675 = vpack.c.b16 %v637, %v636
  %v676 = vpack.c.b16 %v639, %v638
  %v677 = vpack.c.b16 %v641, %v640
  %v678 = vpack.c.b16 %v643, %v642
  %v679 = vpack.c.b16 %v645, %v644
  %v680 = vpack.c.b16 %v647, %v646
  %v681 = vpack.c.b16 %v649, %v648
  %v682 = vpack.c.b16 %v651, %v650
  %v683 = vpack.c.b16 %v653, %v652
  %v684 = vpack.c.b16 %v655, %v654
  %v685 = vpack.c.b16 %v657, %v656
  %v686 = vpack.c.b16 %v659, %v658
  %v687 = vpack.c.b16 %v661, %v660
  %v688 = vpack.c.b16 %v663, %v662
  %v689 = vpack.c.b16 %v664, %v664
  %v691 = vsel %vm203, %v665, 0
  %v694 = vsel %vm203, %v666, 0
  %v697 = vsel %vm203, %v667, 0
  %v700 = vsel %vm203, %v668, 0
  %v703 = vsel %vm203, %v669, 0
  %v706 = vsel %vm203, %v670, 0
  %v709 = vsel %vm203, %v671, 0
  %v712 = vsel %vm203, %v672, 0
  %v715 = vsel %vm203, %v673, 0
  %v718 = vsel %vm203, %v674, 0
  %v721 = vsel %vm203, %v675, 0
  %v724 = vsel %vm203, %v676, 0
  %v727 = vsel %vm203, %v677, 0
  %v730 = vsel %vm203, %v678, 0
  %v733 = vsel %vm203, %v679, 0
  %v736 = vsel %vm203, %v680, 0
  %v739 = vsel %vm203, %v681, 0
  %v742 = vsel %vm203, %v682, 0
  %v745 = vsel %vm203, %v683, 0
  %v748 = vsel %vm203, %v684, 0
  %v751 = vsel %vm203, %v685, 0
  %v754 = vsel %vm203, %v686, 0
  %v757 = vsel %vm203, %v687, 0
  %v760 = vsel %vm203, %v688, 0
  %v763 = vsel %vm203, %v689, 0
  %765 = vmatprep.subr.bf16.mxu0 0
  %766 = vmatpush1.bf16.msra.mxu0 0
  %767 = vmatprep.subr.bf16.mxu0 0
  %768 = vmatpush1.bf16.msra.mxu0 0
  %769 = vmatprep.subr.bf16.mxu0 0
  %770 = vmatpush1.bf16.msra.mxu0 0
  %771 = vmatprep.subr.bf16.mxu0 0
  %772 = vmatpush1.bf16.msra.mxu0 0
  %773 = vmatprep.subr.bf16.mxu0 0
  %774 = vmatpush1.bf16.msra.mxu0 0
  %775 = vmatprep.subr.bf16.mxu0 0
  %776 = vmatpush1.bf16.msra.mxu0 0
  %777 = vmatprep.subr.bf16.mxu0 0
  %778 = vmatpush1.bf16.msra.mxu0 0
  %779 = vmatprep.subr.bf16.mxu0 0
  %780 = vmatpush1.bf16.msra.mxu0 %v284
  %781 = vmatprep.subr.bf16.mxu0 0
  %782 = vmatpush2.bf16.msra.mxu0 0
  %783 = vmatprep.subr.bf16.mxu0 0
  %784 = vmatpush2.bf16.msra.mxu0 0
  %785 = vmatprep.subr.bf16.mxu0 0
  %786 = vmatpush2.bf16.msra.mxu0 0
  %787 = vmatprep.subr.bf16.mxu0 0
  %788 = vmatpush2.bf16.msra.mxu0 0
  %789 = vmatprep.subr.bf16.mxu0 0
  %790 = vmatpush2.bf16.msra.mxu0 0
  %791 = vmatprep.subr.bf16.mxu0 0
  %792 = vmatpush2.bf16.msra.mxu0 0
  %793 = vmatprep.subr.bf16.mxu0 0
  %794 = vmatpush2.bf16.msra.mxu0 0
  %795 = vmatprep.subr.bf16.mxu0 0
  %796 = vmatpush2.bf16.msra.mxu0 0
  %797 = vmatprep.mubr.bf16.mxu0 0
  %798 = vmatmul.mubr.bf16.gmra.mxu0 %v691
  %v799 = vpop.f32.mrf.mxu0
  %v800 = vadd.f32 0.0, %v799
  %v801 = vpop.f32.mrf.mxu0
  %v802 = vpop.f32.mrf.mxu0
  %v803 = vadd.f32 0.0, %v802
  %v804 = vpop.f32.mrf.mxu0
  %805 = vmatprep.mubr.bf16.mxu0 0
  %806 = vmatmul.mubr.bf16.gmra.mxu0 %v694
  %v807 = vpop.f32.mrf.mxu0
  %v808 = vadd.f32 0.0, %v807
  %v809 = vpop.f32.mrf.mxu0
  %v810 = vpop.f32.mrf.mxu0
  %v811 = vadd.f32 0.0, %v810
  %v812 = vpop.f32.mrf.mxu0
  %813 = vmatprep.mubr.bf16.mxu0 0
  %814 = vmatmul.mubr.bf16.gmra.mxu0 %v697
  %v815 = vpop.f32.mrf.mxu0
  %v816 = vadd.f32 0.0, %v815
  %v817 = vpop.f32.mrf.mxu0
  %v818 = vpop.f32.mrf.mxu0
  %v819 = vadd.f32 0.0, %v818
  %v820 = vpop.f32.mrf.mxu0
  %821 = vmatprep.mubr.bf16.mxu0 0
  %822 = vmatmul.mubr.bf16.gmra.mxu0 %v700
  %v823 = vpop.f32.mrf.mxu0
  %v824 = vadd.f32 0.0, %v823
  %v825 = vpop.f32.mrf.mxu0
  %v826 = vpop.f32.mrf.mxu0
  %v827 = vadd.f32 0.0, %v826
  %v828 = vpop.f32.mrf.mxu0
  %829 = vmatprep.mubr.bf16.mxu0 0
  %830 = vmatmul.mubr.bf16.gmra.mxu0 %v703
  %v831 = vpop.f32.mrf.mxu0
  %v832 = vadd.f32 0.0, %v831
  %v833 = vpop.f32.mrf.mxu0
  %v834 = vpop.f32.mrf.mxu0
  %v835 = vadd.f32 0.0, %v834
  %v836 = vpop.f32.mrf.mxu0
  %837 = vmatprep.mubr.bf16.mxu0 0
  %838 = vmatmul.mubr.bf16.gmra.mxu0 %v706
  %v839 = vpop.f32.mrf.mxu0
  %v840 = vadd.f32 0.0, %v839
  %v841 = vpop.f32.mrf.mxu0
  %v842 = vpop.f32.mrf.mxu0
  %v843 = vadd.f32 0.0, %v842
  %v844 = vpop.f32.mrf.mxu0
  %845 = vmatprep.mubr.bf16.mxu0 0
  %846 = vmatmul.mubr.bf16.gmra.mxu0 %v709
  %v847 = vpop.f32.mrf.mxu0
  %v848 = vadd.f32 0.0, %v847
  %v849 = vpop.f32.mrf.mxu0
  %v850 = vpop.f32.mrf.mxu0
  %v851 = vadd.f32 0.0, %v850
  %v852 = vpop.f32.mrf.mxu0
  %853 = vmatprep.mubr.bf16.mxu0 0
  %854 = vmatmul.mubr.bf16.gmra.mxu0 %v712
  %v855 = vpop.f32.mrf.mxu0
  %v856 = vadd.f32 0.0, %v855
  %v857 = vpop.f32.mrf.mxu0
  %v858 = vpop.f32.mrf.mxu0
  %v859 = vadd.f32 0.0, %v858
  %v860 = vpop.f32.mrf.mxu0
  %861 = vmatprep.mubr.bf16.mxu0 0
  %862 = vmatmul.mubr.bf16.gmra.mxu0 %v715
  %v863 = vpop.f32.mrf.mxu0
  %v864 = vadd.f32 0.0, %v863
  %v865 = vpop.f32.mrf.mxu0
  %v866 = vpop.f32.mrf.mxu0
  %v867 = vadd.f32 0.0, %v866
  %v868 = vpop.f32.mrf.mxu0
  %869 = vmatprep.mubr.bf16.mxu0 0
  %870 = vmatmul.mubr.bf16.gmra.mxu0 %v718
  %v871 = vpop.f32.mrf.mxu0
  %v872 = vadd.f32 0.0, %v871
  %v873 = vpop.f32.mrf.mxu0
  %v874 = vpop.f32.mrf.mxu0
  %v875 = vadd.f32 0.0, %v874
  %v876 = vpop.f32.mrf.mxu0
  %877 = vmatprep.mubr.bf16.mxu0 0
  %878 = vmatmul.mubr.bf16.gmra.mxu0 %v721
  %v879 = vpop.f32.mrf.mxu0
  %v880 = vadd.f32 0.0, %v879
  %v881 = vpop.f32.mrf.mxu0
  %v882 = vpop.f32.mrf.mxu0
  %v883 = vadd.f32 0.0, %v882
  %v884 = vpop.f32.mrf.mxu0
  %885 = vmatprep.mubr.bf16.mxu0 0
  %886 = vmatmul.mubr.bf16.gmra.mxu0 %v724
  %v887 = vpop.f32.mrf.mxu0
  %v888 = vadd.f32 0.0, %v887
  %v889 = vpop.f32.mrf.mxu0
  %v890 = vpop.f32.mrf.mxu0
  %v891 = vadd.f32 0.0, %v890
  %v892 = vpop.f32.mrf.mxu0
  %893 = vmatprep.mubr.bf16.mxu0 0
  %894 = vmatmul.mubr.bf16.gmra.mxu0 %v727
  %v895 = vpop.f32.mrf.mxu0
  %v896 = vadd.f32 0.0, %v895
  %v897 = vpop.f32.mrf.mxu0
  %v898 = vpop.f32.mrf.mxu0
  %v899 = vadd.f32 0.0, %v898
  %v900 = vpop.f32.mrf.mxu0
  %901 = vmatprep.mubr.bf16.mxu0 0
  %902 = vmatmul.mubr.bf16.gmra.mxu0 %v730
  %v903 = vpop.f32.mrf.mxu0
  %v904 = vadd.f32 0.0, %v903
  %v905 = vpop.f32.mrf.mxu0
  %v906 = vpop.f32.mrf.mxu0
  %v907 = vadd.f32 0.0, %v906
  %v908 = vpop.f32.mrf.mxu0
  %909 = vmatprep.mubr.bf16.mxu0 0
  %910 = vmatmul.mubr.bf16.gmra.mxu0 %v733
  %v911 = vpop.f32.mrf.mxu0
  %v912 = vadd.f32 0.0, %v911
  %v913 = vpop.f32.mrf.mxu0
  %v914 = vpop.f32.mrf.mxu0
  %v915 = vadd.f32 0.0, %v914
  %v916 = vpop.f32.mrf.mxu0
  %917 = vmatprep.mubr.bf16.mxu0 0
  %918 = vmatmul.mubr.bf16.gmra.mxu0 %v736
  %v919 = vpop.f32.mrf.mxu0
  %v920 = vadd.f32 0.0, %v919
  %v921 = vpop.f32.mrf.mxu0
  %v922 = vpop.f32.mrf.mxu0
  %v923 = vadd.f32 0.0, %v922
  %v924 = vpop.f32.mrf.mxu0
  %925 = vmatprep.mubr.bf16.mxu0 0
  %926 = vmatmul.mubr.bf16.gmra.mxu0 %v739
  %v927 = vpop.f32.mrf.mxu0
  %v928 = vadd.f32 0.0, %v927
  %v929 = vpop.f32.mrf.mxu0
  %v930 = vpop.f32.mrf.mxu0
  %v931 = vadd.f32 0.0, %v930
  %v932 = vpop.f32.mrf.mxu0
  %933 = vmatprep.mubr.bf16.mxu0 0
  %934 = vmatmul.mubr.bf16.gmra.mxu0 %v742
  %v935 = vpop.f32.mrf.mxu0
  %v936 = vadd.f32 0.0, %v935
  %v937 = vpop.f32.mrf.mxu0
  %v938 = vpop.f32.mrf.mxu0
  %v939 = vadd.f32 0.0, %v938
  %v940 = vpop.f32.mrf.mxu0
  %941 = vmatprep.mubr.bf16.mxu0 0
  %942 = vmatmul.mubr.bf16.gmra.mxu0 %v745
  %v943 = vpop.f32.mrf.mxu0
  %v944 = vadd.f32 0.0, %v943
  %v945 = vpop.f32.mrf.mxu0
  %v946 = vpop.f32.mrf.mxu0
  %v947 = vadd.f32 0.0, %v946
  %v948 = vpop.f32.mrf.mxu0
  %949 = vmatprep.mubr.bf16.mxu0 0
  %950 = vmatmul.mubr.bf16.gmra.mxu0 %v748
  %v951 = vpop.f32.mrf.mxu0
  %v952 = vadd.f32 0.0, %v951
  %v953 = vpop.f32.mrf.mxu0
  %v954 = vpop.f32.mrf.mxu0
  %v955 = vadd.f32 0.0, %v954
  %v956 = vpop.f32.mrf.mxu0
  %957 = vmatprep.mubr.bf16.mxu0 0
  %958 = vmatmul.mubr.bf16.gmra.mxu0 %v751
  %v959 = vpop.f32.mrf.mxu0
  %v960 = vadd.f32 0.0, %v959
  %v961 = vpop.f32.mrf.mxu0
  %v962 = vpop.f32.mrf.mxu0
  %v963 = vadd.f32 0.0, %v962
  %v964 = vpop.f32.mrf.mxu0
  %965 = vmatprep.mubr.bf16.mxu0 0
  %966 = vmatmul.mubr.bf16.gmra.mxu0 %v754
  %v967 = vpop.f32.mrf.mxu0
  %v968 = vadd.f32 0.0, %v967
  %v969 = vpop.f32.mrf.mxu0
  %v970 = vpop.f32.mrf.mxu0
  %v971 = vadd.f32 0.0, %v970
  %v972 = vpop.f32.mrf.mxu0
  %973 = vmatprep.mubr.bf16.mxu0 0
  %974 = vmatmul.mubr.bf16.gmra.mxu0 %v757
  %v975 = vpop.f32.mrf.mxu0
  %v976 = vadd.f32 0.0, %v975
  %v977 = vpop.f32.mrf.mxu0
  %v978 = vpop.f32.mrf.mxu0
  %v979 = vadd.f32 0.0, %v978
  %v980 = vpop.f32.mrf.mxu0
  %981 = vmatprep.mubr.bf16.mxu0 0
  %982 = vmatmul.mubr.bf16.gmra.mxu0 %v760
  %v983 = vpop.f32.mrf.mxu0
  %v984 = vadd.f32 0.0, %v983
  %v985 = vpop.f32.mrf.mxu0
  %v986 = vpop.f32.mrf.mxu0
  %v987 = vadd.f32 0.0, %v986
  %v988 = vpop.f32.mrf.mxu0
  %989 = vmatprep.mubr.bf16.mxu0 0
  %990 = vmatmul.mubr.bf16.gmra.mxu0 %v763
  %v991 = vpop.f32.mrf.mxu0
  %v992 = vadd.f32 0.0, %v991
  %v993 = vpop.f32.mrf.mxu0
  %v994 = vpop.f32.mrf.mxu0
  %v995 = vpop.f32.mrf.mxu0
  %996 = vdwg.mxu0
  %v997 = vmax.f32 %v321, %v800
  %v998 = vmax.f32 %v324, %v803
  %v999 = vmax.f32 %v329, %v808
  %v1000 = vmax.f32 %v332, %v811
  %v1001 = vmax.f32 %v337, %v816
  %v1002 = vmax.f32 %v340, %v819
  %v1003 = vmax.f32 %v345, %v824
  %v1004 = vmax.f32 %v348, %v827
  %v1005 = vmax.f32 %v353, %v832
  %v1006 = vmax.f32 %v356, %v835
  %v1007 = vmax.f32 %v361, %v840
  %v1008 = vmax.f32 %v364, %v843
  %v1009 = vmax.f32 %v369, %v848
  %v1010 = vmax.f32 %v372, %v851
  %v1011 = vmax.f32 %v377, %v856
  %v1012 = vmax.f32 %v380, %v859
  %v1013 = vmax.f32 %v385, %v864
  %v1014 = vmax.f32 %v388, %v867
  %v1015 = vmax.f32 %v393, %v872
  %v1016 = vmax.f32 %v396, %v875
  %v1017 = vmax.f32 %v401, %v880
  %v1018 = vmax.f32 %v404, %v883
  %v1019 = vmax.f32 %v409, %v888
  %v1020 = vmax.f32 %v412, %v891
  %v1021 = vmax.f32 %v417, %v896
  %v1022 = vmax.f32 %v420, %v899
  %v1023 = vmax.f32 %v425, %v904
  %v1024 = vmax.f32 %v428, %v907
  %v1025 = vmax.f32 %v433, %v912
  %v1026 = vmax.f32 %v436, %v915
  %v1027 = vmax.f32 %v441, %v920
  %v1028 = vmax.f32 %v444, %v923
  %v1029 = vmax.f32 %v449, %v928
  %v1030 = vmax.f32 %v452, %v931
  %v1031 = vmax.f32 %v457, %v936
  %v1032 = vmax.f32 %v460, %v939
  %v1033 = vmax.f32 %v465, %v944
  %v1034 = vmax.f32 %v468, %v947
  %v1035 = vmax.f32 %v473, %v952
  %v1036 = vmax.f32 %v476, %v955
  %v1037 = vmax.f32 %v481, %v960
  %v1038 = vmax.f32 %v484, %v963
  %v1039 = vmax.f32 %v489, %v968
  %v1040 = vmax.f32 %v492, %v971
  %v1041 = vmax.f32 %v497, %v976
  %v1042 = vmax.f32 %v500, %v979
  %v1043 = vmax.f32 %v505, %v984
  %v1044 = vmax.f32 %v508, %v987
  %v1045 = vmax.f32 %v513, %v992
  %v1046 = vld [vmem:[%s2] sm:$0xf]
  %v1047 = vld [vmem:[%s2 + $0x4] sm:$0xf]
  %v1048 = vld [vmem:[%s2 + $0x8] sm:$0xf]
  %v1049 = vld [vmem:[%s2 + $0xc] sm:$0xf]
  %v1050 = vld [vmem:[%s2 + $0x10] sm:$0xf]
  %v1051 = vld [vmem:[%s2 + $0x14] sm:$0xf]
  %v1052 = vld [vmem:[%s2 + $0x18] sm:$0xf]
  %v1053 = vld [vmem:[%s2 + $0x1c] sm:$0xf]
  %v1054 = vld [vmem:[%s2 + $0x20] sm:$0xf]
  %v1055 = vld [vmem:[%s2 + $0x24] sm:$0xf]
  %v1056 = vld [vmem:[%s2 + $0x28] sm:$0xf]
  %v1057 = vld [vmem:[%s2 + $0x2c] sm:$0xf]
  %v1058 = vld [vmem:[%s2 + $0x30] sm:$0xf]
  %v1059 = vld [vmem:[%s2 + $0x34] sm:$0xf]
  %v1060 = vld [vmem:[%s2 + $0x38] sm:$0xf]
  %v1061 = vld [vmem:[%s2 + $0x3c] sm:$0xf]
  %v1062 = vld [vmem:[%s2 + $0x40] sm:$0xf]
  %v1063 = vld [vmem:[%s2 + $0x44] sm:$0xf]
  %v1064 = vld [vmem:[%s2 + $0x48] sm:$0xf]
  %v1065 = vld [vmem:[%s2 + $0x4c] sm:$0xf]
  %v1066 = vld [vmem:[%s2 + $0x50] sm:$0xf]
  %v1067 = vld [vmem:[%s2 + $0x54] sm:$0xf]
  %v1068 = vld [vmem:[%s2 + $0x58] sm:$0xf]
  %v1069 = vld [vmem:[%s2 + $0x5c] sm:$0xf]
  %v1070 = vld [vmem:[%s2 + $0x60] sm:$0xf]
  %v1071 = vld [vmem:[%s2 + $0x64] sm:$0xf]
  %v1072 = vld [vmem:[%s2 + $0x68] sm:$0xf]
  %v1073 = vld [vmem:[%s2 + $0x6c] sm:$0xf]
  %v1074 = vld [vmem:[%s2 + $0x70] sm:$0xf]
  %v1075 = vld [vmem:[%s2 + $0x74] sm:$0xf]
  %v1076 = vld [vmem:[%s2 + $0x78] sm:$0xf]
  %v1077 = vld [vmem:[%s2 + $0x7c] sm:$0xf]
  %v1078 = vld [vmem:[%s2 + $0x80] sm:$0xf]
  %v1079 = vld [vmem:[%s2 + $0x84] sm:$0xf]
  %v1080 = vld [vmem:[%s2 + $0x88] sm:$0xf]
  %v1081 = vld [vmem:[%s2 + $0x8c] sm:$0xf]
  %v1082 = vld [vmem:[%s2 + $0x90] sm:$0xf]
  %v1083 = vld [vmem:[%s2 + $0x94] sm:$0xf]
  %v1084 = vld [vmem:[%s2 + $0x98] sm:$0xf]
  %v1085 = vld [vmem:[%s2 + $0x9c] sm:$0xf]
  %v1086 = vld [vmem:[%s2 + $0xa0] sm:$0xf]
  %v1087 = vld [vmem:[%s2 + $0xa4] sm:$0xf]
  %v1088 = vld [vmem:[%s2 + $0xa8] sm:$0xf]
  %v1089 = vld [vmem:[%s2 + $0xac] sm:$0xf]
  %v1090 = vld [vmem:[%s2 + $0xb0] sm:$0xf]
  %v1091 = vld [vmem:[%s2 + $0xb4] sm:$0xf]
  %v1092 = vld [vmem:[%s2 + $0xb8] sm:$0xf]
  %v1093 = vld [vmem:[%s2 + $0xbc] sm:$0xf]
  %v1094 = vld [vmem:[%s2 + $0xc0] sm:$0xf]
  %v1144 = vunpack.c.l.b16 %v1046
  %v1145 = vunpack.c.l.b16 %v1047
  %v1146 = vunpack.c.l.b16 %v1048
  %v1147 = vunpack.c.l.b16 %v1049
  %v1148 = vunpack.c.l.b16 %v1050
  %v1149 = vunpack.c.l.b16 %v1051
  %v1150 = vunpack.c.l.b16 %v1052
  %v1151 = vunpack.c.l.b16 %v1053
  %v1152 = vunpack.c.l.b16 %v1054
  %v1153 = vunpack.c.l.b16 %v1055
  %v1154 = vunpack.c.l.b16 %v1056
  %v1155 = vunpack.c.l.b16 %v1057
  %v1156 = vunpack.c.l.b16 %v1058
  %v1157 = vunpack.c.l.b16 %v1059
  %v1158 = vunpack.c.l.b16 %v1060
  %v1159 = vunpack.c.l.b16 %v1061
  %v1160 = vunpack.c.l.b16 %v1062
  %v1161 = vunpack.c.l.b16 %v1063
  %v1162 = vunpack.c.l.b16 %v1064
  %v1163 = vunpack.c.l.b16 %v1065
  %v1164 = vunpack.c.l.b16 %v1066
  %v1165 = vunpack.c.l.b16 %v1067
  %v1166 = vunpack.c.l.b16 %v1068
  %v1167 = vunpack.c.l.b16 %v1069
  %v1168 = vunpack.c.l.b16 %v1070
  %v1169 = vunpack.c.l.b16 %v1071
  %v1170 = vunpack.c.l.b16 %v1072
  %v1171 = vunpack.c.l.b16 %v1073
  %v1172 = vunpack.c.l.b16 %v1074
  %v1173 = vunpack.c.l.b16 %v1075
  %v1174 = vunpack.c.l.b16 %v1076
  %v1175 = vunpack.c.l.b16 %v1077
  %v1176 = vunpack.c.l.b16 %v1078
  %v1177 = vunpack.c.l.b16 %v1079
  %v1178 = vunpack.c.l.b16 %v1080
  %v1179 = vunpack.c.l.b16 %v1081
  %v1180 = vunpack.c.l.b16 %v1082
  %v1181 = vunpack.c.l.b16 %v1083
  %v1182 = vunpack.c.l.b16 %v1084
  %v1183 = vunpack.c.l.b16 %v1085
  %v1184 = vunpack.c.l.b16 %v1086
  %v1185 = vunpack.c.l.b16 %v1087
  %v1186 = vunpack.c.l.b16 %v1088
  %v1187 = vunpack.c.l.b16 %v1089
  %v1188 = vunpack.c.l.b16 %v1090
  %v1189 = vunpack.c.l.b16 %v1091
  %v1190 = vunpack.c.l.b16 %v1092
  %v1191 = vunpack.c.l.b16 %v1093
  %v1192 = vunpack.c.l.b16 %v1094
  %v1193 = vpack.c.b16 %v1145, %v1144
  %v1194 = vpack.c.b16 %v1147, %v1146
  %v1195 = vpack.c.b16 %v1149, %v1148
  %v1196 = vpack.c.b16 %v1151, %v1150
  %v1197 = vpack.c.b16 %v1153, %v1152
  %v1198 = vpack.c.b16 %v1155, %v1154
  %v1199 = vpack.c.b16 %v1157, %v1156
  %v1200 = vpack.c.b16 %v1159, %v1158
  %v1201 = vpack.c.b16 %v1161, %v1160
  %v1202 = vpack.c.b16 %v1163, %v1162
  %v1203 = vpack.c.b16 %v1165, %v1164
  %v1204 = vpack.c.b16 %v1167, %v1166
  %v1205 = vpack.c.b16 %v1169, %v1168
  %v1206 = vpack.c.b16 %v1171, %v1170
  %v1207 = vpack.c.b16 %v1173, %v1172
  %v1208 = vpack.c.b16 %v1175, %v1174
  %v1209 = vpack.c.b16 %v1177, %v1176
  %v1210 = vpack.c.b16 %v1179, %v1178
  %v1211 = vpack.c.b16 %v1181, %v1180
  %v1212 = vpack.c.b16 %v1183, %v1182
  %v1213 = vpack.c.b16 %v1185, %v1184
  %v1214 = vpack.c.b16 %v1187, %v1186
  %v1215 = vpack.c.b16 %v1189, %v1188
  %v1216 = vpack.c.b16 %v1191, %v1190
  %v1217 = vpack.c.b16 %v1192, %v1192
  %v1219 = vsel %vm203, %v1193, 0
  %v1222 = vsel %vm203, %v1194, 0
  %v1225 = vsel %vm203, %v1195, 0
  %v1228 = vsel %vm203, %v1196, 0
  %v1231 = vsel %vm203, %v1197, 0
  %v1234 = vsel %vm203, %v1198, 0
  %v1237 = vsel %vm203, %v1199, 0
  %v1240 = vsel %vm203, %v1200, 0
  %v1243 = vsel %vm203, %v1201, 0
  %v1246 = vsel %vm203, %v1202, 0
  %v1249 = vsel %vm203, %v1203, 0
  %v1252 = vsel %vm203, %v1204, 0
  %v1255 = vsel %vm203, %v1205, 0
  %v1258 = vsel %vm203, %v1206, 0
  %v1261 = vsel %vm203, %v1207, 0
  %v1264 = vsel %vm203, %v1208, 0
  %v1267 = vsel %vm203, %v1209, 0
  %v1270 = vsel %vm203, %v1210, 0
  %v1273 = vsel %vm203, %v1211, 0
  %v1276 = vsel %vm203, %v1212, 0
  %v1279 = vsel %vm203, %v1213, 0
  %v1282 = vsel %vm203, %v1214, 0
  %v1285 = vsel %vm203, %v1215, 0
  %v1288 = vsel %vm203, %v1216, 0
  %v1291 = vsel %vm203, %v1217, 0
  %1293 = vmatprep.subr.bf16.mxu0 0
  %1294 = vmatpush1.bf16.msra.mxu0 0
  %1295 = vmatprep.subr.bf16.mxu0 0
  %1296 = vmatpush1.bf16.msra.mxu0 0
  %1297 = vmatprep.subr.bf16.mxu0 0
  %1298 = vmatpush1.bf16.msra.mxu0 0
  %1299 = vmatprep.subr.bf16.mxu0 0
  %1300 = vmatpush1.bf16.msra.mxu0 0
  %1301 = vmatprep.subr.bf16.mxu0 0
  %1302 = vmatpush1.bf16.msra.mxu0 0
  %1303 = vmatprep.subr.bf16.mxu0 0
  %1304 = vmatpush1.bf16.msra.mxu0 0
  %1305 = vmatprep.subr.bf16.mxu0 0
  %1306 = vmatpush1.bf16.msra.mxu0 0
  %1307 = vmatprep.subr.bf16.mxu0 0
  %1308 = vmatpush1.bf16.msra.mxu0 %v284
  %1309 = vmatprep.subr.bf16.mxu0 0
  %1310 = vmatpush2.bf16.msra.mxu0 0
  %1311 = vmatprep.subr.bf16.mxu0 0
  %1312 = vmatpush2.bf16.msra.mxu0 0
  %1313 = vmatprep.subr.bf16.mxu0 0
  %1314 = vmatpush2.bf16.msra.mxu0 0
  %1315 = vmatprep.subr.bf16.mxu0 0
  %1316 = vmatpush2.bf16.msra.mxu0 0
  %1317 = vmatprep.subr.bf16.mxu0 0
  %1318 = vmatpush2.bf16.msra.mxu0 0
  %1319 = vmatprep.subr.bf16.mxu0 0
  %1320 = vmatpush2.bf16.msra.mxu0 0
  %1321 = vmatprep.subr.bf16.mxu0 0
  %1322 = vmatpush2.bf16.msra.mxu0 0
  %1323 = vmatprep.subr.bf16.mxu0 0
  %1324 = vmatpush2.bf16.msra.mxu0 0
  %1325 = vmatprep.mubr.bf16.mxu0 0
  %1326 = vmatmul.mubr.bf16.gmra.mxu0 %v1219
  %v1327 = vpop.f32.mrf.mxu0
  %v1328 = vadd.f32 0.0, %v1327
  %v1329 = vpop.f32.mrf.mxu0
  %v1330 = vpop.f32.mrf.mxu0
  %v1331 = vadd.f32 0.0, %v1330
  %v1332 = vpop.f32.mrf.mxu0
  %1333 = vmatprep.mubr.bf16.mxu0 0
  %1334 = vmatmul.mubr.bf16.gmra.mxu0 %v1222
  %v1335 = vpop.f32.mrf.mxu0
  %v1336 = vadd.f32 0.0, %v1335
  %v1337 = vpop.f32.mrf.mxu0
  %v1338 = vpop.f32.mrf.mxu0
  %v1339 = vadd.f32 0.0, %v1338
  %v1340 = vpop.f32.mrf.mxu0
  %1341 = vmatprep.mubr.bf16.mxu0 0
  %1342 = vmatmul.mubr.bf16.gmra.mxu0 %v1225
  %v1343 = vpop.f32.mrf.mxu0
  %v1344 = vadd.f32 0.0, %v1343
  %v1345 = vpop.f32.mrf.mxu0
  %v1346 = vpop.f32.mrf.mxu0
  %v1347 = vadd.f32 0.0, %v1346
  %v1348 = vpop.f32.mrf.mxu0
  %1349 = vmatprep.mubr.bf16.mxu0 0
  %1350 = vmatmul.mubr.bf16.gmra.mxu0 %v1228
  %v1351 = vpop.f32.mrf.mxu0
  %v1352 = vadd.f32 0.0, %v1351
  %v1353 = vpop.f32.mrf.mxu0
  %v1354 = vpop.f32.mrf.mxu0
  %v1355 = vadd.f32 0.0, %v1354
  %v1356 = vpop.f32.mrf.mxu0
  %1357 = vmatprep.mubr.bf16.mxu0 0
  %1358 = vmatmul.mubr.bf16.gmra.mxu0 %v1231
  %v1359 = vpop.f32.mrf.mxu0
  %v1360 = vadd.f32 0.0, %v1359
  %v1361 = vpop.f32.mrf.mxu0
  %v1362 = vpop.f32.mrf.mxu0
  %v1363 = vadd.f32 0.0, %v1362
  %v1364 = vpop.f32.mrf.mxu0
  %1365 = vmatprep.mubr.bf16.mxu0 0
  %1366 = vmatmul.mubr.bf16.gmra.mxu0 %v1234
  %v1367 = vpop.f32.mrf.mxu0
  %v1368 = vadd.f32 0.0, %v1367
  %v1369 = vpop.f32.mrf.mxu0
  %v1370 = vpop.f32.mrf.mxu0
  %v1371 = vadd.f32 0.0, %v1370
  %v1372 = vpop.f32.mrf.mxu0
  %1373 = vmatprep.mubr.bf16.mxu0 0
  %1374 = vmatmul.mubr.bf16.gmra.mxu0 %v1237
  %v1375 = vpop.f32.mrf.mxu0
  %v1376 = vadd.f32 0.0, %v1375
  %v1377 = vpop.f32.mrf.mxu0
  %v1378 = vpop.f32.mrf.mxu0
  %v1379 = vadd.f32 0.0, %v1378
  %v1380 = vpop.f32.mrf.mxu0
  %1381 = vmatprep.mubr.bf16.mxu0 0
  %1382 = vmatmul.mubr.bf16.gmra.mxu0 %v1240
  %v1383 = vpop.f32.mrf.mxu0
  %v1384 = vadd.f32 0.0, %v1383
  %v1385 = vpop.f32.mrf.mxu0
  %v1386 = vpop.f32.mrf.mxu0
  %v1387 = vadd.f32 0.0, %v1386
  %v1388 = vpop.f32.mrf.mxu0
  %1389 = vmatprep.mubr.bf16.mxu0 0
  %1390 = vmatmul.mubr.bf16.gmra.mxu0 %v1243
  %v1391 = vpop.f32.mrf.mxu0
  %v1392 = vadd.f32 0.0, %v1391
  %v1393 = vpop.f32.mrf.mxu0
  %v1394 = vpop.f32.mrf.mxu0
  %v1395 = vadd.f32 0.0, %v1394
  %v1396 = vpop.f32.mrf.mxu0
  %1397 = vmatprep.mubr.bf16.mxu0 0
  %1398 = vmatmul.mubr.bf16.gmra.mxu0 %v1246
  %v1399 = vpop.f32.mrf.mxu0
  %v1400 = vadd.f32 0.0, %v1399
  %v1401 = vpop.f32.mrf.mxu0
  %v1402 = vpop.f32.mrf.mxu0
  %v1403 = vadd.f32 0.0, %v1402
  %v1404 = vpop.f32.mrf.mxu0
  %1405 = vmatprep.mubr.bf16.mxu0 0
  %1406 = vmatmul.mubr.bf16.gmra.mxu0 %v1249
  %v1407 = vpop.f32.mrf.mxu0
  %v1408 = vadd.f32 0.0, %v1407
  %v1409 = vpop.f32.mrf.mxu0
  %v1410 = vpop.f32.mrf.mxu0
  %v1411 = vadd.f32 0.0, %v1410
  %v1412 = vpop.f32.mrf.mxu0
  %1413 = vmatprep.mubr.bf16.mxu0 0
  %1414 = vmatmul.mubr.bf16.gmra.mxu0 %v1252
  %v1415 = vpop.f32.mrf.mxu0
  %v1416 = vadd.f32 0.0, %v1415
  %v1417 = vpop.f32.mrf.mxu0
  %v1418 = vpop.f32.mrf.mxu0
  %v1419 = vadd.f32 0.0, %v1418
  %v1420 = vpop.f32.mrf.mxu0
  %1421 = vmatprep.mubr.bf16.mxu0 0
  %1422 = vmatmul.mubr.bf16.gmra.mxu0 %v1255
  %v1423 = vpop.f32.mrf.mxu0
  %v1424 = vadd.f32 0.0, %v1423
  %v1425 = vpop.f32.mrf.mxu0
  %v1426 = vpop.f32.mrf.mxu0
  %v1427 = vadd.f32 0.0, %v1426
  %v1428 = vpop.f32.mrf.mxu0
  %1429 = vmatprep.mubr.bf16.mxu0 0
  %1430 = vmatmul.mubr.bf16.gmra.mxu0 %v1258
  %v1431 = vpop.f32.mrf.mxu0
  %v1432 = vadd.f32 0.0, %v1431
  %v1433 = vpop.f32.mrf.mxu0
  %v1434 = vpop.f32.mrf.mxu0
  %v1435 = vadd.f32 0.0, %v1434
  %v1436 = vpop.f32.mrf.mxu0
  %1437 = vmatprep.mubr.bf16.mxu0 0
  %1438 = vmatmul.mubr.bf16.gmra.mxu0 %v1261
  %v1439 = vpop.f32.mrf.mxu0
  %v1440 = vadd.f32 0.0, %v1439
  %v1441 = vpop.f32.mrf.mxu0
  %v1442 = vpop.f32.mrf.mxu0
  %v1443 = vadd.f32 0.0, %v1442
  %v1444 = vpop.f32.mrf.mxu0
  %1445 = vmatprep.mubr.bf16.mxu0 0
  %1446 = vmatmul.mubr.bf16.gmra.mxu0 %v1264
  %v1447 = vpop.f32.mrf.mxu0
  %v1448 = vadd.f32 0.0, %v1447
  %v1449 = vpop.f32.mrf.mxu0
  %v1450 = vpop.f32.mrf.mxu0
  %v1451 = vadd.f32 0.0, %v1450
  %v1452 = vpop.f32.mrf.mxu0
  %1453 = vmatprep.mubr.bf16.mxu0 0
  %1454 = vmatmul.mubr.bf16.gmra.mxu0 %v1267
  %v1455 = vpop.f32.mrf.mxu0
  %v1456 = vadd.f32 0.0, %v1455
  %v1457 = vpop.f32.mrf.mxu0
  %v1458 = vpop.f32.mrf.mxu0
  %v1459 = vadd.f32 0.0, %v1458
  %v1460 = vpop.f32.mrf.mxu0
  %1461 = vmatprep.mubr.bf16.mxu0 0
  %1462 = vmatmul.mubr.bf16.gmra.mxu0 %v1270
  %v1463 = vpop.f32.mrf.mxu0
  %v1464 = vadd.f32 0.0, %v1463
  %v1465 = vpop.f32.mrf.mxu0
  %v1466 = vpop.f32.mrf.mxu0
  %v1467 = vadd.f32 0.0, %v1466
  %v1468 = vpop.f32.mrf.mxu0
  %1469 = vmatprep.mubr.bf16.mxu0 0
  %1470 = vmatmul.mubr.bf16.gmra.mxu0 %v1273
  %v1471 = vpop.f32.mrf.mxu0
  %v1472 = vadd.f32 0.0, %v1471
  %v1473 = vpop.f32.mrf.mxu0
  %v1474 = vpop.f32.mrf.mxu0
  %v1475 = vadd.f32 0.0, %v1474
  %v1476 = vpop.f32.mrf.mxu0
  %1477 = vmatprep.mubr.bf16.mxu0 0
  %1478 = vmatmul.mubr.bf16.gmra.mxu0 %v1276
  %v1479 = vpop.f32.mrf.mxu0
  %v1480 = vadd.f32 0.0, %v1479
  %v1481 = vpop.f32.mrf.mxu0
  %v1482 = vpop.f32.mrf.mxu0
  %v1483 = vadd.f32 0.0, %v1482
  %v1484 = vpop.f32.mrf.mxu0
  %1485 = vmatprep.mubr.bf16.mxu0 0
  %1486 = vmatmul.mubr.bf16.gmra.mxu0 %v1279
  %v1487 = vpop.f32.mrf.mxu0
  %v1488 = vadd.f32 0.0, %v1487
  %v1489 = vpop.f32.mrf.mxu0
  %v1490 = vpop.f32.mrf.mxu0
  %v1491 = vadd.f32 0.0, %v1490
  %v1492 = vpop.f32.mrf.mxu0
  %1493 = vmatprep.mubr.bf16.mxu0 0
  %1494 = vmatmul.mubr.bf16.gmra.mxu0 %v1282
  %v1495 = vpop.f32.mrf.mxu0
  %v1496 = vadd.f32 0.0, %v1495
  %v1497 = vpop.f32.mrf.mxu0
  %v1498 = vpop.f32.mrf.mxu0
  %v1499 = vadd.f32 0.0, %v1498
  %v1500 = vpop.f32.mrf.mxu0
  %1501 = vmatprep.mubr.bf16.mxu0 0
  %1502 = vmatmul.mubr.bf16.gmra.mxu0 %v1285
  %v1503 = vpop.f32.mrf.mxu0
  %v1504 = vadd.f32 0.0, %v1503
  %v1505 = vpop.f32.mrf.mxu0
  %v1506 = vpop.f32.mrf.mxu0
  %v1507 = vadd.f32 0.0, %v1506
  %v1508 = vpop.f32.mrf.mxu0
  %1509 = vmatprep.mubr.bf16.mxu0 0
  %1510 = vmatmul.mubr.bf16.gmra.mxu0 %v1288
  %v1511 = vpop.f32.mrf.mxu0
  %v1512 = vadd.f32 0.0, %v1511
  %v1513 = vpop.f32.mrf.mxu0
  %v1514 = vpop.f32.mrf.mxu0
  %v1515 = vadd.f32 0.0, %v1514
  %v1516 = vpop.f32.mrf.mxu0
  %1517 = vmatprep.mubr.bf16.mxu0 0
  %1518 = vmatmul.mubr.bf16.gmra.mxu0 %v1291
  %v1519 = vpop.f32.mrf.mxu0
  %v1520 = vadd.f32 0.0, %v1519
  %v1521 = vpop.f32.mrf.mxu0
  %v1522 = vpop.f32.mrf.mxu0
  %v1523 = vpop.f32.mrf.mxu0
  %1524 = vdwg.mxu0
  %v1525 = vld [vmem:[%s3] sm:$0xf]
  %v1526 = vld [vmem:[%s3 + $0x4] sm:$0xf]
  %v1527 = vld [vmem:[%s3 + $0x8] sm:$0xf]
  %v1528 = vld [vmem:[%s3 + $0xc] sm:$0xf]
  %v1529 = vld [vmem:[%s3 + $0x10] sm:$0xf]
  %v1530 = vld [vmem:[%s3 + $0x14] sm:$0xf]
  %v1531 = vld [vmem:[%s3 + $0x18] sm:$0xf]
  %v1532 = vld [vmem:[%s3 + $0x1c] sm:$0xf]
  %v1533 = vld [vmem:[%s3 + $0x20] sm:$0xf]
  %v1534 = vld [vmem:[%s3 + $0x24] sm:$0xf]
  %v1535 = vld [vmem:[%s3 + $0x28] sm:$0xf]
  %v1536 = vld [vmem:[%s3 + $0x2c] sm:$0xf]
  %v1537 = vld [vmem:[%s3 + $0x30] sm:$0xf]
  %v1538 = vld [vmem:[%s3 + $0x34] sm:$0xf]
  %v1539 = vld [vmem:[%s3 + $0x38] sm:$0xf]
  %v1540 = vld [vmem:[%s3 + $0x3c] sm:$0xf]
  %v1541 = vld [vmem:[%s3 + $0x40] sm:$0xf]
  %v1542 = vld [vmem:[%s3 + $0x44] sm:$0xf]
  %v1543 = vld [vmem:[%s3 + $0x48] sm:$0xf]
  %v1544 = vld [vmem:[%s3 + $0x4c] sm:$0xf]
  %v1545 = vld [vmem:[%s3 + $0x50] sm:$0xf]
  %v1546 = vld [vmem:[%s3 + $0x54] sm:$0xf]
  %v1547 = vld [vmem:[%s3 + $0x58] sm:$0xf]
  %v1548 = vld [vmem:[%s3 + $0x5c] sm:$0xf]
  %v1549 = vld [vmem:[%s3 + $0x60] sm:$0xf]
  %v1550 = vld [vmem:[%s3 + $0x64] sm:$0xf]
  %v1551 = vld [vmem:[%s3 + $0x68] sm:$0xf]
  %v1552 = vld [vmem:[%s3 + $0x6c] sm:$0xf]
  %v1553 = vld [vmem:[%s3 + $0x70] sm:$0xf]
  %v1554 = vld [vmem:[%s3 + $0x74] sm:$0xf]
  %v1555 = vld [vmem:[%s3 + $0x78] sm:$0xf]
  %v1556 = vld [vmem:[%s3 + $0x7c] sm:$0xf]
  %v1557 = vld [vmem:[%s3 + $0x80] sm:$0xf]
  %v1558 = vld [vmem:[%s3 + $0x84] sm:$0xf]
  %v1559 = vld [vmem:[%s3 + $0x88] sm:$0xf]
  %v1560 = vld [vmem:[%s3 + $0x8c] sm:$0xf]
  %v1561 = vld [vmem:[%s3 + $0x90] sm:$0xf]
  %v1562 = vld [vmem:[%s3 + $0x94] sm:$0xf]
  %v1563 = vld [vmem:[%s3 + $0x98] sm:$0xf]
  %v1564 = vld [vmem:[%s3 + $0x9c] sm:$0xf]
  %v1565 = vld [vmem:[%s3 + $0xa0] sm:$0xf]
  %v1566 = vld [vmem:[%s3 + $0xa4] sm:$0xf]
  %v1567 = vld [vmem:[%s3 + $0xa8] sm:$0xf]
  %v1568 = vld [vmem:[%s3 + $0xac] sm:$0xf]
  %v1569 = vld [vmem:[%s3 + $0xb0] sm:$0xf]
  %v1570 = vld [vmem:[%s3 + $0xb4] sm:$0xf]
  %v1571 = vld [vmem:[%s3 + $0xb8] sm:$0xf]
  %v1572 = vld [vmem:[%s3 + $0xbc] sm:$0xf]
  %v1573 = vld [vmem:[%s3 + $0xc0] sm:$0xf]
  %v1623 = vunpack.c.l.b16 %v1525
  %v1624 = vunpack.c.l.b16 %v1526
  %v1625 = vunpack.c.l.b16 %v1527
  %v1626 = vunpack.c.l.b16 %v1528
  %v1627 = vunpack.c.l.b16 %v1529
  %v1628 = vunpack.c.l.b16 %v1530
  %v1629 = vunpack.c.l.b16 %v1531
  %v1630 = vunpack.c.l.b16 %v1532
  %v1631 = vunpack.c.l.b16 %v1533
  %v1632 = vunpack.c.l.b16 %v1534
  %v1633 = vunpack.c.l.b16 %v1535
  %v1634 = vunpack.c.l.b16 %v1536
  %v1635 = vunpack.c.l.b16 %v1537
  %v1636 = vunpack.c.l.b16 %v1538
  %v1637 = vunpack.c.l.b16 %v1539
  %v1638 = vunpack.c.l.b16 %v1540
  %v1639 = vunpack.c.l.b16 %v1541
  %v1640 = vunpack.c.l.b16 %v1542
  %v1641 = vunpack.c.l.b16 %v1543
  %v1642 = vunpack.c.l.b16 %v1544
  %v1643 = vunpack.c.l.b16 %v1545
  %v1644 = vunpack.c.l.b16 %v1546
  %v1645 = vunpack.c.l.b16 %v1547
  %v1646 = vunpack.c.l.b16 %v1548
  %v1647 = vunpack.c.l.b16 %v1549
  %v1648 = vunpack.c.l.b16 %v1550
  %v1649 = vunpack.c.l.b16 %v1551
  %v1650 = vunpack.c.l.b16 %v1552
  %v1651 = vunpack.c.l.b16 %v1553
  %v1652 = vunpack.c.l.b16 %v1554
  %v1653 = vunpack.c.l.b16 %v1555
  %v1654 = vunpack.c.l.b16 %v1556
  %v1655 = vunpack.c.l.b16 %v1557
  %v1656 = vunpack.c.l.b16 %v1558
  %v1657 = vunpack.c.l.b16 %v1559
  %v1658 = vunpack.c.l.b16 %v1560
  %v1659 = vunpack.c.l.b16 %v1561
  %v1660 = vunpack.c.l.b16 %v1562
  %v1661 = vunpack.c.l.b16 %v1563
  %v1662 = vunpack.c.l.b16 %v1564
  %v1663 = vunpack.c.l.b16 %v1565
  %v1664 = vunpack.c.l.b16 %v1566
  %v1665 = vunpack.c.l.b16 %v1567
  %v1666 = vunpack.c.l.b16 %v1568
  %v1667 = vunpack.c.l.b16 %v1569
  %v1668 = vunpack.c.l.b16 %v1570
  %v1669 = vunpack.c.l.b16 %v1571
  %v1670 = vunpack.c.l.b16 %v1572
  %v1671 = vunpack.c.l.b16 %v1573
  %v1672 = vpack.c.b16 %v1624, %v1623
  %v1673 = vpack.c.b16 %v1626, %v1625
  %v1674 = vpack.c.b16 %v1628, %v1627
  %v1675 = vpack.c.b16 %v1630, %v1629
  %v1676 = vpack.c.b16 %v1632, %v1631
  %v1677 = vpack.c.b16 %v1634, %v1633
  %v1678 = vpack.c.b16 %v1636, %v1635
  %v1679 = vpack.c.b16 %v1638, %v1637
  %v1680 = vpack.c.b16 %v1640, %v1639
  %v1681 = vpack.c.b16 %v1642, %v1641
  %v1682 = vpack.c.b16 %v1644, %v1643
  %v1683 = vpack.c.b16 %v1646, %v1645
  %v1684 = vpack.c.b16 %v1648, %v1647
  %v1685 = vpack.c.b16 %v1650, %v1649
  %v1686 = vpack.c.b16 %v1652, %v1651
  %v1687 = vpack.c.b16 %v1654, %v1653
  %v1688 = vpack.c.b16 %v1656, %v1655
  %v1689 = vpack.c.b16 %v1658, %v1657
  %v1690 = vpack.c.b16 %v1660, %v1659
  %v1691 = vpack.c.b16 %v1662, %v1661
  %v1692 = vpack.c.b16 %v1664, %v1663
  %v1693 = vpack.c.b16 %v1666, %v1665
  %v1694 = vpack.c.b16 %v1668, %v1667
  %v1695 = vpack.c.b16 %v1670, %v1669
  %v1696 = vpack.c.b16 %v1671, %v1671
  %v1698 = vsel %vm203, %v1672, 0
  %v1701 = vsel %vm203, %v1673, 0
  %v1704 = vsel %vm203, %v1674, 0
  %v1707 = vsel %vm203, %v1675, 0
  %v1710 = vsel %vm203, %v1676, 0
  %v1713 = vsel %vm203, %v1677, 0
  %v1716 = vsel %vm203, %v1678, 0
  %v1719 = vsel %vm203, %v1679, 0
  %v1722 = vsel %vm203, %v1680, 0
  %v1725 = vsel %vm203, %v1681, 0
  %v1728 = vsel %vm203, %v1682, 0
  %v1731 = vsel %vm203, %v1683, 0
  %v1734 = vsel %vm203, %v1684, 0
  %v1737 = vsel %vm203, %v1685, 0
  %v1740 = vsel %vm203, %v1686, 0
  %v1743 = vsel %vm203, %v1687, 0
  %v1746 = vsel %vm203, %v1688, 0
  %v1749 = vsel %vm203, %v1689, 0
  %v1752 = vsel %vm203, %v1690, 0
  %v1755 = vsel %vm203, %v1691, 0
  %v1758 = vsel %vm203, %v1692, 0
  %v1761 = vsel %vm203, %v1693, 0
  %v1764 = vsel %vm203, %v1694, 0
  %v1767 = vsel %vm203, %v1695, 0
  %v1770 = vsel %vm203, %v1696, 0
  %1772 = vmatprep.subr.bf16.mxu0 0
  %1773 = vmatpush1.bf16.msra.mxu0 0
  %1774 = vmatprep.subr.bf16.mxu0 0
  %1775 = vmatpush1.bf16.msra.mxu0 0
  %1776 = vmatprep.subr.bf16.mxu0 0
  %1777 = vmatpush1.bf16.msra.mxu0 0
  %1778 = vmatprep.subr.bf16.mxu0 0
  %1779 = vmatpush1.bf16.msra.mxu0 0
  %1780 = vmatprep.subr.bf16.mxu0 0
  %1781 = vmatpush1.bf16.msra.mxu0 0
  %1782 = vmatprep.subr.bf16.mxu0 0
  %1783 = vmatpush1.bf16.msra.mxu0 0
  %1784 = vmatprep.subr.bf16.mxu0 0
  %1785 = vmatpush1.bf16.msra.mxu0 0
  %1786 = vmatprep.subr.bf16.mxu0 0
  %1787 = vmatpush1.bf16.msra.mxu0 %v284
  %1788 = vmatprep.subr.bf16.mxu0 0
  %1789 = vmatpush2.bf16.msra.mxu0 0
  %1790 = vmatprep.subr.bf16.mxu0 0
  %1791 = vmatpush2.bf16.msra.mxu0 0
  %1792 = vmatprep.subr.bf16.mxu0 0
  %1793 = vmatpush2.bf16.msra.mxu0 0
  %1794 = vmatprep.subr.bf16.mxu0 0
  %1795 = vmatpush2.bf16.msra.mxu0 0
  %1796 = vmatprep.subr.bf16.mxu0 0
  %1797 = vmatpush2.bf16.msra.mxu0 0
  %1798 = vmatprep.subr.bf16.mxu0 0
  %1799 = vmatpush2.bf16.msra.mxu0 0
  %1800 = vmatprep.subr.bf16.mxu0 0
  %1801 = vmatpush2.bf16.msra.mxu0 0
  %1802 = vmatprep.subr.bf16.mxu0 0
  %1803 = vmatpush2.bf16.msra.mxu0 0
  %1804 = vmatprep.mubr.bf16.mxu0 0
  %1805 = vmatmul.mubr.bf16.gmra.mxu0 %v1698
  %v1806 = vpop.f32.mrf.mxu0
  %v1807 = vadd.f32 0.0, %v1806
  %v1808 = vpop.f32.mrf.mxu0
  %v1809 = vpop.f32.mrf.mxu0
  %v1810 = vadd.f32 0.0, %v1809
  %v1811 = vpop.f32.mrf.mxu0
  %1812 = vmatprep.mubr.bf16.mxu0 0
  %1813 = vmatmul.mubr.bf16.gmra.mxu0 %v1701
  %v1814 = vpop.f32.mrf.mxu0
  %v1815 = vadd.f32 0.0, %v1814
  %v1816 = vpop.f32.mrf.mxu0
  %v1817 = vpop.f32.mrf.mxu0
  %v1818 = vadd.f32 0.0, %v1817
  %v1819 = vpop.f32.mrf.mxu0
  %1820 = vmatprep.mubr.bf16.mxu0 0
  %1821 = vmatmul.mubr.bf16.gmra.mxu0 %v1704
  %v1822 = vpop.f32.mrf.mxu0
  %v1823 = vadd.f32 0.0, %v1822
  %v1824 = vpop.f32.mrf.mxu0
  %v1825 = vpop.f32.mrf.mxu0
  %v1826 = vadd.f32 0.0, %v1825
  %v1827 = vpop.f32.mrf.mxu0
  %1828 = vmatprep.mubr.bf16.mxu0 0
  %1829 = vmatmul.mubr.bf16.gmra.mxu0 %v1707
  %v1830 = vpop.f32.mrf.mxu0
  %v1831 = vadd.f32 0.0, %v1830
  %v1832 = vpop.f32.mrf.mxu0
  %v1833 = vpop.f32.mrf.mxu0
  %v1834 = vadd.f32 0.0, %v1833
  %v1835 = vpop.f32.mrf.mxu0
  %1836 = vmatprep.mubr.bf16.mxu0 0
  %1837 = vmatmul.mubr.bf16.gmra.mxu0 %v1710
  %v1838 = vpop.f32.mrf.mxu0
  %v1839 = vadd.f32 0.0, %v1838
  %v1840 = vpop.f32.mrf.mxu0
  %v1841 = vpop.f32.mrf.mxu0
  %v1842 = vadd.f32 0.0, %v1841
  %v1843 = vpop.f32.mrf.mxu0
  %1844 = vmatprep.mubr.bf16.mxu0 0
  %1845 = vmatmul.mubr.bf16.gmra.mxu0 %v1713
  %v1846 = vpop.f32.mrf.mxu0
  %v1847 = vadd.f32 0.0, %v1846
  %v1848 = vpop.f32.mrf.mxu0
  %v1849 = vpop.f32.mrf.mxu0
  %v1850 = vadd.f32 0.0, %v1849
  %v1851 = vpop.f32.mrf.mxu0
  %1852 = vmatprep.mubr.bf16.mxu0 0
  %1853 = vmatmul.mubr.bf16.gmra.mxu0 %v1716
  %v1854 = vpop.f32.mrf.mxu0
  %v1855 = vadd.f32 0.0, %v1854
  %v1856 = vpop.f32.mrf.mxu0
  %v1857 = vpop.f32.mrf.mxu0
  %v1858 = vadd.f32 0.0, %v1857
  %v1859 = vpop.f32.mrf.mxu0
  %1860 = vmatprep.mubr.bf16.mxu0 0
  %1861 = vmatmul.mubr.bf16.gmra.mxu0 %v1719
  %v1862 = vpop.f32.mrf.mxu0
  %v1863 = vadd.f32 0.0, %v1862
  %v1864 = vpop.f32.mrf.mxu0
  %v1865 = vpop.f32.mrf.mxu0
  %v1866 = vadd.f32 0.0, %v1865
  %v1867 = vpop.f32.mrf.mxu0
  %1868 = vmatprep.mubr.bf16.mxu0 0
  %1869 = vmatmul.mubr.bf16.gmra.mxu0 %v1722
  %v1870 = vpop.f32.mrf.mxu0
  %v1871 = vadd.f32 0.0, %v1870
  %v1872 = vpop.f32.mrf.mxu0
  %v1873 = vpop.f32.mrf.mxu0
  %v1874 = vadd.f32 0.0, %v1873
  %v1875 = vpop.f32.mrf.mxu0
  %1876 = vmatprep.mubr.bf16.mxu0 0
  %1877 = vmatmul.mubr.bf16.gmra.mxu0 %v1725
  %v1878 = vpop.f32.mrf.mxu0
  %v1879 = vadd.f32 0.0, %v1878
  %v1880 = vpop.f32.mrf.mxu0
  %v1881 = vpop.f32.mrf.mxu0
  %v1882 = vadd.f32 0.0, %v1881
  %v1883 = vpop.f32.mrf.mxu0
  %1884 = vmatprep.mubr.bf16.mxu0 0
  %1885 = vmatmul.mubr.bf16.gmra.mxu0 %v1728
  %v1886 = vpop.f32.mrf.mxu0
  %v1887 = vadd.f32 0.0, %v1886
  %v1888 = vpop.f32.mrf.mxu0
  %v1889 = vpop.f32.mrf.mxu0
  %v1890 = vadd.f32 0.0, %v1889
  %v1891 = vpop.f32.mrf.mxu0
  %1892 = vmatprep.mubr.bf16.mxu0 0
  %1893 = vmatmul.mubr.bf16.gmra.mxu0 %v1731
  %v1894 = vpop.f32.mrf.mxu0
  %v1895 = vadd.f32 0.0, %v1894
  %v1896 = vpop.f32.mrf.mxu0
  %v1897 = vpop.f32.mrf.mxu0
  %v1898 = vadd.f32 0.0, %v1897
  %v1899 = vpop.f32.mrf.mxu0
  %1900 = vmatprep.mubr.bf16.mxu0 0
  %1901 = vmatmul.mubr.bf16.gmra.mxu0 %v1734
  %v1902 = vpop.f32.mrf.mxu0
  %v1903 = vadd.f32 0.0, %v1902
  %v1904 = vpop.f32.mrf.mxu0
  %v1905 = vpop.f32.mrf.mxu0
  %v1906 = vadd.f32 0.0, %v1905
  %v1907 = vpop.f32.mrf.mxu0
  %1908 = vmatprep.mubr.bf16.mxu0 0
  %1909 = vmatmul.mubr.bf16.gmra.mxu0 %v1737
  %v1910 = vpop.f32.mrf.mxu0
  %v1911 = vadd.f32 0.0, %v1910
  %v1912 = vpop.f32.mrf.mxu0
  %v1913 = vpop.f32.mrf.mxu0
  %v1914 = vadd.f32 0.0, %v1913
  %v1915 = vpop.f32.mrf.mxu0
  %1916 = vmatprep.mubr.bf16.mxu0 0
  %1917 = vmatmul.mubr.bf16.gmra.mxu0 %v1740
  %v1918 = vpop.f32.mrf.mxu0
  %v1919 = vadd.f32 0.0, %v1918
  %v1920 = vpop.f32.mrf.mxu0
  %v1921 = vpop.f32.mrf.mxu0
  %v1922 = vadd.f32 0.0, %v1921
  %v1923 = vpop.f32.mrf.mxu0
  %1924 = vmatprep.mubr.bf16.mxu0 0
  %1925 = vmatmul.mubr.bf16.gmra.mxu0 %v1743
  %v1926 = vpop.f32.mrf.mxu0
  %v1927 = vadd.f32 0.0, %v1926
  %v1928 = vpop.f32.mrf.mxu0
  %v1929 = vpop.f32.mrf.mxu0
  %v1930 = vadd.f32 0.0, %v1929
  %v1931 = vpop.f32.mrf.mxu0
  %1932 = vmatprep.mubr.bf16.mxu0 0
  %1933 = vmatmul.mubr.bf16.gmra.mxu0 %v1746
  %v1934 = vpop.f32.mrf.mxu0
  %v1935 = vadd.f32 0.0, %v1934
  %v1936 = vpop.f32.mrf.mxu0
  %v1937 = vpop.f32.mrf.mxu0
  %v1938 = vadd.f32 0.0, %v1937
  %v1939 = vpop.f32.mrf.mxu0
  %1940 = vmatprep.mubr.bf16.mxu0 0
  %1941 = vmatmul.mubr.bf16.gmra.mxu0 %v1749
  %v1942 = vpop.f32.mrf.mxu0
  %v1943 = vadd.f32 0.0, %v1942
  %v1944 = vpop.f32.mrf.mxu0
  %v1945 = vpop.f32.mrf.mxu0
  %v1946 = vadd.f32 0.0, %v1945
  %v1947 = vpop.f32.mrf.mxu0
  %1948 = vmatprep.mubr.bf16.mxu0 0
  %1949 = vmatmul.mubr.bf16.gmra.mxu0 %v1752
  %v1950 = vpop.f32.mrf.mxu0
  %v1951 = vadd.f32 0.0, %v1950
  %v1952 = vpop.f32.mrf.mxu0
  %v1953 = vpop.f32.mrf.mxu0
  %v1954 = vadd.f32 0.0, %v1953
  %v1955 = vpop.f32.mrf.mxu0
  %1956 = vmatprep.mubr.bf16.mxu0 0
  %1957 = vmatmul.mubr.bf16.gmra.mxu0 %v1755
  %v1958 = vpop.f32.mrf.mxu0
  %v1959 = vadd.f32 0.0, %v1958
  %v1960 = vpop.f32.mrf.mxu0
  %v1961 = vpop.f32.mrf.mxu0
  %v1962 = vadd.f32 0.0, %v1961
  %v1963 = vpop.f32.mrf.mxu0
  %1964 = vmatprep.mubr.bf16.mxu0 0
  %1965 = vmatmul.mubr.bf16.gmra.mxu0 %v1758
  %v1966 = vpop.f32.mrf.mxu0
  %v1967 = vadd.f32 0.0, %v1966
  %v1968 = vpop.f32.mrf.mxu0
  %v1969 = vpop.f32.mrf.mxu0
  %v1970 = vadd.f32 0.0, %v1969
  %v1971 = vpop.f32.mrf.mxu0
  %1972 = vmatprep.mubr.bf16.mxu0 0
  %1973 = vmatmul.mubr.bf16.gmra.mxu0 %v1761
  %v1974 = vpop.f32.mrf.mxu0
  %v1975 = vadd.f32 0.0, %v1974
  %v1976 = vpop.f32.mrf.mxu0
  %v1977 = vpop.f32.mrf.mxu0
  %v1978 = vadd.f32 0.0, %v1977
  %v1979 = vpop.f32.mrf.mxu0
  %1980 = vmatprep.mubr.bf16.mxu0 0
  %1981 = vmatmul.mubr.bf16.gmra.mxu0 %v1764
  %v1982 = vpop.f32.mrf.mxu0
  %v1983 = vadd.f32 0.0, %v1982
  %v1984 = vpop.f32.mrf.mxu0
  %v1985 = vpop.f32.mrf.mxu0
  %v1986 = vadd.f32 0.0, %v1985
  %v1987 = vpop.f32.mrf.mxu0
  %1988 = vmatprep.mubr.bf16.mxu0 0
  %1989 = vmatmul.mubr.bf16.gmra.mxu0 %v1767
  %v1990 = vpop.f32.mrf.mxu0
  %v1991 = vadd.f32 0.0, %v1990
  %v1992 = vpop.f32.mrf.mxu0
  %v1993 = vpop.f32.mrf.mxu0
  %v1994 = vadd.f32 0.0, %v1993
  %v1995 = vpop.f32.mrf.mxu0
  %1996 = vmatprep.mubr.bf16.mxu0 0
  %1997 = vmatmul.mubr.bf16.gmra.mxu0 %v1770
  %v1998 = vpop.f32.mrf.mxu0
  %v1999 = vadd.f32 0.0, %v1998
  %v2000 = vpop.f32.mrf.mxu0
  %v2001 = vpop.f32.mrf.mxu0
  %v2002 = vpop.f32.mrf.mxu0
  %2003 = vdwg.mxu0
  %v2004 = vmax.f32 %v1328, %v1807
  %v2005 = vmax.f32 %v1331, %v1810
  %v2006 = vmax.f32 %v1336, %v1815
  %v2007 = vmax.f32 %v1339, %v1818
  %v2008 = vmax.f32 %v1344, %v1823
  %v2009 = vmax.f32 %v1347, %v1826
  %v2010 = vmax.f32 %v1352, %v1831
  %v2011 = vmax.f32 %v1355, %v1834
  %v2012 = vmax.f32 %v1360, %v1839
  %v2013 = vmax.f32 %v1363, %v1842
  %v2014 = vmax.f32 %v1368, %v1847
  %v2015 = vmax.f32 %v1371, %v1850
  %v2016 = vmax.f32 %v1376, %v1855
  %v2017 = vmax.f32 %v1379, %v1858
  %v2018 = vmax.f32 %v1384, %v1863
  %v2019 = vmax.f32 %v1387, %v1866
  %v2020 = vmax.f32 %v1392, %v1871
  %v2021 = vmax.f32 %v1395, %v1874
  %v2022 = vmax.f32 %v1400, %v1879
  %v2023 = vmax.f32 %v1403, %v1882
  %v2024 = vmax.f32 %v1408, %v1887
  %v2025 = vmax.f32 %v1411, %v1890
  %v2026 = vmax.f32 %v1416, %v1895
  %v2027 = vmax.f32 %v1419, %v1898
  %v2028 = vmax.f32 %v1424, %v1903
  %v2029 = vmax.f32 %v1427, %v1906
  %v2030 = vmax.f32 %v1432, %v1911
  %v2031 = vmax.f32 %v1435, %v1914
  %v2032 = vmax.f32 %v1440, %v1919
  %v2033 = vmax.f32 %v1443, %v1922
  %v2034 = vmax.f32 %v1448, %v1927
  %v2035 = vmax.f32 %v1451, %v1930
  %v2036 = vmax.f32 %v1456, %v1935
  %v2037 = vmax.f32 %v1459, %v1938
  %v2038 = vmax.f32 %v1464, %v1943
  %v2039 = vmax.f32 %v1467, %v1946
  %v2040 = vmax.f32 %v1472, %v1951
  %v2041 = vmax.f32 %v1475, %v1954
  %v2042 = vmax.f32 %v1480, %v1959
  %v2043 = vmax.f32 %v1483, %v1962
  %v2044 = vmax.f32 %v1488, %v1967
  %v2045 = vmax.f32 %v1491, %v1970
  %v2046 = vmax.f32 %v1496, %v1975
  %v2047 = vmax.f32 %v1499, %v1978
  %v2048 = vmax.f32 %v1504, %v1983
  %v2049 = vmax.f32 %v1507, %v1986
  %v2050 = vmax.f32 %v1512, %v1991
  %v2051 = vmax.f32 %v1515, %v1994
  %v2052 = vmax.f32 %v1520, %v1999
  %v2053 = vmax.f32 %v997, %v2004
  %v2054 = vmax.f32 %v998, %v2005
  %v2055 = vmax.f32 %v999, %v2006
  %v2056 = vmax.f32 %v1000, %v2007
  %v2057 = vmax.f32 %v1001, %v2008
  %v2058 = vmax.f32 %v1002, %v2009
  %v2059 = vmax.f32 %v1003, %v2010
  %v2060 = vmax.f32 %v1004, %v2011
  %v2061 = vmax.f32 %v1005, %v2012
  %v2062 = vmax.f32 %v1006, %v2013
  %v2063 = vmax.f32 %v1007, %v2014
  %v2064 = vmax.f32 %v1008, %v2015
  %v2065 = vmax.f32 %v1009, %v2016
  %v2066 = vmax.f32 %v1010, %v2017
  %v2067 = vmax.f32 %v1011, %v2018
  %v2068 = vmax.f32 %v1012, %v2019
  %v2069 = vmax.f32 %v1013, %v2020
  %v2070 = vmax.f32 %v1014, %v2021
  %v2071 = vmax.f32 %v1015, %v2022
  %v2072 = vmax.f32 %v1016, %v2023
  %v2073 = vmax.f32 %v1017, %v2024
  %v2074 = vmax.f32 %v1018, %v2025
  %v2075 = vmax.f32 %v1019, %v2026
  %v2076 = vmax.f32 %v1020, %v2027
  %v2077 = vmax.f32 %v1021, %v2028
  %v2078 = vmax.f32 %v1022, %v2029
  %v2079 = vmax.f32 %v1023, %v2030
  %v2080 = vmax.f32 %v1024, %v2031
  %v2081 = vmax.f32 %v1025, %v2032
  %v2082 = vmax.f32 %v1026, %v2033
  %v2083 = vmax.f32 %v1027, %v2034
  %v2084 = vmax.f32 %v1028, %v2035
  %v2085 = vmax.f32 %v1029, %v2036
  %v2086 = vmax.f32 %v1030, %v2037
  %v2087 = vmax.f32 %v1031, %v2038
  %v2088 = vmax.f32 %v1032, %v2039
  %v2089 = vmax.f32 %v1033, %v2040
  %v2090 = vmax.f32 %v1034, %v2041
  %v2091 = vmax.f32 %v1035, %v2042
  %v2092 = vmax.f32 %v1036, %v2043
  %v2093 = vmax.f32 %v1037, %v2044
  %v2094 = vmax.f32 %v1038, %v2045
  %v2095 = vmax.f32 %v1039, %v2046
  %v2096 = vmax.f32 %v1040, %v2047
  %v2097 = vmax.f32 %v1041, %v2048
  %v2098 = vmax.f32 %v1042, %v2049
  %v2099 = vmax.f32 %v1043, %v2050
  %v2100 = vmax.f32 %v1044, %v2051
  %v2101 = vmax.f32 %v1045, %v2052
  %v2102 = vld [vmem:[%s5] sm:$0x1]
  %v2104 = vlaneseq
  %v2105 = vshrl.u32 %v2104, 7
  %v2106 = vsub.s32 0, %v2105
  %v2107 = vrot.slane %v2102, %v2106
  %v2109 = vadd.f32 %v2053, %v2107
  %v2110 = vadd.f32 %v2054, %v2107
  %v2111 = vadd.f32 %v2055, %v2107
  %v2112 = vadd.f32 %v2056, %v2107
  %v2113 = vadd.f32 %v2057, %v2107
  %v2114 = vadd.f32 %v2058, %v2107
  %v2115 = vadd.f32 %v2059, %v2107
  %v2116 = vadd.f32 %v2060, %v2107
  %v2117 = vadd.f32 %v2061, %v2107
  %v2118 = vadd.f32 %v2062, %v2107
  %v2119 = vadd.f32 %v2063, %v2107
  %v2120 = vadd.f32 %v2064, %v2107
  %v2121 = vadd.f32 %v2065, %v2107
  %v2122 = vadd.f32 %v2066, %v2107
  %v2123 = vadd.f32 %v2067, %v2107
  %v2124 = vadd.f32 %v2068, %v2107
  %v2125 = vadd.f32 %v2069, %v2107
  %v2126 = vadd.f32 %v2070, %v2107
  %v2127 = vadd.f32 %v2071, %v2107
  %v2128 = vadd.f32 %v2072, %v2107
  %v2129 = vadd.f32 %v2073, %v2107
  %v2130 = vadd.f32 %v2074, %v2107
  %v2131 = vadd.f32 %v2075, %v2107
  %v2132 = vadd.f32 %v2076, %v2107
  %v2133 = vadd.f32 %v2077, %v2107
  %v2134 = vadd.f32 %v2078, %v2107
  %v2135 = vadd.f32 %v2079, %v2107
  %v2136 = vadd.f32 %v2080, %v2107
  %v2137 = vadd.f32 %v2081, %v2107
  %v2138 = vadd.f32 %v2082, %v2107
  %v2139 = vadd.f32 %v2083, %v2107
  %v2140 = vadd.f32 %v2084, %v2107
  %v2141 = vadd.f32 %v2085, %v2107
  %v2142 = vadd.f32 %v2086, %v2107
  %v2143 = vadd.f32 %v2087, %v2107
  %v2144 = vadd.f32 %v2088, %v2107
  %v2145 = vadd.f32 %v2089, %v2107
  %v2146 = vadd.f32 %v2090, %v2107
  %v2147 = vadd.f32 %v2091, %v2107
  %v2148 = vadd.f32 %v2092, %v2107
  %v2149 = vadd.f32 %v2093, %v2107
  %v2150 = vadd.f32 %v2094, %v2107
  %v2151 = vadd.f32 %v2095, %v2107
  %v2152 = vadd.f32 %v2096, %v2107
  %v2153 = vadd.f32 %v2097, %v2107
  %v2154 = vadd.f32 %v2098, %v2107
  %v2155 = vadd.f32 %v2099, %v2107
  %v2156 = vadd.f32 %v2100, %v2107
  %v2157 = vadd.f32 %v2101, %v2107
  %v2158 = vmax.f32 %v2109, 0.0
  %v2159 = vmax.f32 %v2110, 0.0
  %v2160 = vmax.f32 %v2111, 0.0
  %v2161 = vmax.f32 %v2112, 0.0
  %v2162 = vmax.f32 %v2113, 0.0
  %v2163 = vmax.f32 %v2114, 0.0
  %v2164 = vmax.f32 %v2115, 0.0
  %v2165 = vmax.f32 %v2116, 0.0
  %v2166 = vmax.f32 %v2117, 0.0
  %v2167 = vmax.f32 %v2118, 0.0
  %v2168 = vmax.f32 %v2119, 0.0
  %v2169 = vmax.f32 %v2120, 0.0
  %v2170 = vmax.f32 %v2121, 0.0
  %v2171 = vmax.f32 %v2122, 0.0
  %v2172 = vmax.f32 %v2123, 0.0
  %v2173 = vmax.f32 %v2124, 0.0
  %v2174 = vmax.f32 %v2125, 0.0
  %v2175 = vmax.f32 %v2126, 0.0
  %v2176 = vmax.f32 %v2127, 0.0
  %v2177 = vmax.f32 %v2128, 0.0
  %v2178 = vmax.f32 %v2129, 0.0
  %v2179 = vmax.f32 %v2130, 0.0
  %v2180 = vmax.f32 %v2131, 0.0
  %v2181 = vmax.f32 %v2132, 0.0
  %v2182 = vmax.f32 %v2133, 0.0
  %v2183 = vmax.f32 %v2134, 0.0
  %v2184 = vmax.f32 %v2135, 0.0
  %v2185 = vmax.f32 %v2136, 0.0
  %v2186 = vmax.f32 %v2137, 0.0
  %v2187 = vmax.f32 %v2138, 0.0
  %v2188 = vmax.f32 %v2139, 0.0
  %v2189 = vmax.f32 %v2140, 0.0
  %v2190 = vmax.f32 %v2141, 0.0
  %v2191 = vmax.f32 %v2142, 0.0
  %v2192 = vmax.f32 %v2143, 0.0
  %v2193 = vmax.f32 %v2144, 0.0
  %v2194 = vmax.f32 %v2145, 0.0
  %v2195 = vmax.f32 %v2146, 0.0
  %v2196 = vmax.f32 %v2147, 0.0
  %v2197 = vmax.f32 %v2148, 0.0
  %v2198 = vmax.f32 %v2149, 0.0
  %v2199 = vmax.f32 %v2150, 0.0
  %v2200 = vmax.f32 %v2151, 0.0
  %v2201 = vmax.f32 %v2152, 0.0
  %v2202 = vmax.f32 %v2153, 0.0
  %v2203 = vmax.f32 %v2154, 0.0
  %v2204 = vmax.f32 %v2155, 0.0
  %v2205 = vmax.f32 %v2156, 0.0
  %v2206 = vmax.f32 %v2157, 0.0
  %v2207 = vpack.c.bf16 %v2159, %v2158
  %v2208 = vpack.c.bf16 %v2161, %v2160
  %v2209 = vpack.c.bf16 %v2163, %v2162
  %v2210 = vpack.c.bf16 %v2165, %v2164
  %v2211 = vpack.c.bf16 %v2167, %v2166
  %v2212 = vpack.c.bf16 %v2169, %v2168
  %v2213 = vpack.c.bf16 %v2171, %v2170
  %v2214 = vpack.c.bf16 %v2173, %v2172
  %v2215 = vpack.c.bf16 %v2175, %v2174
  %v2216 = vpack.c.bf16 %v2177, %v2176
  %v2217 = vpack.c.bf16 %v2179, %v2178
  %v2218 = vpack.c.bf16 %v2181, %v2180
  %v2219 = vpack.c.bf16 %v2183, %v2182
  %v2220 = vpack.c.bf16 %v2185, %v2184
  %v2221 = vpack.c.bf16 %v2187, %v2186
  %v2222 = vpack.c.bf16 %v2189, %v2188
  %v2223 = vpack.c.bf16 %v2191, %v2190
  %v2224 = vpack.c.bf16 %v2193, %v2192
  %v2225 = vpack.c.bf16 %v2195, %v2194
  %v2226 = vpack.c.bf16 %v2197, %v2196
  %v2227 = vpack.c.bf16 %v2199, %v2198
  %v2228 = vpack.c.bf16 %v2201, %v2200
  %v2229 = vpack.c.bf16 %v2203, %v2202
  %v2230 = vpack.c.bf16 %v2205, %v2204
  %v2231 = vpack.c.bf16 %v2206, %v2206
  %v2257 = vunpack.c.l.b16 %v2207
  %v2258 = vunpack.c.h.b16 %v2207
  %v2259 = vunpack.c.l.b16 %v2208
  %v2260 = vunpack.c.h.b16 %v2208
  %v2261 = vunpack.c.l.b16 %v2209
  %v2262 = vunpack.c.h.b16 %v2209
  %v2263 = vunpack.c.l.b16 %v2210
  %v2264 = vunpack.c.h.b16 %v2210
  %v2265 = vunpack.c.l.b16 %v2211
  %v2266 = vunpack.c.h.b16 %v2211
  %v2267 = vunpack.c.l.b16 %v2212
  %v2268 = vunpack.c.h.b16 %v2212
  %v2269 = vunpack.c.l.b16 %v2213
  %v2270 = vunpack.c.h.b16 %v2213
  %v2271 = vunpack.c.l.b16 %v2214
  %v2272 = vunpack.c.h.b16 %v2214
  %v2273 = vunpack.c.l.b16 %v2215
  %v2274 = vunpack.c.h.b16 %v2215
  %v2275 = vunpack.c.l.b16 %v2216
  %v2276 = vunpack.c.h.b16 %v2216
  %v2277 = vunpack.c.l.b16 %v2217
  %v2278 = vunpack.c.h.b16 %v2217
  %v2279 = vunpack.c.l.b16 %v2218
  %v2280 = vunpack.c.h.b16 %v2218
  %v2281 = vunpack.c.l.b16 %v2219
  %v2282 = vunpack.c.h.b16 %v2219
  %v2283 = vunpack.c.l.b16 %v2220
  %v2284 = vunpack.c.h.b16 %v2220
  %v2285 = vunpack.c.l.b16 %v2221
  %v2286 = vunpack.c.h.b16 %v2221
  %v2287 = vunpack.c.l.b16 %v2222
  %v2288 = vunpack.c.h.b16 %v2222
  %v2289 = vunpack.c.l.b16 %v2223
  %v2290 = vunpack.c.h.b16 %v2223
  %v2291 = vunpack.c.l.b16 %v2224
  %v2292 = vunpack.c.h.b16 %v2224
  %v2293 = vunpack.c.l.b16 %v2225
  %v2294 = vunpack.c.h.b16 %v2225
  %v2295 = vunpack.c.l.b16 %v2226
  %v2296 = vunpack.c.h.b16 %v2226
  %v2297 = vunpack.c.l.b16 %v2227
  %v2298 = vunpack.c.h.b16 %v2227
  %v2299 = vunpack.c.l.b16 %v2228
  %v2300 = vunpack.c.h.b16 %v2228
  %v2301 = vunpack.c.l.b16 %v2229
  %v2302 = vunpack.c.h.b16 %v2229
  %v2303 = vunpack.c.l.b16 %v2230
  %v2304 = vunpack.c.h.b16 %v2230
  %v2305 = vunpack.c.l.b16 %v2231
  %v2306 = vpack.c.b16 %v2257, %v2257
  %v2307 = vpack.c.b16 %v2258, %v2258
  %v2308 = vpack.c.b16 %v2259, %v2259
  %v2309 = vpack.c.b16 %v2260, %v2260
  %v2310 = vpack.c.b16 %v2261, %v2261
  %v2311 = vpack.c.b16 %v2262, %v2262
  %v2312 = vpack.c.b16 %v2263, %v2263
  %v2313 = vpack.c.b16 %v2264, %v2264
  %v2314 = vpack.c.b16 %v2265, %v2265
  %v2315 = vpack.c.b16 %v2266, %v2266
  %v2316 = vpack.c.b16 %v2267, %v2267
  %v2317 = vpack.c.b16 %v2268, %v2268
  %v2318 = vpack.c.b16 %v2269, %v2269
  %v2319 = vpack.c.b16 %v2270, %v2270
  %v2320 = vpack.c.b16 %v2271, %v2271
  %v2321 = vpack.c.b16 %v2272, %v2272
  %v2322 = vpack.c.b16 %v2273, %v2273
  %v2323 = vpack.c.b16 %v2274, %v2274
  %v2324 = vpack.c.b16 %v2275, %v2275
  %v2325 = vpack.c.b16 %v2276, %v2276
  %v2326 = vpack.c.b16 %v2277, %v2277
  %v2327 = vpack.c.b16 %v2278, %v2278
  %v2328 = vpack.c.b16 %v2279, %v2279
  %v2329 = vpack.c.b16 %v2280, %v2280
  %v2330 = vpack.c.b16 %v2281, %v2281
  %v2331 = vpack.c.b16 %v2282, %v2282
  %v2332 = vpack.c.b16 %v2283, %v2283
  %v2333 = vpack.c.b16 %v2284, %v2284
  %v2334 = vpack.c.b16 %v2285, %v2285
  %v2335 = vpack.c.b16 %v2286, %v2286
  %v2336 = vpack.c.b16 %v2287, %v2287
  %v2337 = vpack.c.b16 %v2288, %v2288
  %v2338 = vpack.c.b16 %v2289, %v2289
  %v2339 = vpack.c.b16 %v2290, %v2290
  %v2340 = vpack.c.b16 %v2291, %v2291
  %v2341 = vpack.c.b16 %v2292, %v2292
  %v2342 = vpack.c.b16 %v2293, %v2293
  %v2343 = vpack.c.b16 %v2294, %v2294
  %v2344 = vpack.c.b16 %v2295, %v2295
  %v2345 = vpack.c.b16 %v2296, %v2296
  %v2346 = vpack.c.b16 %v2297, %v2297
  %v2347 = vpack.c.b16 %v2298, %v2298
  %v2348 = vpack.c.b16 %v2299, %v2299
  %v2349 = vpack.c.b16 %v2300, %v2300
  %v2350 = vpack.c.b16 %v2301, %v2301
  %v2351 = vpack.c.b16 %v2302, %v2302
  %v2352 = vpack.c.b16 %v2303, %v2303
  %v2353 = vpack.c.b16 %v2304, %v2304
  %v2354 = vpack.c.b16 %v2305, %v2305
  %vm2404 = vcmask 125952
  %2405 = vst.msk [vmem:[%s6] sm:$0xf] %vm2404, %v2306
  %2406 = vst.msk [vmem:[%s6 + $0x4] sm:$0xf] %vm2404, %v2307
  %2407 = vst.msk [vmem:[%s6 + $0x8] sm:$0xf] %vm2404, %v2308
  %2408 = vst.msk [vmem:[%s6 + $0xc] sm:$0xf] %vm2404, %v2309
  %2409 = vst.msk [vmem:[%s6 + $0x10] sm:$0xf] %vm2404, %v2310
  %2410 = vst.msk [vmem:[%s6 + $0x14] sm:$0xf] %vm2404, %v2311
  %2411 = vst.msk [vmem:[%s6 + $0x18] sm:$0xf] %vm2404, %v2312
  %2412 = vst.msk [vmem:[%s6 + $0x1c] sm:$0xf] %vm2404, %v2313
  %2413 = vst.msk [vmem:[%s6 + $0x20] sm:$0xf] %vm2404, %v2314
  %2414 = vst.msk [vmem:[%s6 + $0x24] sm:$0xf] %vm2404, %v2315
  %2415 = vst.msk [vmem:[%s6 + $0x28] sm:$0xf] %vm2404, %v2316
  %2416 = vst.msk [vmem:[%s6 + $0x2c] sm:$0xf] %vm2404, %v2317
  %2417 = vst.msk [vmem:[%s6 + $0x30] sm:$0xf] %vm2404, %v2318
  %2418 = vst.msk [vmem:[%s6 + $0x34] sm:$0xf] %vm2404, %v2319
  %2419 = vst.msk [vmem:[%s6 + $0x38] sm:$0xf] %vm2404, %v2320
  %2420 = vst.msk [vmem:[%s6 + $0x3c] sm:$0xf] %vm2404, %v2321
  %2421 = vst.msk [vmem:[%s6 + $0x40] sm:$0xf] %vm2404, %v2322
  %2422 = vst.msk [vmem:[%s6 + $0x44] sm:$0xf] %vm2404, %v2323
  %2423 = vst.msk [vmem:[%s6 + $0x48] sm:$0xf] %vm2404, %v2324
  %2424 = vst.msk [vmem:[%s6 + $0x4c] sm:$0xf] %vm2404, %v2325
  %2425 = vst.msk [vmem:[%s6 + $0x50] sm:$0xf] %vm2404, %v2326
  %2426 = vst.msk [vmem:[%s6 + $0x54] sm:$0xf] %vm2404, %v2327
  %2427 = vst.msk [vmem:[%s6 + $0x58] sm:$0xf] %vm2404, %v2328
  %2428 = vst.msk [vmem:[%s6 + $0x5c] sm:$0xf] %vm2404, %v2329
  %2429 = vst.msk [vmem:[%s6 + $0x60] sm:$0xf] %vm2404, %v2330
  %2430 = vst.msk [vmem:[%s6 + $0x64] sm:$0xf] %vm2404, %v2331
  %2431 = vst.msk [vmem:[%s6 + $0x68] sm:$0xf] %vm2404, %v2332
  %2432 = vst.msk [vmem:[%s6 + $0x6c] sm:$0xf] %vm2404, %v2333
  %2433 = vst.msk [vmem:[%s6 + $0x70] sm:$0xf] %vm2404, %v2334
  %2434 = vst.msk [vmem:[%s6 + $0x74] sm:$0xf] %vm2404, %v2335
  %2435 = vst.msk [vmem:[%s6 + $0x78] sm:$0xf] %vm2404, %v2336
  %2436 = vst.msk [vmem:[%s6 + $0x7c] sm:$0xf] %vm2404, %v2337
  %2437 = vst.msk [vmem:[%s6 + $0x80] sm:$0xf] %vm2404, %v2338
  %2438 = vst.msk [vmem:[%s6 + $0x84] sm:$0xf] %vm2404, %v2339
  %2439 = vst.msk [vmem:[%s6 + $0x88] sm:$0xf] %vm2404, %v2340
  %2440 = vst.msk [vmem:[%s6 + $0x8c] sm:$0xf] %vm2404, %v2341
  %2441 = vst.msk [vmem:[%s6 + $0x90] sm:$0xf] %vm2404, %v2342
  %2442 = vst.msk [vmem:[%s6 + $0x94] sm:$0xf] %vm2404, %v2343
  %2443 = vst.msk [vmem:[%s6 + $0x98] sm:$0xf] %vm2404, %v2344
  %2444 = vst.msk [vmem:[%s6 + $0x9c] sm:$0xf] %vm2404, %v2345
  %2445 = vst.msk [vmem:[%s6 + $0xa0] sm:$0xf] %vm2404, %v2346
  %2446 = vst.msk [vmem:[%s6 + $0xa4] sm:$0xf] %vm2404, %v2347
  %2447 = vst.msk [vmem:[%s6 + $0xa8] sm:$0xf] %vm2404, %v2348
  %2448 = vst.msk [vmem:[%s6 + $0xac] sm:$0xf] %vm2404, %v2349
  %2449 = vst.msk [vmem:[%s6 + $0xb0] sm:$0xf] %vm2404, %v2350
  %2450 = vst.msk [vmem:[%s6 + $0xb4] sm:$0xf] %vm2404, %v2351
  %2451 = vst.msk [vmem:[%s6 + $0xb8] sm:$0xf] %vm2404, %v2352
  %2452 = vst.msk [vmem:[%s6 + $0xbc] sm:$0xf] %vm2404, %v2353
  %2453 = vst.msk [vmem:[%s6 + $0xc0] sm:$0xf] %vm2404, %v2354
  // Predicated region
  $region26: #{cnn_mnist_forward.3} parent=0 // pred_check
    _
  $region27: #{cnn_mnist_forward.3} parent=0 // pred_check_branch
    %2455 = sbr.rel (0) target = $region29
  $region28: #{cnn_mnist_forward.3} parent=0 // pred_region
    _
  $region29: #{cnn_mnist_forward.3} parent=0 // pred_fallthru
    _
  // Predicated region
  $region30: #{cnn_mnist_forward.3} parent=0 // pred_check
    _
  $region31: #{cnn_mnist_forward.3} parent=0 // pred_check_branch
    %2457 = sbr.rel (0) target = $region33
  $region32: #{cnn_mnist_forward.3} parent=0 // pred_region
    _
  $region33: #{cnn_mnist_forward.3} parent=0 // pred_fallthru
    _

// kernel: cnn_mnist_forward.4
$region0: #{cnn_mnist_forward.4}
  #allocation0 [shape = 'u32[]', space=smem, size = 0x4, offset = 0x4, fixed_abs, tag = 'smem constant byte address 0x4 - core index']
  #allocation1 [shape = 'u32[144,128]{1,0:T(1,128)}', space=vmem, size = 0x12000, scoped, tag = 'internal scratch']
  %s0 = inlined_call_operand.vmem [shape: bf16[104,144], index: 0, kind: input, shape index: {}]
  %s1 = inlined_call_operand.vmem [shape: bf16[104,144], index: 1, kind: input, shape index: {}]
  %s2 = inlined_call_operand.vmem [shape: bf16[104,144], index: 2, kind: input, shape index: {}]
  %s3 = inlined_call_operand.vmem [shape: bf16[104,144], index: 3, kind: input, shape index: {}]
  %s4 = inlined_call_operand.vmem [shape: bf16[144,32], index: 4, kind: input, shape index: {}]
  %s5 = inlined_call_operand.vmem [shape: f32[1,32], index: 5, kind: input, shape index: {}]
  %s6 = inlined_call_operand.vmem [shape: bf16[104,32], index: 6, kind: output, shape index: {}]
  %s7 = sld [smem:[#allocation0]]
  $region34: #{cnn_mnist_forward.4} parent=0
    _
  %s9 = ssub.s32 1, %s7
  %s10 = scalar_select 0, %s9, %s7
  // Predicated region
  $region2: #{cnn_mnist_forward.4} parent=0 // pred_check
    _
  $region3: #{cnn_mnist_forward.4} parent=0 // pred_check_branch
    %12 = sbr.rel (0) target = $region5
  $region4: #{cnn_mnist_forward.4} parent=0 // pred_region
    _
  $region5: #{cnn_mnist_forward.4} parent=0 // pred_fallthru
    _
  // Predicated region
  $region6: #{cnn_mnist_forward.4} parent=0 // pred_check
    _
  $region7: #{cnn_mnist_forward.4} parent=0 // pred_check_branch
    %14 = sbr.rel (0) target = $region9
  $region8: #{cnn_mnist_forward.4} parent=0 // pred_region
    _
  $region9: #{cnn_mnist_forward.4} parent=0 // pred_fallthru
    _
  // Predicated region
  $region10: #{cnn_mnist_forward.4} parent=0 // pred_check
    _
  $region11: #{cnn_mnist_forward.4} parent=0 // pred_check_branch
    %16 = sbr.rel (0) target = $region13
  $region12: #{cnn_mnist_forward.4} parent=0 // pred_region
    _
  $region13: #{cnn_mnist_forward.4} parent=0 // pred_fallthru
    _
  // Predicated region
  $region14: #{cnn_mnist_forward.4} parent=0 // pred_check
    _
  $region15: #{cnn_mnist_forward.4} parent=0 // pred_check_branch
    %18 = sbr.rel (0) target = $region17
  $region16: #{cnn_mnist_forward.4} parent=0 // pred_region
    _
  $region17: #{cnn_mnist_forward.4} parent=0 // pred_fallthru
    _
  // Predicated region
  $region18: #{cnn_mnist_forward.4} parent=0 // pred_check
    _
  $region19: #{cnn_mnist_forward.4} parent=0 // pred_check_branch
    %20 = sbr.rel (0) target = $region21
  $region20: #{cnn_mnist_forward.4} parent=0 // pred_region
    _
  $region21: #{cnn_mnist_forward.4} parent=0 // pred_fallthru
    _
  // Predicated region
  $region22: #{cnn_mnist_forward.4} parent=0 // pred_check
    _
  $region23: #{cnn_mnist_forward.4} parent=0 // pred_check_branch
    %22 = sbr.rel (0) target = $region25
  $region24: #{cnn_mnist_forward.4} parent=0 // pred_region
    _
  $region25: #{cnn_mnist_forward.4} parent=0 // pred_fallthru
    _
  %v24 = vld [vmem:[%s4] sm:$0xf]
  %v25 = vld [vmem:[%s4 + $0x4] sm:$0xf]
  %v26 = vld [vmem:[%s4 + $0x8] sm:$0xf]
  %v27 = vld [vmem:[%s4 + $0xc] sm:$0xf]
  %v28 = vld [vmem:[%s4 + $0x10] sm:$0xf]
  %v29 = vld [vmem:[%s4 + $0x14] sm:$0xf]
  %v30 = vld [vmem:[%s4 + $0x18] sm:$0xf]
  %v31 = vld [vmem:[%s4 + $0x1c] sm:$0xf]
  %v32 = vld [vmem:[%s4 + $0x20] sm:$0xf]
  %v33 = vld [vmem:[%s4 + $0x24] sm:$0xf]
  %v34 = vld [vmem:[%s4 + $0x28] sm:$0xf]
  %v35 = vld [vmem:[%s4 + $0x2c] sm:$0xf]
  %v36 = vld [vmem:[%s4 + $0x30] sm:$0xf]
  %v37 = vld [vmem:[%s4 + $0x34] sm:$0xf]
  %v38 = vld [vmem:[%s4 + $0x38] sm:$0xf]
  %v39 = vld [vmem:[%s4 + $0x3c] sm:$0xf]
  %v40 = vld [vmem:[%s4 + $0x40] sm:$0xf]
  %v41 = vld [vmem:[%s4 + $0x44] sm:$0xf]
  %v42 = vld [vmem:[%s0] sm:$0xff]
  %v43 = vld [vmem:[%s0 + $0x8] sm:$0xff]
  %v44 = vld [vmem:[%s0 + $0x10] sm:$0xff]
  %v45 = vld [vmem:[%s0 + $0x18] sm:$0xff]
  %v46 = vld [vmem:[%s0 + $0x20] sm:$0xff]
  %v47 = vld [vmem:[%s0 + $0x28] sm:$0xff]
  %v48 = vld [vmem:[%s0 + $0x30] sm:$0xff]
  %v49 = vld [vmem:[%s0 + $0x38] sm:$0xff]
  %v50 = vld [vmem:[%s0 + $0x40] sm:$0xff]
  %v51 = vld [vmem:[%s0 + $0x48] sm:$0xff]
  %v52 = vld [vmem:[%s0 + $0x50] sm:$0xff]
  %v53 = vld [vmem:[%s0 + $0x58] sm:$0xff]
  %v54 = vld [vmem:[%s0 + $0x60] sm:$0xff]
  %v68 = vunpack.c.l.b16 %v42
  %v69 = vunpack.c.h.b16 %v42
  %v70 = vunpack.c.l.b16 %v43
  %v71 = vunpack.c.h.b16 %v43
  %v72 = vunpack.c.l.b16 %v44
  %v73 = vunpack.c.h.b16 %v44
  %v74 = vunpack.c.l.b16 %v45
  %v75 = vunpack.c.h.b16 %v45
  %v76 = vunpack.c.l.b16 %v46
  %v77 = vunpack.c.h.b16 %v46
  %v78 = vunpack.c.l.b16 %v47
  %v79 = vunpack.c.h.b16 %v47
  %v80 = vunpack.c.l.b16 %v48
  %v81 = vunpack.c.h.b16 %v48
  %v82 = vunpack.c.l.b16 %v49
  %v83 = vunpack.c.h.b16 %v49
  %v84 = vunpack.c.l.b16 %v50
  %v85 = vunpack.c.h.b16 %v50
  %v86 = vunpack.c.l.b16 %v51
  %v87 = vunpack.c.h.b16 %v51
  %v88 = vunpack.c.l.b16 %v52
  %v89 = vunpack.c.h.b16 %v52
  %v90 = vunpack.c.l.b16 %v53
  %v91 = vunpack.c.h.b16 %v53
  %v92 = vunpack.c.l.b16 %v54
  %v93 = vunpack.c.h.b16 %v54
  %v94 = vpack.c.b16 %v70, %v68
  %v95 = vpack.c.b16 %v71, %v69
  %v96 = vpack.c.b16 %v74, %v72
  %v97 = vpack.c.b16 %v75, %v73
  %v98 = vpack.c.b16 %v78, %v76
  %v99 = vpack.c.b16 %v79, %v77
  %v100 = vpack.c.b16 %v82, %v80
  %v101 = vpack.c.b16 %v83, %v81
  %v102 = vpack.c.b16 %v86, %v84
  %v103 = vpack.c.b16 %v87, %v85
  %v104 = vpack.c.b16 %v90, %v88
  %v105 = vpack.c.b16 %v91, %v89
  %v106 = vpack.c.b16 %v92, %v92
  %v107 = vpack.c.b16 %v93, %v93
  %v133 = vunpack.c.l.b16 %v24
  %v134 = vunpack.c.l.b16 %v25
  %v135 = vunpack.c.l.b16 %v26
  %v136 = vunpack.c.l.b16 %v27
  %v137 = vunpack.c.l.b16 %v28
  %v138 = vunpack.c.l.b16 %v29
  %v139 = vunpack.c.l.b16 %v30
  %v140 = vunpack.c.l.b16 %v31
  %v141 = vunpack.c.l.b16 %v32
  %v142 = vunpack.c.l.b16 %v33
  %v143 = vunpack.c.l.b16 %v34
  %v144 = vunpack.c.l.b16 %v35
  %v145 = vunpack.c.l.b16 %v36
  %v146 = vunpack.c.l.b16 %v37
  %v147 = vunpack.c.l.b16 %v38
  %v148 = vunpack.c.l.b16 %v39
  %v149 = vunpack.c.l.b16 %v40
  %v150 = vunpack.c.l.b16 %v41
  %v151 = vpack.c.b16 %v134, %v133
  %v152 = vpack.c.b16 %v136, %v135
  %v153 = vpack.c.b16 %v138, %v137
  %v154 = vpack.c.b16 %v140, %v139
  %v155 = vpack.c.b16 %v142, %v141
  %v156 = vpack.c.b16 %v144, %v143
  %v157 = vpack.c.b16 %v146, %v145
  %v158 = vpack.c.b16 %v148, %v147
  %v159 = vpack.c.b16 %v150, %v149
  %vm169 = vcmask 130048
  %v171 = vsel %vm169, %v95, 0
  %v174 = vsel %vm169, %v97, 0
  %v177 = vsel %vm169, %v99, 0
  %v180 = vsel %vm169, %v101, 0
  %v183 = vsel %vm169, %v103, 0
  %v186 = vsel %vm169, %v105, 0
  %v189 = vsel %vm169, %v107, 0
  %191 = vmatprep.subr.bf16.mxu0 0
  %192 = vmatpush1.bf16.msra.mxu0 %v158
  %193 = vmatprep.subr.bf16.mxu0 0
  %194 = vmatpush1.bf16.msra.mxu0 %v157
  %195 = vmatprep.subr.bf16.mxu0 0
  %196 = vmatpush1.bf16.msra.mxu0 %v156
  %197 = vmatprep.subr.bf16.mxu0 0
  %198 = vmatpush1.bf16.msra.mxu0 %v155
  %199 = vmatprep.subr.bf16.mxu0 0
  %200 = vmatpush1.bf16.msra.mxu0 %v154
  %201 = vmatprep.subr.bf16.mxu0 0
  %202 = vmatpush1.bf16.msra.mxu0 %v153
  %203 = vmatprep.subr.bf16.mxu0 0
  %204 = vmatpush1.bf16.msra.mxu0 %v152
  %205 = vmatprep.subr.bf16.mxu0 0
  %206 = vmatpush1.bf16.msra.mxu0 %v151
  %207 = vmatprep.subr.bf16.mxu0 0
  %208 = vmatpush2.bf16.msra.mxu0 0
  %209 = vmatprep.subr.bf16.mxu0 0
  %210 = vmatpush2.bf16.msra.mxu0 0
  %211 = vmatprep.subr.bf16.mxu0 0
  %212 = vmatpush2.bf16.msra.mxu0 0
  %213 = vmatprep.subr.bf16.mxu0 0
  %214 = vmatpush2.bf16.msra.mxu0 0
  %215 = vmatprep.subr.bf16.mxu0 0
  %216 = vmatpush2.bf16.msra.mxu0 0
  %217 = vmatprep.subr.bf16.mxu0 0
  %218 = vmatpush2.bf16.msra.mxu0 0
  %219 = vmatprep.subr.bf16.mxu0 0
  %220 = vmatpush2.bf16.msra.mxu0 0
  %221 = vmatprep.subr.bf16.mxu0 0
  %222 = vmatpush2.bf16.msra.mxu0 %v159
  %223 = vmatprep.mubr.bf16.mxu0 %v171
  %224 = vmatmul.mubr.bf16.gmra.mxu0 %v94
  %v225 = vpop.f32.mrf.mxu0
  %v226 = vadd.f32 0.0, %v225
  %v227 = vpop.f32.mrf.mxu0
  %v228 = vpop.f32.mrf.mxu0
  %v229 = vadd.f32 0.0, %v228
  %v230 = vpop.f32.mrf.mxu0
  %231 = vmatprep.mubr.bf16.mxu0 %v174
  %232 = vmatmul.mubr.bf16.gmra.mxu0 %v96
  %v233 = vpop.f32.mrf.mxu0
  %v234 = vadd.f32 0.0, %v233
  %v235 = vpop.f32.mrf.mxu0
  %v236 = vpop.f32.mrf.mxu0
  %v237 = vadd.f32 0.0, %v236
  %v238 = vpop.f32.mrf.mxu0
  %239 = vmatprep.mubr.bf16.mxu0 %v177
  %240 = vmatmul.mubr.bf16.gmra.mxu0 %v98
  %v241 = vpop.f32.mrf.mxu0
  %v242 = vadd.f32 0.0, %v241
  %v243 = vpop.f32.mrf.mxu0
  %v244 = vpop.f32.mrf.mxu0
  %v245 = vadd.f32 0.0, %v244
  %v246 = vpop.f32.mrf.mxu0
  %247 = vmatprep.mubr.bf16.mxu0 %v180
  %248 = vmatmul.mubr.bf16.gmra.mxu0 %v100
  %v249 = vpop.f32.mrf.mxu0
  %v250 = vadd.f32 0.0, %v249
  %v251 = vpop.f32.mrf.mxu0
  %v252 = vpop.f32.mrf.mxu0
  %v253 = vadd.f32 0.0, %v252
  %v254 = vpop.f32.mrf.mxu0
  %255 = vmatprep.mubr.bf16.mxu0 %v183
  %256 = vmatmul.mubr.bf16.gmra.mxu0 %v102
  %v257 = vpop.f32.mrf.mxu0
  %v258 = vadd.f32 0.0, %v257
  %v259 = vpop.f32.mrf.mxu0
  %v260 = vpop.f32.mrf.mxu0
  %v261 = vadd.f32 0.0, %v260
  %v262 = vpop.f32.mrf.mxu0
  %263 = vmatprep.mubr.bf16.mxu0 %v186
  %264 = vmatmul.mubr.bf16.gmra.mxu0 %v104
  %v265 = vpop.f32.mrf.mxu0
  %v266 = vadd.f32 0.0, %v265
  %v267 = vpop.f32.mrf.mxu0
  %v268 = vpop.f32.mrf.mxu0
  %v269 = vadd.f32 0.0, %v268
  %v270 = vpop.f32.mrf.mxu0
  %271 = vmatprep.mubr.bf16.mxu0 %v189
  %272 = vmatmul.mubr.bf16.gmra.mxu0 %v106
  %v273 = vpop.f32.mrf.mxu0
  %v274 = vadd.f32 0.0, %v273
  %v275 = vpop.f32.mrf.mxu0
  %v276 = vpop.f32.mrf.mxu0
  %v277 = vpop.f32.mrf.mxu0
  %278 = vdwg.mxu0
  %v279 = vld [vmem:[%s1] sm:$0xff]
  %v280 = vld [vmem:[%s1 + $0x8] sm:$0xff]
  %v281 = vld [vmem:[%s1 + $0x10] sm:$0xff]
  %v282 = vld [vmem:[%s1 + $0x18] sm:$0xff]
  %v283 = vld [vmem:[%s1 + $0x20] sm:$0xff]
  %v284 = vld [vmem:[%s1 + $0x28] sm:$0xff]
  %v285 = vld [vmem:[%s1 + $0x30] sm:$0xff]
  %v286 = vld [vmem:[%s1 + $0x38] sm:$0xff]
  %v287 = vld [vmem:[%s1 + $0x40] sm:$0xff]
  %v288 = vld [vmem:[%s1 + $0x48] sm:$0xff]
  %v289 = vld [vmem:[%s1 + $0x50] sm:$0xff]
  %v290 = vld [vmem:[%s1 + $0x58] sm:$0xff]
  %v291 = vld [vmem:[%s1 + $0x60] sm:$0xff]
  %v305 = vunpack.c.l.b16 %v279
  %v306 = vunpack.c.h.b16 %v279
  %v307 = vunpack.c.l.b16 %v280
  %v308 = vunpack.c.h.b16 %v280
  %v309 = vunpack.c.l.b16 %v281
  %v310 = vunpack.c.h.b16 %v281
  %v311 = vunpack.c.l.b16 %v282
  %v312 = vunpack.c.h.b16 %v282
  %v313 = vunpack.c.l.b16 %v283
  %v314 = vunpack.c.h.b16 %v283
  %v315 = vunpack.c.l.b16 %v284
  %v316 = vunpack.c.h.b16 %v284
  %v317 = vunpack.c.l.b16 %v285
  %v318 = vunpack.c.h.b16 %v285
  %v319 = vunpack.c.l.b16 %v286
  %v320 = vunpack.c.h.b16 %v286
  %v321 = vunpack.c.l.b16 %v287
  %v322 = vunpack.c.h.b16 %v287
  %v323 = vunpack.c.l.b16 %v288
  %v324 = vunpack.c.h.b16 %v288
  %v325 = vunpack.c.l.b16 %v289
  %v326 = vunpack.c.h.b16 %v289
  %v327 = vunpack.c.l.b16 %v290
  %v328 = vunpack.c.h.b16 %v290
  %v329 = vunpack.c.l.b16 %v291
  %v330 = vunpack.c.h.b16 %v291
  %v331 = vpack.c.b16 %v307, %v305
  %v332 = vpack.c.b16 %v308, %v306
  %v333 = vpack.c.b16 %v311, %v309
  %v334 = vpack.c.b16 %v312, %v310
  %v335 = vpack.c.b16 %v315, %v313
  %v336 = vpack.c.b16 %v316, %v314
  %v337 = vpack.c.b16 %v319, %v317
  %v338 = vpack.c.b16 %v320, %v318
  %v339 = vpack.c.b16 %v323, %v321
  %v340 = vpack.c.b16 %v324, %v322
  %v341 = vpack.c.b16 %v327, %v325
  %v342 = vpack.c.b16 %v328, %v326
  %v343 = vpack.c.b16 %v329, %v329
  %v344 = vpack.c.b16 %v330, %v330
  %v353 = vsel %vm169, %v332, 0
  %v356 = vsel %vm169, %v334, 0
  %v359 = vsel %vm169, %v336, 0
  %v362 = vsel %vm169, %v338, 0
  %v365 = vsel %vm169, %v340, 0
  %v368 = vsel %vm169, %v342, 0
  %v371 = vsel %vm169, %v344, 0
  %373 = vmatprep.subr.bf16.mxu0 0
  %374 = vmatpush1.bf16.msra.mxu0 %v158
  %375 = vmatprep.subr.bf16.mxu0 0
  %376 = vmatpush1.bf16.msra.mxu0 %v157
  %377 = vmatprep.subr.bf16.mxu0 0
  %378 = vmatpush1.bf16.msra.mxu0 %v156
  %379 = vmatprep.subr.bf16.mxu0 0
  %380 = vmatpush1.bf16.msra.mxu0 %v155
  %381 = vmatprep.subr.bf16.mxu0 0
  %382 = vmatpush1.bf16.msra.mxu0 %v154
  %383 = vmatprep.subr.bf16.mxu0 0
  %384 = vmatpush1.bf16.msra.mxu0 %v153
  %385 = vmatprep.subr.bf16.mxu0 0
  %386 = vmatpush1.bf16.msra.mxu0 %v152
  %387 = vmatprep.subr.bf16.mxu0 0
  %388 = vmatpush1.bf16.msra.mxu0 %v151
  %389 = vmatprep.subr.bf16.mxu0 0
  %390 = vmatpush2.bf16.msra.mxu0 0
  %391 = vmatprep.subr.bf16.mxu0 0
  %392 = vmatpush2.bf16.msra.mxu0 0
  %393 = vmatprep.subr.bf16.mxu0 0
  %394 = vmatpush2.bf16.msra.mxu0 0
  %395 = vmatprep.subr.bf16.mxu0 0
  %396 = vmatpush2.bf16.msra.mxu0 0
  %397 = vmatprep.subr.bf16.mxu0 0
  %398 = vmatpush2.bf16.msra.mxu0 0
  %399 = vmatprep.subr.bf16.mxu0 0
  %400 = vmatpush2.bf16.msra.mxu0 0
  %401 = vmatprep.subr.bf16.mxu0 0
  %402 = vmatpush2.bf16.msra.mxu0 0
  %403 = vmatprep.subr.bf16.mxu0 0
  %404 = vmatpush2.bf16.msra.mxu0 %v159
  %405 = vmatprep.mubr.bf16.mxu0 %v353
  %406 = vmatmul.mubr.bf16.gmra.mxu0 %v331
  %v407 = vpop.f32.mrf.mxu0
  %v408 = vadd.f32 0.0, %v407
  %v409 = vpop.f32.mrf.mxu0
  %v410 = vpop.f32.mrf.mxu0
  %v411 = vadd.f32 0.0, %v410
  %v412 = vpop.f32.mrf.mxu0
  %413 = vmatprep.mubr.bf16.mxu0 %v356
  %414 = vmatmul.mubr.bf16.gmra.mxu0 %v333
  %v415 = vpop.f32.mrf.mxu0
  %v416 = vadd.f32 0.0, %v415
  %v417 = vpop.f32.mrf.mxu0
  %v418 = vpop.f32.mrf.mxu0
  %v419 = vadd.f32 0.0, %v418
  %v420 = vpop.f32.mrf.mxu0
  %421 = vmatprep.mubr.bf16.mxu0 %v359
  %422 = vmatmul.mubr.bf16.gmra.mxu0 %v335
  %v423 = vpop.f32.mrf.mxu0
  %v424 = vadd.f32 0.0, %v423
  %v425 = vpop.f32.mrf.mxu0
  %v426 = vpop.f32.mrf.mxu0
  %v427 = vadd.f32 0.0, %v426
  %v428 = vpop.f32.mrf.mxu0
  %429 = vmatprep.mubr.bf16.mxu0 %v362
  %430 = vmatmul.mubr.bf16.gmra.mxu0 %v337
  %v431 = vpop.f32.mrf.mxu0
  %v432 = vadd.f32 0.0, %v431
  %v433 = vpop.f32.mrf.mxu0
  %v434 = vpop.f32.mrf.mxu0
  %v435 = vadd.f32 0.0, %v434
  %v436 = vpop.f32.mrf.mxu0
  %437 = vmatprep.mubr.bf16.mxu0 %v365
  %438 = vmatmul.mubr.bf16.gmra.mxu0 %v339
  %v439 = vpop.f32.mrf.mxu0
  %v440 = vadd.f32 0.0, %v439
  %v441 = vpop.f32.mrf.mxu0
  %v442 = vpop.f32.mrf.mxu0
  %v443 = vadd.f32 0.0, %v442
  %v444 = vpop.f32.mrf.mxu0
  %445 = vmatprep.mubr.bf16.mxu0 %v368
  %446 = vmatmul.mubr.bf16.gmra.mxu0 %v341
  %v447 = vpop.f32.mrf.mxu0
  %v448 = vadd.f32 0.0, %v447
  %v449 = vpop.f32.mrf.mxu0
  %v450 = vpop.f32.mrf.mxu0
  %v451 = vadd.f32 0.0, %v450
  %v452 = vpop.f32.mrf.mxu0
  %453 = vmatprep.mubr.bf16.mxu0 %v371
  %454 = vmatmul.mubr.bf16.gmra.mxu0 %v343
  %v455 = vpop.f32.mrf.mxu0
  %v456 = vadd.f32 0.0, %v455
  %v457 = vpop.f32.mrf.mxu0
  %v458 = vpop.f32.mrf.mxu0
  %v459 = vpop.f32.mrf.mxu0
  %460 = vdwg.mxu0
  %v461 = vmax.f32 %v226, %v408
  %v462 = vmax.f32 %v229, %v411
  %v463 = vmax.f32 %v234, %v416
  %v464 = vmax.f32 %v237, %v419
  %v465 = vmax.f32 %v242, %v424
  %v466 = vmax.f32 %v245, %v427
  %v467 = vmax.f32 %v250, %v432
  %v468 = vmax.f32 %v253, %v435
  %v469 = vmax.f32 %v258, %v440
  %v470 = vmax.f32 %v261, %v443
  %v471 = vmax.f32 %v266, %v448
  %v472 = vmax.f32 %v269, %v451
  %v473 = vmax.f32 %v274, %v456
  %v474 = vld [vmem:[%s2] sm:$0xff]
  %v475 = vld [vmem:[%s2 + $0x8] sm:$0xff]
  %v476 = vld [vmem:[%s2 + $0x10] sm:$0xff]
  %v477 = vld [vmem:[%s2 + $0x18] sm:$0xff]
  %v478 = vld [vmem:[%s2 + $0x20] sm:$0xff]
  %v479 = vld [vmem:[%s2 + $0x28] sm:$0xff]
  %v480 = vld [vmem:[%s2 + $0x30] sm:$0xff]
  %v481 = vld [vmem:[%s2 + $0x38] sm:$0xff]
  %v482 = vld [vmem:[%s2 + $0x40] sm:$0xff]
  %v483 = vld [vmem:[%s2 + $0x48] sm:$0xff]
  %v484 = vld [vmem:[%s2 + $0x50] sm:$0xff]
  %v485 = vld [vmem:[%s2 + $0x58] sm:$0xff]
  %v486 = vld [vmem:[%s2 + $0x60] sm:$0xff]
  %v500 = vunpack.c.l.b16 %v474
  %v501 = vunpack.c.h.b16 %v474
  %v502 = vunpack.c.l.b16 %v475
  %v503 = vunpack.c.h.b16 %v475
  %v504 = vunpack.c.l.b16 %v476
  %v505 = vunpack.c.h.b16 %v476
  %v506 = vunpack.c.l.b16 %v477
  %v507 = vunpack.c.h.b16 %v477
  %v508 = vunpack.c.l.b16 %v478
  %v509 = vunpack.c.h.b16 %v478
  %v510 = vunpack.c.l.b16 %v479
  %v511 = vunpack.c.h.b16 %v479
  %v512 = vunpack.c.l.b16 %v480
  %v513 = vunpack.c.h.b16 %v480
  %v514 = vunpack.c.l.b16 %v481
  %v515 = vunpack.c.h.b16 %v481
  %v516 = vunpack.c.l.b16 %v482
  %v517 = vunpack.c.h.b16 %v482
  %v518 = vunpack.c.l.b16 %v483
  %v519 = vunpack.c.h.b16 %v483
  %v520 = vunpack.c.l.b16 %v484
  %v521 = vunpack.c.h.b16 %v484
  %v522 = vunpack.c.l.b16 %v485
  %v523 = vunpack.c.h.b16 %v485
  %v524 = vunpack.c.l.b16 %v486
  %v525 = vunpack.c.h.b16 %v486
  %v526 = vpack.c.b16 %v502, %v500
  %v527 = vpack.c.b16 %v503, %v501
  %v528 = vpack.c.b16 %v506, %v504
  %v529 = vpack.c.b16 %v507, %v505
  %v530 = vpack.c.b16 %v510, %v508
  %v531 = vpack.c.b16 %v511, %v509
  %v532 = vpack.c.b16 %v514, %v512
  %v533 = vpack.c.b16 %v515, %v513
  %v534 = vpack.c.b16 %v518, %v516
  %v535 = vpack.c.b16 %v519, %v517
  %v536 = vpack.c.b16 %v522, %v520
  %v537 = vpack.c.b16 %v523, %v521
  %v538 = vpack.c.b16 %v524, %v524
  %v539 = vpack.c.b16 %v525, %v525
  %v548 = vsel %vm169, %v527, 0
  %v551 = vsel %vm169, %v529, 0
  %v554 = vsel %vm169, %v531, 0
  %v557 = vsel %vm169, %v533, 0
  %v560 = vsel %vm169, %v535, 0
  %v563 = vsel %vm169, %v537, 0
  %v566 = vsel %vm169, %v539, 0
  %568 = vmatprep.subr.bf16.mxu0 0
  %569 = vmatpush1.bf16.msra.mxu0 %v158
  %570 = vmatprep.subr.bf16.mxu0 0
  %571 = vmatpush1.bf16.msra.mxu0 %v157
  %572 = vmatprep.subr.bf16.mxu0 0
  %573 = vmatpush1.bf16.msra.mxu0 %v156
  %574 = vmatprep.subr.bf16.mxu0 0
  %575 = vmatpush1.bf16.msra.mxu0 %v155
  %576 = vmatprep.subr.bf16.mxu0 0
  %577 = vmatpush1.bf16.msra.mxu0 %v154
  %578 = vmatprep.subr.bf16.mxu0 0
  %579 = vmatpush1.bf16.msra.mxu0 %v153
  %580 = vmatprep.subr.bf16.mxu0 0
  %581 = vmatpush1.bf16.msra.mxu0 %v152
  %582 = vmatprep.subr.bf16.mxu0 0
  %583 = vmatpush1.bf16.msra.mxu0 %v151
  %584 = vmatprep.subr.bf16.mxu0 0
  %585 = vmatpush2.bf16.msra.mxu0 0
  %586 = vmatprep.subr.bf16.mxu0 0
  %587 = vmatpush2.bf16.msra.mxu0 0
  %588 = vmatprep.subr.bf16.mxu0 0
  %589 = vmatpush2.bf16.msra.mxu0 0
  %590 = vmatprep.subr.bf16.mxu0 0
  %591 = vmatpush2.bf16.msra.mxu0 0
  %592 = vmatprep.subr.bf16.mxu0 0
  %593 = vmatpush2.bf16.msra.mxu0 0
  %594 = vmatprep.subr.bf16.mxu0 0
  %595 = vmatpush2.bf16.msra.mxu0 0
  %596 = vmatprep.subr.bf16.mxu0 0
  %597 = vmatpush2.bf16.msra.mxu0 0
  %598 = vmatprep.subr.bf16.mxu0 0
  %599 = vmatpush2.bf16.msra.mxu0 %v159
  %600 = vmatprep.mubr.bf16.mxu0 %v548
  %601 = vmatmul.mubr.bf16.gmra.mxu0 %v526
  %v602 = vpop.f32.mrf.mxu0
  %v603 = vadd.f32 0.0, %v602
  %v604 = vpop.f32.mrf.mxu0
  %v605 = vpop.f32.mrf.mxu0
  %v606 = vadd.f32 0.0, %v605
  %v607 = vpop.f32.mrf.mxu0
  %608 = vmatprep.mubr.bf16.mxu0 %v551
  %609 = vmatmul.mubr.bf16.gmra.mxu0 %v528
  %v610 = vpop.f32.mrf.mxu0
  %v611 = vadd.f32 0.0, %v610
  %v612 = vpop.f32.mrf.mxu0
  %v613 = vpop.f32.mrf.mxu0
  %v614 = vadd.f32 0.0, %v613
  %v615 = vpop.f32.mrf.mxu0
  %616 = vmatprep.mubr.bf16.mxu0 %v554
  %617 = vmatmul.mubr.bf16.gmra.mxu0 %v530
  %v618 = vpop.f32.mrf.mxu0
  %v619 = vadd.f32 0.0, %v618
  %v620 = vpop.f32.mrf.mxu0
  %v621 = vpop.f32.mrf.mxu0
  %v622 = vadd.f32 0.0, %v621
  %v623 = vpop.f32.mrf.mxu0
  %624 = vmatprep.mubr.bf16.mxu0 %v557
  %625 = vmatmul.mubr.bf16.gmra.mxu0 %v532
  %v626 = vpop.f32.mrf.mxu0
  %v627 = vadd.f32 0.0, %v626
  %v628 = vpop.f32.mrf.mxu0
  %v629 = vpop.f32.mrf.mxu0
  %v630 = vadd.f32 0.0, %v629
  %v631 = vpop.f32.mrf.mxu0
  %632 = vmatprep.mubr.bf16.mxu0 %v560
  %633 = vmatmul.mubr.bf16.gmra.mxu0 %v534
  %v634 = vpop.f32.mrf.mxu0
  %v635 = vadd.f32 0.0, %v634
  %v636 = vpop.f32.mrf.mxu0
  %v637 = vpop.f32.mrf.mxu0
  %v638 = vadd.f32 0.0, %v637
  %v639 = vpop.f32.mrf.mxu0
  %640 = vmatprep.mubr.bf16.mxu0 %v563
  %641 = vmatmul.mubr.bf16.gmra.mxu0 %v536
  %v642 = vpop.f32.mrf.mxu0
  %v643 = vadd.f32 0.0, %v642
  %v644 = vpop.f32.mrf.mxu0
  %v645 = vpop.f32.mrf.mxu0
  %v646 = vadd.f32 0.0, %v645
  %v647 = vpop.f32.mrf.mxu0
  %648 = vmatprep.mubr.bf16.mxu0 %v566
  %649 = vmatmul.mubr.bf16.gmra.mxu0 %v538
  %v650 = vpop.f32.mrf.mxu0
  %v651 = vadd.f32 0.0, %v650
  %v652 = vpop.f32.mrf.mxu0
  %v653 = vpop.f32.mrf.mxu0
  %v654 = vpop.f32.mrf.mxu0
  %655 = vdwg.mxu0
  %v656 = vld [vmem:[%s3] sm:$0xff]
  %v657 = vld [vmem:[%s3 + $0x8] sm:$0xff]
  %v658 = vld [vmem:[%s3 + $0x10] sm:$0xff]
  %v659 = vld [vmem:[%s3 + $0x18] sm:$0xff]
  %v660 = vld [vmem:[%s3 + $0x20] sm:$0xff]
  %v661 = vld [vmem:[%s3 + $0x28] sm:$0xff]
  %v662 = vld [vmem:[%s3 + $0x30] sm:$0xff]
  %v663 = vld [vmem:[%s3 + $0x38] sm:$0xff]
  %v664 = vld [vmem:[%s3 + $0x40] sm:$0xff]
  %v665 = vld [vmem:[%s3 + $0x48] sm:$0xff]
  %v666 = vld [vmem:[%s3 + $0x50] sm:$0xff]
  %v667 = vld [vmem:[%s3 + $0x58] sm:$0xff]
  %v668 = vld [vmem:[%s3 + $0x60] sm:$0xff]
  %v682 = vunpack.c.l.b16 %v656
  %v683 = vunpack.c.h.b16 %v656
  %v684 = vunpack.c.l.b16 %v657
  %v685 = vunpack.c.h.b16 %v657
  %v686 = vunpack.c.l.b16 %v658
  %v687 = vunpack.c.h.b16 %v658
  %v688 = vunpack.c.l.b16 %v659
  %v689 = vunpack.c.h.b16 %v659
  %v690 = vunpack.c.l.b16 %v660
  %v691 = vunpack.c.h.b16 %v660
  %v692 = vunpack.c.l.b16 %v661
  %v693 = vunpack.c.h.b16 %v661
  %v694 = vunpack.c.l.b16 %v662
  %v695 = vunpack.c.h.b16 %v662
  %v696 = vunpack.c.l.b16 %v663
  %v697 = vunpack.c.h.b16 %v663
  %v698 = vunpack.c.l.b16 %v664
  %v699 = vunpack.c.h.b16 %v664
  %v700 = vunpack.c.l.b16 %v665
  %v701 = vunpack.c.h.b16 %v665
  %v702 = vunpack.c.l.b16 %v666
  %v703 = vunpack.c.h.b16 %v666
  %v704 = vunpack.c.l.b16 %v667
  %v705 = vunpack.c.h.b16 %v667
  %v706 = vunpack.c.l.b16 %v668
  %v707 = vunpack.c.h.b16 %v668
  %v708 = vpack.c.b16 %v684, %v682
  %v709 = vpack.c.b16 %v685, %v683
  %v710 = vpack.c.b16 %v688, %v686
  %v711 = vpack.c.b16 %v689, %v687
  %v712 = vpack.c.b16 %v692, %v690
  %v713 = vpack.c.b16 %v693, %v691
  %v714 = vpack.c.b16 %v696, %v694
  %v715 = vpack.c.b16 %v697, %v695
  %v716 = vpack.c.b16 %v700, %v698
  %v717 = vpack.c.b16 %v701, %v699
  %v718 = vpack.c.b16 %v704, %v702
  %v719 = vpack.c.b16 %v705, %v703
  %v720 = vpack.c.b16 %v706, %v706
  %v721 = vpack.c.b16 %v707, %v707
  %v730 = vsel %vm169, %v709, 0
  %v733 = vsel %vm169, %v711, 0
  %v736 = vsel %vm169, %v713, 0
  %v739 = vsel %vm169, %v715, 0
  %v742 = vsel %vm169, %v717, 0
  %v745 = vsel %vm169, %v719, 0
  %v748 = vsel %vm169, %v721, 0
  %750 = vmatprep.subr.bf16.mxu0 0
  %751 = vmatpush1.bf16.msra.mxu0 %v158
  %752 = vmatprep.subr.bf16.mxu0 0
  %753 = vmatpush1.bf16.msra.mxu0 %v157
  %754 = vmatprep.subr.bf16.mxu0 0
  %755 = vmatpush1.bf16.msra.mxu0 %v156
  %756 = vmatprep.subr.bf16.mxu0 0
  %757 = vmatpush1.bf16.msra.mxu0 %v155
  %758 = vmatprep.subr.bf16.mxu0 0
  %759 = vmatpush1.bf16.msra.mxu0 %v154
  %760 = vmatprep.subr.bf16.mxu0 0
  %761 = vmatpush1.bf16.msra.mxu0 %v153
  %762 = vmatprep.subr.bf16.mxu0 0
  %763 = vmatpush1.bf16.msra.mxu0 %v152
  %764 = vmatprep.subr.bf16.mxu0 0
  %765 = vmatpush1.bf16.msra.mxu0 %v151
  %766 = vmatprep.subr.bf16.mxu0 0
  %767 = vmatpush2.bf16.msra.mxu0 0
  %768 = vmatprep.subr.bf16.mxu0 0
  %769 = vmatpush2.bf16.msra.mxu0 0
  %770 = vmatprep.subr.bf16.mxu0 0
  %771 = vmatpush2.bf16.msra.mxu0 0
  %772 = vmatprep.subr.bf16.mxu0 0
  %773 = vmatpush2.bf16.msra.mxu0 0
  %774 = vmatprep.subr.bf16.mxu0 0
  %775 = vmatpush2.bf16.msra.mxu0 0
  %776 = vmatprep.subr.bf16.mxu0 0
  %777 = vmatpush2.bf16.msra.mxu0 0
  %778 = vmatprep.subr.bf16.mxu0 0
  %779 = vmatpush2.bf16.msra.mxu0 0
  %780 = vmatprep.subr.bf16.mxu0 0
  %781 = vmatpush2.bf16.msra.mxu0 %v159
  %782 = vmatprep.mubr.bf16.mxu0 %v730
  %783 = vmatmul.mubr.bf16.gmra.mxu0 %v708
  %v784 = vpop.f32.mrf.mxu0
  %v785 = vadd.f32 0.0, %v784
  %v786 = vpop.f32.mrf.mxu0
  %v787 = vpop.f32.mrf.mxu0
  %v788 = vadd.f32 0.0, %v787
  %v789 = vpop.f32.mrf.mxu0
  %790 = vmatprep.mubr.bf16.mxu0 %v733
  %791 = vmatmul.mubr.bf16.gmra.mxu0 %v710
  %v792 = vpop.f32.mrf.mxu0
  %v793 = vadd.f32 0.0, %v792
  %v794 = vpop.f32.mrf.mxu0
  %v795 = vpop.f32.mrf.mxu0
  %v796 = vadd.f32 0.0, %v795
  %v797 = vpop.f32.mrf.mxu0
  %798 = vmatprep.mubr.bf16.mxu0 %v736
  %799 = vmatmul.mubr.bf16.gmra.mxu0 %v712
  %v800 = vpop.f32.mrf.mxu0
  %v801 = vadd.f32 0.0, %v800
  %v802 = vpop.f32.mrf.mxu0
  %v803 = vpop.f32.mrf.mxu0
  %v804 = vadd.f32 0.0, %v803
  %v805 = vpop.f32.mrf.mxu0
  %806 = vmatprep.mubr.bf16.mxu0 %v739
  %807 = vmatmul.mubr.bf16.gmra.mxu0 %v714
  %v808 = vpop.f32.mrf.mxu0
  %v809 = vadd.f32 0.0, %v808
  %v810 = vpop.f32.mrf.mxu0
  %v811 = vpop.f32.mrf.mxu0
  %v812 = vadd.f32 0.0, %v811
  %v813 = vpop.f32.mrf.mxu0
  %814 = vmatprep.mubr.bf16.mxu0 %v742
  %815 = vmatmul.mubr.bf16.gmra.mxu0 %v716
  %v816 = vpop.f32.mrf.mxu0
  %v817 = vadd.f32 0.0, %v816
  %v818 = vpop.f32.mrf.mxu0
  %v819 = vpop.f32.mrf.mxu0
  %v820 = vadd.f32 0.0, %v819
  %v821 = vpop.f32.mrf.mxu0
  %822 = vmatprep.mubr.bf16.mxu0 %v745
  %823 = vmatmul.mubr.bf16.gmra.mxu0 %v718
  %v824 = vpop.f32.mrf.mxu0
  %v825 = vadd.f32 0.0, %v824
  %v826 = vpop.f32.mrf.mxu0
  %v827 = vpop.f32.mrf.mxu0
  %v828 = vadd.f32 0.0, %v827
  %v829 = vpop.f32.mrf.mxu0
  %830 = vmatprep.mubr.bf16.mxu0 %v748
  %831 = vmatmul.mubr.bf16.gmra.mxu0 %v720
  %v832 = vpop.f32.mrf.mxu0
  %v833 = vadd.f32 0.0, %v832
  %v834 = vpop.f32.mrf.mxu0
  %v835 = vpop.f32.mrf.mxu0
  %v836 = vpop.f32.mrf.mxu0
  %837 = vdwg.mxu0
  %v838 = vmax.f32 %v603, %v785
  %v839 = vmax.f32 %v606, %v788
  %v840 = vmax.f32 %v611, %v793
  %v841 = vmax.f32 %v614, %v796
  %v842 = vmax.f32 %v619, %v801
  %v843 = vmax.f32 %v622, %v804
  %v844 = vmax.f32 %v627, %v809
  %v845 = vmax.f32 %v630, %v812
  %v846 = vmax.f32 %v635, %v817
  %v847 = vmax.f32 %v638, %v820
  %v848 = vmax.f32 %v643, %v825
  %v849 = vmax.f32 %v646, %v828
  %v850 = vmax.f32 %v651, %v833
  %v851 = vmax.f32 %v461, %v838
  %v852 = vmax.f32 %v462, %v839
  %v853 = vmax.f32 %v463, %v840
  %v854 = vmax.f32 %v464, %v841
  %v855 = vmax.f32 %v465, %v842
  %v856 = vmax.f32 %v466, %v843
  %v857 = vmax.f32 %v467, %v844
  %v858 = vmax.f32 %v468, %v845
  %v859 = vmax.f32 %v469, %v846
  %v860 = vmax.f32 %v470, %v847
  %v861 = vmax.f32 %v471, %v848
  %v862 = vmax.f32 %v472, %v849
  %v863 = vmax.f32 %v473, %v850
  %v864 = vld [vmem:[%s5] sm:$0x1]
  %v866 = vlaneseq
  %v867 = vshrl.u32 %v866, 7
  %v868 = vsub.s32 0, %v867
  %v869 = vrot.slane %v864, %v868
  %v871 = vadd.f32 %v851, %v869
  %v872 = vadd.f32 %v852, %v869
  %v873 = vadd.f32 %v853, %v869
  %v874 = vadd.f32 %v854, %v869
  %v875 = vadd.f32 %v855, %v869
  %v876 = vadd.f32 %v856, %v869
  %v877 = vadd.f32 %v857, %v869
  %v878 = vadd.f32 %v858, %v869
  %v879 = vadd.f32 %v859, %v869
  %v880 = vadd.f32 %v860, %v869
  %v881 = vadd.f32 %v861, %v869
  %v882 = vadd.f32 %v862, %v869
  %v883 = vadd.f32 %v863, %v869
  %v884 = vmax.f32 %v871, 0.0
  %v885 = vmax.f32 %v872, 0.0
  %v886 = vmax.f32 %v873, 0.0
  %v887 = vmax.f32 %v874, 0.0
  %v888 = vmax.f32 %v875, 0.0
  %v889 = vmax.f32 %v876, 0.0
  %v890 = vmax.f32 %v877, 0.0
  %v891 = vmax.f32 %v878, 0.0
  %v892 = vmax.f32 %v879, 0.0
  %v893 = vmax.f32 %v880, 0.0
  %v894 = vmax.f32 %v881, 0.0
  %v895 = vmax.f32 %v882, 0.0
  %v896 = vmax.f32 %v883, 0.0
  %v897 = vpack.c.bf16 %v885, %v884
  %v898 = vpack.c.bf16 %v887, %v886
  %v899 = vpack.c.bf16 %v889, %v888
  %v900 = vpack.c.bf16 %v891, %v890
  %v901 = vpack.c.bf16 %v893, %v892
  %v902 = vpack.c.bf16 %v895, %v894
  %v903 = vpack.c.bf16 %v896, %v896
  %v911 = vunpack.c.l.b16 %v897
  %v912 = vunpack.c.h.b16 %v897
  %v913 = vunpack.c.l.b16 %v898
  %v914 = vunpack.c.h.b16 %v898
  %v915 = vunpack.c.l.b16 %v899
  %v916 = vunpack.c.h.b16 %v899
  %v917 = vunpack.c.l.b16 %v900
  %v918 = vunpack.c.h.b16 %v900
  %v919 = vunpack.c.l.b16 %v901
  %v920 = vunpack.c.h.b16 %v901
  %v921 = vunpack.c.l.b16 %v902
  %v922 = vunpack.c.h.b16 %v902
  %v923 = vunpack.c.l.b16 %v903
  %v924 = vpack.c.b16 %v911, %v911
  %v925 = vpack.c.b16 %v912, %v912
  %v926 = vpack.c.b16 %v913, %v913
  %v927 = vpack.c.b16 %v914, %v914
  %v928 = vpack.c.b16 %v915, %v915
  %v929 = vpack.c.b16 %v916, %v916
  %v930 = vpack.c.b16 %v917, %v917
  %v931 = vpack.c.b16 %v918, %v918
  %v932 = vpack.c.b16 %v919, %v919
  %v933 = vpack.c.b16 %v920, %v920
  %v934 = vpack.c.b16 %v921, %v921
  %v935 = vpack.c.b16 %v922, %v922
  %v936 = vpack.c.b16 %v923, %v923
  %vm950 = vcmask 257024
  %951 = vst.msk [vmem:[%s6] sm:$0xf] %vm950, %v924
  %952 = vst.msk [vmem:[%s6 + $0x4] sm:$0xf] %vm950, %v925
  %953 = vst.msk [vmem:[%s6 + $0x8] sm:$0xf] %vm950, %v926
  %954 = vst.msk [vmem:[%s6 + $0xc] sm:$0xf] %vm950, %v927
  %955 = vst.msk [vmem:[%s6 + $0x10] sm:$0xf] %vm950, %v928
  %956 = vst.msk [vmem:[%s6 + $0x14] sm:$0xf] %vm950, %v929
  %957 = vst.msk [vmem:[%s6 + $0x18] sm:$0xf] %vm950, %v930
  %958 = vst.msk [vmem:[%s6 + $0x1c] sm:$0xf] %vm950, %v931
  %959 = vst.msk [vmem:[%s6 + $0x20] sm:$0xf] %vm950, %v932
  %960 = vst.msk [vmem:[%s6 + $0x24] sm:$0xf] %vm950, %v933
  %961 = vst.msk [vmem:[%s6 + $0x28] sm:$0xf] %vm950, %v934
  %962 = vst.msk [vmem:[%s6 + $0x2c] sm:$0xf] %vm950, %v935
  %963 = vst.msk [vmem:[%s6 + $0x30] sm:$0xf] %vm950, %v936
  // Predicated region
  $region26: #{cnn_mnist_forward.4} parent=0 // pred_check
    _
  $region27: #{cnn_mnist_forward.4} parent=0 // pred_check_branch
    %965 = sbr.rel (0) target = $region29
  $region28: #{cnn_mnist_forward.4} parent=0 // pred_region
    _
  $region29: #{cnn_mnist_forward.4} parent=0 // pred_fallthru
    _
  // Predicated region
  $region30: #{cnn_mnist_forward.4} parent=0 // pred_check
    _
  $region31: #{cnn_mnist_forward.4} parent=0 // pred_check_branch
    %967 = sbr.rel (0) target = $region33
  $region32: #{cnn_mnist_forward.4} parent=0 // pred_region
    _
  $region33: #{cnn_mnist_forward.4} parent=0 // pred_fallthru
    _

// kernel: cnn_mnist_forward.5
$region0: #{cnn_mnist_forward.5}
  #allocation0 [shape = 'u32[]', space=smem, size = 0x4, offset = 0x4, fixed_abs, tag = 'smem constant byte address 0x4 - core index']
  #allocation1 [shape = 'u32[144,128]{1,0:T(1,128)}', space=vmem, size = 0x12000, scoped, tag = 'internal scratch']
  %s0 = inlined_call_operand.vmem [shape: bf16[8,1568], index: 0, kind: input, shape index: {}]
  %s1 = inlined_call_operand.vmem [shape: bf16[1568,128], index: 1, kind: input, shape index: {}]
  %s2 = inlined_call_operand.vmem [shape: f32[1,128], index: 2, kind: input, shape index: {}]
  %s3 = inlined_call_operand.vmem [shape: bf16[128,10], index: 3, kind: input, shape index: {}]
  %s4 = inlined_call_operand.vmem [shape: f32[1,10], index: 4, kind: input, shape index: {}]
  %s5 = inlined_call_operand.vmem [shape: f32[8,10], index: 5, kind: output, shape index: {}]
  %s6 = sld [smem:[#allocation0]]
  $region30: #{cnn_mnist_forward.5} parent=0
    _
  %s8 = ssub.s32 1, %s6
  %s9 = scalar_select 0, %s8, %s6
  // Predicated region
  $region2: #{cnn_mnist_forward.5} parent=0 // pred_check
    _
  $region3: #{cnn_mnist_forward.5} parent=0 // pred_check_branch
    %11 = sbr.rel (0) target = $region5
  $region4: #{cnn_mnist_forward.5} parent=0 // pred_region
    _
  $region5: #{cnn_mnist_forward.5} parent=0 // pred_fallthru
    _
  // Predicated region
  $region6: #{cnn_mnist_forward.5} parent=0 // pred_check
    _
  $region7: #{cnn_mnist_forward.5} parent=0 // pred_check_branch
    %13 = sbr.rel (0) target = $region9
  $region8: #{cnn_mnist_forward.5} parent=0 // pred_region
    _
  $region9: #{cnn_mnist_forward.5} parent=0 // pred_fallthru
    _
  // Predicated region
  $region10: #{cnn_mnist_forward.5} parent=0 // pred_check
    _
  $region11: #{cnn_mnist_forward.5} parent=0 // pred_check_branch
    %15 = sbr.rel (0) target = $region13
  $region12: #{cnn_mnist_forward.5} parent=0 // pred_region
    _
  $region13: #{cnn_mnist_forward.5} parent=0 // pred_fallthru
    _
  // Predicated region
  $region14: #{cnn_mnist_forward.5} parent=0 // pred_check
    _
  $region15: #{cnn_mnist_forward.5} parent=0 // pred_check_branch
    %17 = sbr.rel (0) target = $region17
  $region16: #{cnn_mnist_forward.5} parent=0 // pred_region
    _
  $region17: #{cnn_mnist_forward.5} parent=0 // pred_fallthru
    _
  // Predicated region
  $region18: #{cnn_mnist_forward.5} parent=0 // pred_check
    _
  $region19: #{cnn_mnist_forward.5} parent=0 // pred_check_branch
    %19 = sbr.rel (0) target = $region21
  $region20: #{cnn_mnist_forward.5} parent=0 // pred_region
    _
  $region21: #{cnn_mnist_forward.5} parent=0 // pred_fallthru
    _
  %v21 = vld [vmem:[%s0] sm:$0xff]
  %v22 = vld [vmem:[%s0 + $0x8] sm:$0xff]
  %v23 = vld [vmem:[%s0 + $0x10] sm:$0xff]
  %v24 = vld [vmem:[%s0 + $0x18] sm:$0xff]
  %v25 = vld [vmem:[%s0 + $0x20] sm:$0xff]
  %v26 = vld [vmem:[%s0 + $0x28] sm:$0xff]
  %v27 = vld [vmem:[%s0 + $0x30] sm:$0xf]
  %v28 = vld [vmem:[%s1] sm:$0xf]
  %v29 = vld [vmem:[%s1 + $0x4] sm:$0xf]
  %v30 = vld [vmem:[%s1 + $0x8] sm:$0xf]
  %v31 = vld [vmem:[%s1 + $0xc] sm:$0xf]
  %v32 = vld [vmem:[%s1 + $0x10] sm:$0xf]
  %v33 = vld [vmem:[%s1 + $0x14] sm:$0xf]
  %v34 = vld [vmem:[%s1 + $0x18] sm:$0xf]
  %v35 = vld [vmem:[%s1 + $0x1c] sm:$0xf]
  %v36 = vld [vmem:[%s1 + $0x20] sm:$0xf]
  %v37 = vld [vmem:[%s1 + $0x24] sm:$0xf]
  %v38 = vld [vmem:[%s1 + $0x28] sm:$0xf]
  %v39 = vld [vmem:[%s1 + $0x2c] sm:$0xf]
  %v40 = vld [vmem:[%s1 + $0x30] sm:$0xf]
  %v41 = vld [vmem:[%s1 + $0x34] sm:$0xf]
  %v42 = vld [vmem:[%s1 + $0x38] sm:$0xf]
  %v43 = vld [vmem:[%s1 + $0x3c] sm:$0xf]
  %v44 = vld [vmem:[%s1 + $0x40] sm:$0xf]
  %v45 = vld [vmem:[%s1 + $0x44] sm:$0xf]
  %v46 = vld [vmem:[%s1 + $0x48] sm:$0xf]
  %v47 = vld [vmem:[%s1 + $0x4c] sm:$0xf]
  %v48 = vld [vmem:[%s1 + $0x50] sm:$0xf]
  %v49 = vld [vmem:[%s1 + $0x54] sm:$0xf]
  %v50 = vld [vmem:[%s1 + $0x58] sm:$0xf]
  %v51 = vld [vmem:[%s1 + $0x5c] sm:$0xf]
  %v52 = vld [vmem:[%s1 + $0x60] sm:$0xf]
  %v53 = vld [vmem:[%s1 + $0x64] sm:$0xf]
  %v54 = vld [vmem:[%s1 + $0x68] sm:$0xf]
  %v55 = vld [vmem:[%s1 + $0x6c] sm:$0xf]
  %v56 = vld [vmem:[%s1 + $0x70] sm:$0xf]
  %v57 = vld [vmem:[%s1 + $0x74] sm:$0xf]
  %v58 = vld [vmem:[%s1 + $0x78] sm:$0xf]
  %v59 = vld [vmem:[%s1 + $0x7c] sm:$0xf]
  %v60 = vld [vmem:[%s1 + $0x80] sm:$0xf]
  %v61 = vld [vmem:[%s1 + $0x84] sm:$0xf]
  %v62 = vld [vmem:[%s1 + $0x88] sm:$0xf]
  %v63 = vld [vmem:[%s1 + $0x8c] sm:$0xf]
  %v64 = vld [vmem:[%s1 + $0x90] sm:$0xf]
  %v65 = vld [vmem:[%s1 + $0x94] sm:$0xf]
  %v66 = vld [vmem:[%s1 + $0x98] sm:$0xf]
  %v67 = vld [vmem:[%s1 + $0x9c] sm:$0xf]
  %v68 = vld [vmem:[%s1 + $0xa0] sm:$0xf]
  %v69 = vld [vmem:[%s1 + $0xa4] sm:$0xf]
  %v70 = vld [vmem:[%s1 + $0xa8] sm:$0xf]
  %v71 = vld [vmem:[%s1 + $0xac] sm:$0xf]
  %v72 = vld [vmem:[%s1 + $0xb0] sm:$0xf]
  %v73 = vld [vmem:[%s1 + $0xb4] sm:$0xf]
  %v74 = vld [vmem:[%s1 + $0xb8] sm:$0xf]
  %v75 = vld [vmem:[%s1 + $0xbc] sm:$0xf]
  %v76 = vld [vmem:[%s1 + $0xc0] sm:$0xf]
  %v77 = vld [vmem:[%s1 + $0xc4] sm:$0xf]
  %v78 = vld [vmem:[%s1 + $0xc8] sm:$0xf]
  %v79 = vld [vmem:[%s1 + $0xcc] sm:$0xf]
  %v80 = vld [vmem:[%s1 + $0xd0] sm:$0xf]
  %v81 = vld [vmem:[%s1 + $0xd4] sm:$0xf]
  %v82 = vld [vmem:[%s1 + $0xd8] sm:$0xf]
  %v83 = vld [vmem:[%s1 + $0xdc] sm:$0xf]
  %v84 = vld [vmem:[%s1 + $0xe0] sm:$0xf]
  %v85 = vld [vmem:[%s1 + $0xe4] sm:$0xf]
  %v86 = vld [vmem:[%s1 + $0xe8] sm:$0xf]
  %v87 = vld [vmem:[%s1 + $0xec] sm:$0xf]
  %v88 = vld [vmem:[%s1 + $0xf0] sm:$0xf]
  %v89 = vld [vmem:[%s1 + $0xf4] sm:$0xf]
  %v90 = vld [vmem:[%s1 + $0xf8] sm:$0xf]
  %v91 = vld [vmem:[%s1 + $0xfc] sm:$0xf]
  %v92 = vld [vmem:[%s1 + $0x100] sm:$0xf]
  %v93 = vld [vmem:[%s1 + $0x104] sm:$0xf]
  %v94 = vld [vmem:[%s1 + $0x108] sm:$0xf]
  %v95 = vld [vmem:[%s1 + $0x10c] sm:$0xf]
  %v96 = vld [vmem:[%s1 + $0x110] sm:$0xf]
  %v97 = vld [vmem:[%s1 + $0x114] sm:$0xf]
  %v98 = vld [vmem:[%s1 + $0x118] sm:$0xf]
  %v99 = vld [vmem:[%s1 + $0x11c] sm:$0xf]
  %v100 = vld [vmem:[%s1 + $0x120] sm:$0xf]
  %v101 = vld [vmem:[%s1 + $0x124] sm:$0xf]
  %v102 = vld [vmem:[%s1 + $0x128] sm:$0xf]
  %v103 = vld [vmem:[%s1 + $0x12c] sm:$0xf]
  %v104 = vld [vmem:[%s1 + $0x130] sm:$0xf]
  %v105 = vld [vmem:[%s1 + $0x134] sm:$0xf]
  %v106 = vld [vmem:[%s1 + $0x138] sm:$0xf]
  %v107 = vld [vmem:[%s1 + $0x13c] sm:$0xf]
  %v108 = vld [vmem:[%s1 + $0x140] sm:$0xf]
  %v109 = vld [vmem:[%s1 + $0x144] sm:$0xf]
  %v110 = vld [vmem:[%s1 + $0x148] sm:$0xf]
  %v111 = vld [vmem:[%s1 + $0x14c] sm:$0xf]
  %v112 = vld [vmem:[%s1 + $0x150] sm:$0xf]
  %v113 = vld [vmem:[%s1 + $0x154] sm:$0xf]
  %v114 = vld [vmem:[%s1 + $0x158] sm:$0xf]
  %v115 = vld [vmem:[%s1 + $0x15c] sm:$0xf]
  %v116 = vld [vmem:[%s1 + $0x160] sm:$0xf]
  %v117 = vld [vmem:[%s1 + $0x164] sm:$0xf]
  %v118 = vld [vmem:[%s1 + $0x168] sm:$0xf]
  %v119 = vld [vmem:[%s1 + $0x16c] sm:$0xf]
  %v120 = vld [vmem:[%s1 + $0x170] sm:$0xf]
  %v121 = vld [vmem:[%s1 + $0x174] sm:$0xf]
  %v122 = vld [vmem:[%s1 + $0x178] sm:$0xf]
  %v123 = vld [vmem:[%s1 + $0x17c] sm:$0xf]
  %v124 = vld [vmem:[%s1 + $0x180] sm:$0xf]
  %v125 = vld [vmem:[%s1 + $0x184] sm:$0xf]
  %v126 = vld [vmem:[%s1 + $0x188] sm:$0xf]
  %v127 = vld [vmem:[%s1 + $0x18c] sm:$0xf]
  %v128 = vld [vmem:[%s1 + $0x190] sm:$0xf]
  %v129 = vld [vmem:[%s1 + $0x194] sm:$0xf]
  %v130 = vld [vmem:[%s1 + $0x198] sm:$0xf]
  %v131 = vld [vmem:[%s1 + $0x19c] sm:$0xf]
  %v132 = vld [vmem:[%s1 + $0x1a0] sm:$0xf]
  %v133 = vld [vmem:[%s1 + $0x1a4] sm:$0xf]
  %v134 = vld [vmem:[%s1 + $0x1a8] sm:$0xf]
  %v135 = vld [vmem:[%s1 + $0x1ac] sm:$0xf]
  %v136 = vld [vmem:[%s1 + $0x1b0] sm:$0xf]
  %v137 = vld [vmem:[%s1 + $0x1b4] sm:$0xf]
  %v138 = vld [vmem:[%s1 + $0x1b8] sm:$0xf]
  %v139 = vld [vmem:[%s1 + $0x1bc] sm:$0xf]
  %v140 = vld [vmem:[%s1 + $0x1c0] sm:$0xf]
  %v141 = vld [vmem:[%s1 + $0x1c4] sm:$0xf]
  %v142 = vld [vmem:[%s1 + $0x1c8] sm:$0xf]
  %v143 = vld [vmem:[%s1 + $0x1cc] sm:$0xf]
  %v144 = vld [vmem:[%s1 + $0x1d0] sm:$0xf]
  %v145 = vld [vmem:[%s1 + $0x1d4] sm:$0xf]
  %v146 = vld [vmem:[%s1 + $0x1d8] sm:$0xf]
  %v147 = vld [vmem:[%s1 + $0x1dc] sm:$0xf]
  %v148 = vld [vmem:[%s1 + $0x1e0] sm:$0xf]
  %v149 = vld [vmem:[%s1 + $0x1e4] sm:$0xf]
  %v150 = vld [vmem:[%s1 + $0x1e8] sm:$0xf]
  %v151 = vld [vmem:[%s1 + $0x1ec] sm:$0xf]
  %v152 = vld [vmem:[%s1 + $0x1f0] sm:$0xf]
  %v153 = vld [vmem:[%s1 + $0x1f4] sm:$0xf]
  %v154 = vld [vmem:[%s1 + $0x1f8] sm:$0xf]
  %v155 = vld [vmem:[%s1 + $0x1fc] sm:$0xf]
  %v156 = vld [vmem:[%s1 + $0x200] sm:$0xf]
  %v157 = vld [vmem:[%s1 + $0x204] sm:$0xf]
  %v158 = vld [vmem:[%s1 + $0x208] sm:$0xf]
  %v159 = vld [vmem:[%s1 + $0x20c] sm:$0xf]
  %v160 = vld [vmem:[%s1 + $0x210] sm:$0xf]
  %v161 = vld [vmem:[%s1 + $0x214] sm:$0xf]
  %v162 = vld [vmem:[%s1 + $0x218] sm:$0xf]
  %v163 = vld [vmem:[%s1 + $0x21c] sm:$0xf]
  %v164 = vld [vmem:[%s1 + $0x220] sm:$0xf]
  %v165 = vld [vmem:[%s1 + $0x224] sm:$0xf]
  %v166 = vld [vmem:[%s1 + $0x228] sm:$0xf]
  %v167 = vld [vmem:[%s1 + $0x22c] sm:$0xf]
  %v168 = vld [vmem:[%s1 + $0x230] sm:$0xf]
  %v169 = vld [vmem:[%s1 + $0x234] sm:$0xf]
  %v170 = vld [vmem:[%s1 + $0x238] sm:$0xf]
  %v171 = vld [vmem:[%s1 + $0x23c] sm:$0xf]
  %v172 = vld [vmem:[%s1 + $0x240] sm:$0xf]
  %v173 = vld [vmem:[%s1 + $0x244] sm:$0xf]
  %v174 = vld [vmem:[%s1 + $0x248] sm:$0xf]
  %v175 = vld [vmem:[%s1 + $0x24c] sm:$0xf]
  %v176 = vld [vmem:[%s1 + $0x250] sm:$0xf]
  %v177 = vld [vmem:[%s1 + $0x254] sm:$0xf]
  %v178 = vld [vmem:[%s1 + $0x258] sm:$0xf]
  %v179 = vld [vmem:[%s1 + $0x25c] sm:$0xf]
  %v180 = vld [vmem:[%s1 + $0x260] sm:$0xf]
  %v181 = vld [vmem:[%s1 + $0x264] sm:$0xf]
  %v182 = vld [vmem:[%s1 + $0x268] sm:$0xf]
  %v183 = vld [vmem:[%s1 + $0x26c] sm:$0xf]
  %v184 = vld [vmem:[%s1 + $0x270] sm:$0xf]
  %v185 = vld [vmem:[%s1 + $0x274] sm:$0xf]
  %v186 = vld [vmem:[%s1 + $0x278] sm:$0xf]
  %v187 = vld [vmem:[%s1 + $0x27c] sm:$0xf]
  %v188 = vld [vmem:[%s1 + $0x280] sm:$0xf]
  %v189 = vld [vmem:[%s1 + $0x284] sm:$0xf]
  %v190 = vld [vmem:[%s1 + $0x288] sm:$0xf]
  %v191 = vld [vmem:[%s1 + $0x28c] sm:$0xf]
  %v192 = vld [vmem:[%s1 + $0x290] sm:$0xf]
  %v193 = vld [vmem:[%s1 + $0x294] sm:$0xf]
  %v194 = vld [vmem:[%s1 + $0x298] sm:$0xf]
  %v195 = vld [vmem:[%s1 + $0x29c] sm:$0xf]
  %v196 = vld [vmem:[%s1 + $0x2a0] sm:$0xf]
  %v197 = vld [vmem:[%s1 + $0x2a4] sm:$0xf]
  %v198 = vld [vmem:[%s1 + $0x2a8] sm:$0xf]
  %v199 = vld [vmem:[%s1 + $0x2ac] sm:$0xf]
  %v200 = vld [vmem:[%s1 + $0x2b0] sm:$0xf]
  %v201 = vld [vmem:[%s1 + $0x2b4] sm:$0xf]
  %v202 = vld [vmem:[%s1 + $0x2b8] sm:$0xf]
  %v203 = vld [vmem:[%s1 + $0x2bc] sm:$0xf]
  %v204 = vld [vmem:[%s1 + $0x2c0] sm:$0xf]
  %v205 = vld [vmem:[%s1 + $0x2c4] sm:$0xf]
  %v206 = vld [vmem:[%s1 + $0x2c8] sm:$0xf]
  %v207 = vld [vmem:[%s1 + $0x2cc] sm:$0xf]
  %v208 = vld [vmem:[%s1 + $0x2d0] sm:$0xf]
  %v209 = vld [vmem:[%s1 + $0x2d4] sm:$0xf]
  %v210 = vld [vmem:[%s1 + $0x2d8] sm:$0xf]
  %v211 = vld [vmem:[%s1 + $0x2dc] sm:$0xf]
  %v212 = vld [vmem:[%s1 + $0x2e0] sm:$0xf]
  %v213 = vld [vmem:[%s1 + $0x2e4] sm:$0xf]
  %v214 = vld [vmem:[%s1 + $0x2e8] sm:$0xf]
  %v215 = vld [vmem:[%s1 + $0x2ec] sm:$0xf]
  %v216 = vld [vmem:[%s1 + $0x2f0] sm:$0xf]
  %v217 = vld [vmem:[%s1 + $0x2f4] sm:$0xf]
  %v218 = vld [vmem:[%s1 + $0x2f8] sm:$0xf]
  %v219 = vld [vmem:[%s1 + $0x2fc] sm:$0xf]
  %v220 = vld [vmem:[%s1 + $0x300] sm:$0xf]
  %v221 = vld [vmem:[%s1 + $0x304] sm:$0xf]
  %v222 = vld [vmem:[%s1 + $0x308] sm:$0xf]
  %v223 = vld [vmem:[%s1 + $0x30c] sm:$0xf]
  %v224 = vld [vmem:[%s2] sm:$0x1]
  %v226 = vlaneseq
  %v227 = vshrl.u32 %v226, 7
  %v228 = vsub.s32 0, %v227
  %v229 = vrot.slane %v224, %v228
  %v238 = vunpack.c.l.b16 %v21
  %v239 = vunpack.c.h.b16 %v21
  %v240 = vunpack.c.l.b16 %v22
  %v241 = vunpack.c.h.b16 %v22
  %v242 = vunpack.c.l.b16 %v23
  %v243 = vunpack.c.h.b16 %v23
  %v244 = vunpack.c.l.b16 %v24
  %v245 = vunpack.c.h.b16 %v24
  %v246 = vunpack.c.l.b16 %v25
  %v247 = vunpack.c.h.b16 %v25
  %v248 = vunpack.c.l.b16 %v26
  %v249 = vunpack.c.h.b16 %v26
  %v250 = vunpack.c.l.b16 %v27
  %v251 = vpack.c.b16 %v238, %v238
  %v252 = vpack.c.b16 %v239, %v239
  %v253 = vpack.c.b16 %v240, %v240
  %v254 = vpack.c.b16 %v241, %v241
  %v255 = vpack.c.b16 %v242, %v242
  %v256 = vpack.c.b16 %v243, %v243
  %v257 = vpack.c.b16 %v244, %v244
  %v258 = vpack.c.b16 %v245, %v245
  %v259 = vpack.c.b16 %v246, %v246
  %v260 = vpack.c.b16 %v247, %v247
  %v261 = vpack.c.b16 %v248, %v248
  %v262 = vpack.c.b16 %v249, %v249
  %v263 = vpack.c.b16 %v250, %v250
  %v472 = vunpack.c.l.b16 %v28
  %v473 = vunpack.c.l.b16 %v29
  %v474 = vunpack.c.l.b16 %v30
  %v475 = vunpack.c.l.b16 %v31
  %v476 = vunpack.c.l.b16 %v32
  %v477 = vunpack.c.l.b16 %v33
  %v478 = vunpack.c.l.b16 %v34
  %v479 = vunpack.c.l.b16 %v35
  %v480 = vunpack.c.l.b16 %v36
  %v481 = vunpack.c.l.b16 %v37
  %v482 = vunpack.c.l.b16 %v38
  %v483 = vunpack.c.l.b16 %v39
  %v484 = vunpack.c.l.b16 %v40
  %v485 = vunpack.c.l.b16 %v41
  %v486 = vunpack.c.l.b16 %v42
  %v487 = vunpack.c.l.b16 %v43
  %v488 = vunpack.c.l.b16 %v44
  %v489 = vunpack.c.l.b16 %v45
  %v490 = vunpack.c.l.b16 %v46
  %v491 = vunpack.c.l.b16 %v47
  %v492 = vunpack.c.l.b16 %v48
  %v493 = vunpack.c.l.b16 %v49
  %v494 = vunpack.c.l.b16 %v50
  %v495 = vunpack.c.l.b16 %v51
  %v496 = vunpack.c.l.b16 %v52
  %v497 = vunpack.c.l.b16 %v53
  %v498 = vunpack.c.l.b16 %v54
  %v499 = vunpack.c.l.b16 %v55
  %v500 = vunpack.c.l.b16 %v56
  %v501 = vunpack.c.l.b16 %v57
  %v502 = vunpack.c.l.b16 %v58
  %v503 = vunpack.c.l.b16 %v59
  %v504 = vunpack.c.l.b16 %v60
  %v505 = vunpack.c.l.b16 %v61
  %v506 = vunpack.c.l.b16 %v62
  %v507 = vunpack.c.l.b16 %v63
  %v508 = vunpack.c.l.b16 %v64
  %v509 = vunpack.c.l.b16 %v65
  %v510 = vunpack.c.l.b16 %v66
  %v511 = vunpack.c.l.b16 %v67
  %v512 = vunpack.c.l.b16 %v68
  %v513 = vunpack.c.l.b16 %v69
  %v514 = vunpack.c.l.b16 %v70
  %v515 = vunpack.c.l.b16 %v71
  %v516 = vunpack.c.l.b16 %v72
  %v517 = vunpack.c.l.b16 %v73
  %v518 = vunpack.c.l.b16 %v74
  %v519 = vunpack.c.l.b16 %v75
  %v520 = vunpack.c.l.b16 %v76
  %v521 = vunpack.c.l.b16 %v77
  %v522 = vunpack.c.l.b16 %v78
  %v523 = vunpack.c.l.b16 %v79
  %v524 = vunpack.c.l.b16 %v80
  %v525 = vunpack.c.l.b16 %v81
  %v526 = vunpack.c.l.b16 %v82
  %v527 = vunpack.c.l.b16 %v83
  %v528 = vunpack.c.l.b16 %v84
  %v529 = vunpack.c.l.b16 %v85
  %v530 = vunpack.c.l.b16 %v86
  %v531 = vunpack.c.l.b16 %v87
  %v532 = vunpack.c.l.b16 %v88
  %v533 = vunpack.c.l.b16 %v89
  %v534 = vunpack.c.l.b16 %v90
  %v535 = vunpack.c.l.b16 %v91
  %v536 = vunpack.c.l.b16 %v92
  %v537 = vunpack.c.l.b16 %v93
  %v538 = vunpack.c.l.b16 %v94
  %v539 = vunpack.c.l.b16 %v95
  %v540 = vunpack.c.l.b16 %v96
  %v541 = vunpack.c.l.b16 %v97
  %v542 = vunpack.c.l.b16 %v98
  %v543 = vunpack.c.l.b16 %v99
  %v544 = vunpack.c.l.b16 %v100
  %v545 = vunpack.c.l.b16 %v101
  %v546 = vunpack.c.l.b16 %v102
  %v547 = vunpack.c.l.b16 %v103
  %v548 = vunpack.c.l.b16 %v104
  %v549 = vunpack.c.l.b16 %v105
  %v550 = vunpack.c.l.b16 %v106
  %v551 = vunpack.c.l.b16 %v107
  %v552 = vunpack.c.l.b16 %v108
  %v553 = vunpack.c.l.b16 %v109
  %v554 = vunpack.c.l.b16 %v110
  %v555 = vunpack.c.l.b16 %v111
  %v556 = vunpack.c.l.b16 %v112
  %v557 = vunpack.c.l.b16 %v113
  %v558 = vunpack.c.l.b16 %v114
  %v559 = vunpack.c.l.b16 %v115
  %v560 = vunpack.c.l.b16 %v116
  %v561 = vunpack.c.l.b16 %v117
  %v562 = vunpack.c.l.b16 %v118
  %v563 = vunpack.c.l.b16 %v119
  %v564 = vunpack.c.l.b16 %v120
  %v565 = vunpack.c.l.b16 %v121
  %v566 = vunpack.c.l.b16 %v122
  %v567 = vunpack.c.l.b16 %v123
  %v568 = vunpack.c.l.b16 %v124
  %v569 = vunpack.c.l.b16 %v125
  %v570 = vunpack.c.l.b16 %v126
  %v571 = vunpack.c.l.b16 %v127
  %v572 = vunpack.c.l.b16 %v128
  %v573 = vunpack.c.l.b16 %v129
  %v574 = vunpack.c.l.b16 %v130
  %v575 = vunpack.c.l.b16 %v131
  %v576 = vunpack.c.l.b16 %v132
  %v577 = vunpack.c.l.b16 %v133
  %v578 = vunpack.c.l.b16 %v134
  %v579 = vunpack.c.l.b16 %v135
  %v580 = vunpack.c.l.b16 %v136
  %v581 = vunpack.c.l.b16 %v137
  %v582 = vunpack.c.l.b16 %v138
  %v583 = vunpack.c.l.b16 %v139
  %v584 = vunpack.c.l.b16 %v140
  %v585 = vunpack.c.l.b16 %v141
  %v586 = vunpack.c.l.b16 %v142
  %v587 = vunpack.c.l.b16 %v143
  %v588 = vunpack.c.l.b16 %v144
  %v589 = vunpack.c.l.b16 %v145
  %v590 = vunpack.c.l.b16 %v146
  %v591 = vunpack.c.l.b16 %v147
  %v592 = vunpack.c.l.b16 %v148
  %v593 = vunpack.c.l.b16 %v149
  %v594 = vunpack.c.l.b16 %v150
  %v595 = vunpack.c.l.b16 %v151
  %v596 = vunpack.c.l.b16 %v152
  %v597 = vunpack.c.l.b16 %v153
  %v598 = vunpack.c.l.b16 %v154
  %v599 = vunpack.c.l.b16 %v155
  %v600 = vunpack.c.l.b16 %v156
  %v601 = vunpack.c.l.b16 %v157
  %v602 = vunpack.c.l.b16 %v158
  %v603 = vunpack.c.l.b16 %v159
  %v604 = vunpack.c.l.b16 %v160
  %v605 = vunpack.c.l.b16 %v161
  %v606 = vunpack.c.l.b16 %v162
  %v607 = vunpack.c.l.b16 %v163
  %v608 = vunpack.c.l.b16 %v164
  %v609 = vunpack.c.l.b16 %v165
  %v610 = vunpack.c.l.b16 %v166
  %v611 = vunpack.c.l.b16 %v167
  %v612 = vunpack.c.l.b16 %v168
  %v613 = vunpack.c.l.b16 %v169
  %v614 = vunpack.c.l.b16 %v170
  %v615 = vunpack.c.l.b16 %v171
  %v616 = vunpack.c.l.b16 %v172
  %v617 = vunpack.c.l.b16 %v173
  %v618 = vunpack.c.l.b16 %v174
  %v619 = vunpack.c.l.b16 %v175
  %v620 = vunpack.c.l.b16 %v176
  %v621 = vunpack.c.l.b16 %v177
  %v622 = vunpack.c.l.b16 %v178
  %v623 = vunpack.c.l.b16 %v179
  %v624 = vunpack.c.l.b16 %v180
  %v625 = vunpack.c.l.b16 %v181
  %v626 = vunpack.c.l.b16 %v182
  %v627 = vunpack.c.l.b16 %v183
  %v628 = vunpack.c.l.b16 %v184
  %v629 = vunpack.c.l.b16 %v185
  %v630 = vunpack.c.l.b16 %v186
  %v631 = vunpack.c.l.b16 %v187
  %v632 = vunpack.c.l.b16 %v188
  %v633 = vunpack.c.l.b16 %v189
  %v634 = vunpack.c.l.b16 %v190
  %v635 = vunpack.c.l.b16 %v191
  %v636 = vunpack.c.l.b16 %v192
  %v637 = vunpack.c.l.b16 %v193
  %v638 = vunpack.c.l.b16 %v194
  %v639 = vunpack.c.l.b16 %v195
  %v640 = vunpack.c.l.b16 %v196
  %v641 = vunpack.c.l.b16 %v197
  %v642 = vunpack.c.l.b16 %v198
  %v643 = vunpack.c.l.b16 %v199
  %v644 = vunpack.c.l.b16 %v200
  %v645 = vunpack.c.l.b16 %v201
  %v646 = vunpack.c.l.b16 %v202
  %v647 = vunpack.c.l.b16 %v203
  %v648 = vunpack.c.l.b16 %v204
  %v649 = vunpack.c.l.b16 %v205
  %v650 = vunpack.c.l.b16 %v206
  %v651 = vunpack.c.l.b16 %v207
  %v652 = vunpack.c.l.b16 %v208
  %v653 = vunpack.c.l.b16 %v209
  %v654 = vunpack.c.l.b16 %v210
  %v655 = vunpack.c.l.b16 %v211
  %v656 = vunpack.c.l.b16 %v212
  %v657 = vunpack.c.l.b16 %v213
  %v658 = vunpack.c.l.b16 %v214
  %v659 = vunpack.c.l.b16 %v215
  %v660 = vunpack.c.l.b16 %v216
  %v661 = vunpack.c.l.b16 %v217
  %v662 = vunpack.c.l.b16 %v218
  %v663 = vunpack.c.l.b16 %v219
  %v664 = vunpack.c.l.b16 %v220
  %v665 = vunpack.c.l.b16 %v221
  %v666 = vunpack.c.l.b16 %v222
  %v667 = vunpack.c.l.b16 %v223
  %v668 = vpack.c.b16 %v473, %v472
  %v669 = vpack.c.b16 %v475, %v474
  %v670 = vpack.c.b16 %v477, %v476
  %v671 = vpack.c.b16 %v479, %v478
  %v672 = vpack.c.b16 %v481, %v480
  %v673 = vpack.c.b16 %v483, %v482
  %v674 = vpack.c.b16 %v485, %v484
  %v675 = vpack.c.b16 %v487, %v486
  %v676 = vpack.c.b16 %v489, %v488
  %v677 = vpack.c.b16 %v491, %v490
  %v678 = vpack.c.b16 %v493, %v492
  %v679 = vpack.c.b16 %v495, %v494
  %v680 = vpack.c.b16 %v497, %v496
  %v681 = vpack.c.b16 %v499, %v498
  %v682 = vpack.c.b16 %v501, %v500
  %v683 = vpack.c.b16 %v503, %v502
  %v684 = vpack.c.b16 %v505, %v504
  %v685 = vpack.c.b16 %v507, %v506
  %v686 = vpack.c.b16 %v509, %v508
  %v687 = vpack.c.b16 %v511, %v510
  %v688 = vpack.c.b16 %v513, %v512
  %v689 = vpack.c.b16 %v515, %v514
  %v690 = vpack.c.b16 %v517, %v516
  %v691 = vpack.c.b16 %v519, %v518
  %v692 = vpack.c.b16 %v521, %v520
  %v693 = vpack.c.b16 %v523, %v522
  %v694 = vpack.c.b16 %v525, %v524
  %v695 = vpack.c.b16 %v527, %v526
  %v696 = vpack.c.b16 %v529, %v528
  %v697 = vpack.c.b16 %v531, %v530
  %v698 = vpack.c.b16 %v533, %v532
  %v699 = vpack.c.b16 %v535, %v534
  %v700 = vpack.c.b16 %v537, %v536
  %v701 = vpack.c.b16 %v539, %v538
  %v702 = vpack.c.b16 %v541, %v540
  %v703 = vpack.c.b16 %v543, %v542
  %v704 = vpack.c.b16 %v545, %v544
  %v705 = vpack.c.b16 %v547, %v546
  %v706 = vpack.c.b16 %v549, %v548
  %v707 = vpack.c.b16 %v551, %v550
  %v708 = vpack.c.b16 %v553, %v552
  %v709 = vpack.c.b16 %v555, %v554
  %v710 = vpack.c.b16 %v557, %v556
  %v711 = vpack.c.b16 %v559, %v558
  %v712 = vpack.c.b16 %v561, %v560
  %v713 = vpack.c.b16 %v563, %v562
  %v714 = vpack.c.b16 %v565, %v564
  %v715 = vpack.c.b16 %v567, %v566
  %v716 = vpack.c.b16 %v569, %v568
  %v717 = vpack.c.b16 %v571, %v570
  %v718 = vpack.c.b16 %v573, %v572
  %v719 = vpack.c.b16 %v575, %v574
  %v720 = vpack.c.b16 %v577, %v576
  %v721 = vpack.c.b16 %v579, %v578
  %v722 = vpack.c.b16 %v581, %v580
  %v723 = vpack.c.b16 %v583, %v582
  %v724 = vpack.c.b16 %v585, %v584
  %v725 = vpack.c.b16 %v587, %v586
  %v726 = vpack.c.b16 %v589, %v588
  %v727 = vpack.c.b16 %v591, %v590
  %v728 = vpack.c.b16 %v593, %v592
  %v729 = vpack.c.b16 %v595, %v594
  %v730 = vpack.c.b16 %v597, %v596
  %v731 = vpack.c.b16 %v599, %v598
  %v732 = vpack.c.b16 %v601, %v600
  %v733 = vpack.c.b16 %v603, %v602
  %v734 = vpack.c.b16 %v605, %v604
  %v735 = vpack.c.b16 %v607, %v606
  %v736 = vpack.c.b16 %v609, %v608
  %v737 = vpack.c.b16 %v611, %v610
  %v738 = vpack.c.b16 %v613, %v612
  %v739 = vpack.c.b16 %v615, %v614
  %v740 = vpack.c.b16 %v617, %v616
  %v741 = vpack.c.b16 %v619, %v618
  %v742 = vpack.c.b16 %v621, %v620
  %v743 = vpack.c.b16 %v623, %v622
  %v744 = vpack.c.b16 %v625, %v624
  %v745 = vpack.c.b16 %v627, %v626
  %v746 = vpack.c.b16 %v629, %v628
  %v747 = vpack.c.b16 %v631, %v630
  %v748 = vpack.c.b16 %v633, %v632
  %v749 = vpack.c.b16 %v635, %v634
  %v750 = vpack.c.b16 %v637, %v636
  %v751 = vpack.c.b16 %v639, %v638
  %v752 = vpack.c.b16 %v641, %v640
  %v753 = vpack.c.b16 %v643, %v642
  %v754 = vpack.c.b16 %v645, %v644
  %v755 = vpack.c.b16 %v647, %v646
  %v756 = vpack.c.b16 %v649, %v648
  %v757 = vpack.c.b16 %v651, %v650
  %v758 = vpack.c.b16 %v653, %v652
  %v759 = vpack.c.b16 %v655, %v654
  %v760 = vpack.c.b16 %v657, %v656
  %v761 = vpack.c.b16 %v659, %v658
  %v762 = vpack.c.b16 %v661, %v660
  %v763 = vpack.c.b16 %v663, %v662
  %v764 = vpack.c.b16 %v665, %v664
  %v765 = vpack.c.b16 %v667, %v666
  %vm864 = vcmask 261120
  %v866 = vsel %vm864, %v263, 0
  %868 = vmatprep.subr.bf16.mxu0 0
  %869 = vmatpush1.bf16.msra.mxu0 %v675
  %870 = vmatprep.subr.bf16.mxu0 0
  %871 = vmatpush1.bf16.msra.mxu0 %v674
  %872 = vmatprep.subr.bf16.mxu0 0
  %873 = vmatpush1.bf16.msra.mxu0 %v673
  %874 = vmatprep.subr.bf16.mxu0 0
  %875 = vmatpush1.bf16.msra.mxu0 %v672
  %876 = vmatprep.subr.bf16.mxu0 0
  %877 = vmatpush1.bf16.msra.mxu0 %v671
  %878 = vmatprep.subr.bf16.mxu0 0
  %879 = vmatpush1.bf16.msra.mxu0 %v670
  %880 = vmatprep.subr.bf16.mxu0 0
  %881 = vmatpush1.bf16.msra.mxu0 %v669
  %882 = vmatprep.subr.bf16.mxu0 0
  %883 = vmatpush1.bf16.msra.mxu0 %v668
  %884 = vmatprep.subr.bf16.mxu0 0
  %885 = vmatpush2.bf16.msra.mxu0 %v683
  %886 = vmatprep.subr.bf16.mxu0 0
  %887 = vmatpush2.bf16.msra.mxu0 %v682
  %888 = vmatprep.subr.bf16.mxu0 0
  %889 = vmatpush2.bf16.msra.mxu0 %v681
  %890 = vmatprep.subr.bf16.mxu0 0
  %891 = vmatpush2.bf16.msra.mxu0 %v680
  %892 = vmatprep.subr.bf16.mxu0 0
  %893 = vmatpush2.bf16.msra.mxu0 %v679
  %894 = vmatprep.subr.bf16.mxu0 0
  %895 = vmatpush2.bf16.msra.mxu0 %v678
  %896 = vmatprep.subr.bf16.mxu0 0
  %897 = vmatpush2.bf16.msra.mxu0 %v677
  %898 = vmatprep.subr.bf16.mxu0 0
  %899 = vmatpush2.bf16.msra.mxu0 %v676
  %900 = vmatprep.mubr.bf16.mxu0 %v252
  %901 = vmatmul.mubr.bf16.gmra.mxu0 %v251
  %v902 = vpop.f32.mrf.mxu0
  %v903 = vadd.f32 %v229, %v902
  %v904 = vpop.f32.mrf.mxu0
  %v905 = vpop.f32.mrf.mxu0
  %v906 = vpop.f32.mrf.mxu0
  %907 = vdwg.mxu0
  %908 = vmatprep.subr.bf16.mxu0 0
  %909 = vmatpush1.bf16.msra.mxu0 %v691
  %910 = vmatprep.subr.bf16.mxu0 0
  %911 = vmatpush1.bf16.msra.mxu0 %v690
  %912 = vmatprep.subr.bf16.mxu0 0
  %913 = vmatpush1.bf16.msra.mxu0 %v689
  %914 = vmatprep.subr.bf16.mxu0 0
  %915 = vmatpush1.bf16.msra.mxu0 %v688
  %916 = vmatprep.subr.bf16.mxu0 0
  %917 = vmatpush1.bf16.msra.mxu0 %v687
  %918 = vmatprep.subr.bf16.mxu0 0
  %919 = vmatpush1.bf16.msra.mxu0 %v686
  %920 = vmatprep.subr.bf16.mxu0 0
  %921 = vmatpush1.bf16.msra.mxu0 %v685
  %922 = vmatprep.subr.bf16.mxu0 0
  %923 = vmatpush1.bf16.msra.mxu0 %v684
  %924 = vmatprep.subr.bf16.mxu0 0
  %925 = vmatpush2.bf16.msra.mxu0 %v699
  %926 = vmatprep.subr.bf16.mxu0 0
  %927 = vmatpush2.bf16.msra.mxu0 %v698
  %928 = vmatprep.subr.bf16.mxu0 0
  %929 = vmatpush2.bf16.msra.mxu0 %v697
  %930 = vmatprep.subr.bf16.mxu0 0
  %931 = vmatpush2.bf16.msra.mxu0 %v696
  %932 = vmatprep.subr.bf16.mxu0 0
  %933 = vmatpush2.bf16.msra.mxu0 %v695
  %934 = vmatprep.subr.bf16.mxu0 0
  %935 = vmatpush2.bf16.msra.mxu0 %v694
  %936 = vmatprep.subr.bf16.mxu0 0
  %937 = vmatpush2.bf16.msra.mxu0 %v693
  %938 = vmatprep.subr.bf16.mxu0 0
  %939 = vmatpush2.bf16.msra.mxu0 %v692
  %940 = vmatprep.mubr.bf16.mxu0 %v254
  %941 = vmatmul.mubr.bf16.gmra.mxu0 %v253
  %v942 = vpop.f32.mrf.mxu0
  %v943 = vadd.f32 %v903, %v942
  %v944 = vpop.f32.mrf.mxu0
  %v945 = vpop.f32.mrf.mxu0
  %v946 = vpop.f32.mrf.mxu0
  %947 = vdwg.mxu0
  %948 = vmatprep.subr.bf16.mxu0 0
  %949 = vmatpush1.bf16.msra.mxu0 %v707
  %950 = vmatprep.subr.bf16.mxu0 0
  %951 = vmatpush1.bf16.msra.mxu0 %v706
  %952 = vmatprep.subr.bf16.mxu0 0
  %953 = vmatpush1.bf16.msra.mxu0 %v705
  %954 = vmatprep.subr.bf16.mxu0 0
  %955 = vmatpush1.bf16.msra.mxu0 %v704
  %956 = vmatprep.subr.bf16.mxu0 0
  %957 = vmatpush1.bf16.msra.mxu0 %v703
  %958 = vmatprep.subr.bf16.mxu0 0
  %959 = vmatpush1.bf16.msra.mxu0 %v702
  %960 = vmatprep.subr.bf16.mxu0 0
  %961 = vmatpush1.bf16.msra.mxu0 %v701
  %962 = vmatprep.subr.bf16.mxu0 0
  %963 = vmatpush1.bf16.msra.mxu0 %v700
  %964 = vmatprep.subr.bf16.mxu0 0
  %965 = vmatpush2.bf16.msra.mxu0 %v715
  %966 = vmatprep.subr.bf16.mxu0 0
  %967 = vmatpush2.bf16.msra.mxu0 %v714
  %968 = vmatprep.subr.bf16.mxu0 0
  %969 = vmatpush2.bf16.msra.mxu0 %v713
  %970 = vmatprep.subr.bf16.mxu0 0
  %971 = vmatpush2.bf16.msra.mxu0 %v712
  %972 = vmatprep.subr.bf16.mxu0 0
  %973 = vmatpush2.bf16.msra.mxu0 %v711
  %974 = vmatprep.subr.bf16.mxu0 0
  %975 = vmatpush2.bf16.msra.mxu0 %v710
  %976 = vmatprep.subr.bf16.mxu0 0
  %977 = vmatpush2.bf16.msra.mxu0 %v709
  %978 = vmatprep.subr.bf16.mxu0 0
  %979 = vmatpush2.bf16.msra.mxu0 %v708
  %980 = vmatprep.mubr.bf16.mxu0 %v256
  %981 = vmatmul.mubr.bf16.gmra.mxu0 %v255
  %v982 = vpop.f32.mrf.mxu0
  %v983 = vadd.f32 %v943, %v982
  %v984 = vpop.f32.mrf.mxu0
  %v985 = vpop.f32.mrf.mxu0
  %v986 = vpop.f32.mrf.mxu0
  %987 = vdwg.mxu0
  %988 = vmatprep.subr.bf16.mxu0 0
  %989 = vmatpush1.bf16.msra.mxu0 %v723
  %990 = vmatprep.subr.bf16.mxu0 0
  %991 = vmatpush1.bf16.msra.mxu0 %v722
  %992 = vmatprep.subr.bf16.mxu0 0
  %993 = vmatpush1.bf16.msra.mxu0 %v721
  %994 = vmatprep.subr.bf16.mxu0 0
  %995 = vmatpush1.bf16.msra.mxu0 %v720
  %996 = vmatprep.subr.bf16.mxu0 0
  %997 = vmatpush1.bf16.msra.mxu0 %v719
  %998 = vmatprep.subr.bf16.mxu0 0
  %999 = vmatpush1.bf16.msra.mxu0 %v718
  %1000 = vmatprep.subr.bf16.mxu0 0
  %1001 = vmatpush1.bf16.msra.mxu0 %v717
  %1002 = vmatprep.subr.bf16.mxu0 0
  %1003 = vmatpush1.bf16.msra.mxu0 %v716
  %1004 = vmatprep.subr.bf16.mxu0 0
  %1005 = vmatpush2.bf16.msra.mxu0 %v731
  %1006 = vmatprep.subr.bf16.mxu0 0
  %1007 = vmatpush2.bf16.msra.mxu0 %v730
  %1008 = vmatprep.subr.bf16.mxu0 0
  %1009 = vmatpush2.bf16.msra.mxu0 %v729
  %1010 = vmatprep.subr.bf16.mxu0 0
  %1011 = vmatpush2.bf16.msra.mxu0 %v728
  %1012 = vmatprep.subr.bf16.mxu0 0
  %1013 = vmatpush2.bf16.msra.mxu0 %v727
  %1014 = vmatprep.subr.bf16.mxu0 0
  %1015 = vmatpush2.bf16.msra.mxu0 %v726
  %1016 = vmatprep.subr.bf16.mxu0 0
  %1017 = vmatpush2.bf16.msra.mxu0 %v725
  %1018 = vmatprep.subr.bf16.mxu0 0
  %1019 = vmatpush2.bf16.msra.mxu0 %v724
  %1020 = vmatprep.mubr.bf16.mxu0 %v258
  %1021 = vmatmul.mubr.bf16.gmra.mxu0 %v257
  %v1022 = vpop.f32.mrf.mxu0
  %v1023 = vadd.f32 %v983, %v1022
  %v1024 = vpop.f32.mrf.mxu0
  %v1025 = vpop.f32.mrf.mxu0
  %v1026 = vpop.f32.mrf.mxu0
  %1027 = vdwg.mxu0
  %1028 = vmatprep.subr.bf16.mxu0 0
  %1029 = vmatpush1.bf16.msra.mxu0 %v739
  %1030 = vmatprep.subr.bf16.mxu0 0
  %1031 = vmatpush1.bf16.msra.mxu0 %v738
  %1032 = vmatprep.subr.bf16.mxu0 0
  %1033 = vmatpush1.bf16.msra.mxu0 %v737
  %1034 = vmatprep.subr.bf16.mxu0 0
  %1035 = vmatpush1.bf16.msra.mxu0 %v736
  %1036 = vmatprep.subr.bf16.mxu0 0
  %1037 = vmatpush1.bf16.msra.mxu0 %v735
  %1038 = vmatprep.subr.bf16.mxu0 0
  %1039 = vmatpush1.bf16.msra.mxu0 %v734
  %1040 = vmatprep.subr.bf16.mxu0 0
  %1041 = vmatpush1.bf16.msra.mxu0 %v733
  %1042 = vmatprep.subr.bf16.mxu0 0
  %1043 = vmatpush1.bf16.msra.mxu0 %v732
  %1044 = vmatprep.subr.bf16.mxu0 0
  %1045 = vmatpush2.bf16.msra.mxu0 %v747
  %1046 = vmatprep.subr.bf16.mxu0 0
  %1047 = vmatpush2.bf16.msra.mxu0 %v746
  %1048 = vmatprep.subr.bf16.mxu0 0
  %1049 = vmatpush2.bf16.msra.mxu0 %v745
  %1050 = vmatprep.subr.bf16.mxu0 0
  %1051 = vmatpush2.bf16.msra.mxu0 %v744
  %1052 = vmatprep.subr.bf16.mxu0 0
  %1053 = vmatpush2.bf16.msra.mxu0 %v743
  %1054 = vmatprep.subr.bf16.mxu0 0
  %1055 = vmatpush2.bf16.msra.mxu0 %v742
  %1056 = vmatprep.subr.bf16.mxu0 0
  %1057 = vmatpush2.bf16.msra.mxu0 %v741
  %1058 = vmatprep.subr.bf16.mxu0 0
  %1059 = vmatpush2.bf16.msra.mxu0 %v740
  %1060 = vmatprep.mubr.bf16.mxu0 %v260
  %1061 = vmatmul.mubr.bf16.gmra.mxu0 %v259
  %v1062 = vpop.f32.mrf.mxu0
  %v1063 = vadd.f32 %v1023, %v1062
  %v1064 = vpop.f32.mrf.mxu0
  %v1065 = vpop.f32.mrf.mxu0
  %v1066 = vpop.f32.mrf.mxu0
  %1067 = vdwg.mxu0
  %1068 = vmatprep.subr.bf16.mxu0 0
  %1069 = vmatpush1.bf16.msra.mxu0 %v755
  %1070 = vmatprep.subr.bf16.mxu0 0
  %1071 = vmatpush1.bf16.msra.mxu0 %v754
  %1072 = vmatprep.subr.bf16.mxu0 0
  %1073 = vmatpush1.bf16.msra.mxu0 %v753
  %1074 = vmatprep.subr.bf16.mxu0 0
  %1075 = vmatpush1.bf16.msra.mxu0 %v752
  %1076 = vmatprep.subr.bf16.mxu0 0
  %1077 = vmatpush1.bf16.msra.mxu0 %v751
  %1078 = vmatprep.subr.bf16.mxu0 0
  %1079 = vmatpush1.bf16.msra.mxu0 %v750
  %1080 = vmatprep.subr.bf16.mxu0 0
  %1081 = vmatpush1.bf16.msra.mxu0 %v749
  %1082 = vmatprep.subr.bf16.mxu0 0
  %1083 = vmatpush1.bf16.msra.mxu0 %v748
  %1084 = vmatprep.subr.bf16.mxu0 0
  %1085 = vmatpush2.bf16.msra.mxu0 %v763
  %1086 = vmatprep.subr.bf16.mxu0 0
  %1087 = vmatpush2.bf16.msra.mxu0 %v762
  %1088 = vmatprep.subr.bf16.mxu0 0
  %1089 = vmatpush2.bf16.msra.mxu0 %v761
  %1090 = vmatprep.subr.bf16.mxu0 0
  %1091 = vmatpush2.bf16.msra.mxu0 %v760
  %1092 = vmatprep.subr.bf16.mxu0 0
  %1093 = vmatpush2.bf16.msra.mxu0 %v759
  %1094 = vmatprep.subr.bf16.mxu0 0
  %1095 = vmatpush2.bf16.msra.mxu0 %v758
  %1096 = vmatprep.subr.bf16.mxu0 0
  %1097 = vmatpush2.bf16.msra.mxu0 %v757
  %1098 = vmatprep.subr.bf16.mxu0 0
  %1099 = vmatpush2.bf16.msra.mxu0 %v756
  %1100 = vmatprep.mubr.bf16.mxu0 %v262
  %1101 = vmatmul.mubr.bf16.gmra.mxu0 %v261
  %v1102 = vpop.f32.mrf.mxu0
  %v1103 = vadd.f32 %v1063, %v1102
  %v1104 = vpop.f32.mrf.mxu0
  %v1105 = vpop.f32.mrf.mxu0
  %v1106 = vpop.f32.mrf.mxu0
  %1107 = vdwg.mxu0
  %1108 = vmatprep.subr.bf16.mxu0 0
  %1109 = vmatpush1.bf16.msra.mxu0 0
  %1110 = vmatprep.subr.bf16.mxu0 0
  %1111 = vmatpush1.bf16.msra.mxu0 0
  %1112 = vmatprep.subr.bf16.mxu0 0
  %1113 = vmatpush1.bf16.msra.mxu0 0
  %1114 = vmatprep.subr.bf16.mxu0 0
  %1115 = vmatpush1.bf16.msra.mxu0 0
  %1116 = vmatprep.subr.bf16.mxu0 0
  %1117 = vmatpush1.bf16.msra.mxu0 0
  %1118 = vmatprep.subr.bf16.mxu0 0
  %1119 = vmatpush1.bf16.msra.mxu0 0
  %1120 = vmatprep.subr.bf16.mxu0 0
  %1121 = vmatpush1.bf16.msra.mxu0 %v765
  %1122 = vmatprep.subr.bf16.mxu0 0
  %1123 = vmatpush1.bf16.msra.mxu0 %v764
  %1124 = vmatprep.subr.bf16.mxu0 0
  %1125 = vmatpush2.bf16.msra.mxu0 0
  %1126 = vmatprep.subr.bf16.mxu0 0
  %1127 = vmatpush2.bf16.msra.mxu0 0
  %1128 = vmatprep.subr.bf16.mxu0 0
  %1129 = vmatpush2.bf16.msra.mxu0 0
  %1130 = vmatprep.subr.bf16.mxu0 0
  %1131 = vmatpush2.bf16.msra.mxu0 0
  %1132 = vmatprep.subr.bf16.mxu0 0
  %1133 = vmatpush2.bf16.msra.mxu0 0
  %1134 = vmatprep.subr.bf16.mxu0 0
  %1135 = vmatpush2.bf16.msra.mxu0 0
  %1136 = vmatprep.subr.bf16.mxu0 0
  %1137 = vmatpush2.bf16.msra.mxu0 0
  %1138 = vmatprep.subr.bf16.mxu0 0
  %1139 = vmatpush2.bf16.msra.mxu0 0
  %1140 = vmatprep.mubr.bf16.mxu0 0
  %1141 = vmatmul.mubr.bf16.gmra.mxu0 %v866
  %v1142 = vpop.f32.mrf.mxu0
  %v1143 = vadd.f32 %v1103, %v1142
  %v1144 = vpop.f32.mrf.mxu0
  %v1145 = vpop.f32.mrf.mxu0
  %v1146 = vpop.f32.mrf.mxu0
  %1147 = vdwg.mxu0
  %v1148 = vmax.f32 %v1143, 0.0
  %v1149 = vpack.c.bf16 %v1148, %v1148
  %v1150 = vld [vmem:[%s3] sm:$0xf]
  %v1151 = vld [vmem:[%s3 + $0x4] sm:$0xf]
  %v1152 = vld [vmem:[%s3 + $0x8] sm:$0xf]
  %v1153 = vld [vmem:[%s3 + $0xc] sm:$0xf]
  %v1154 = vld [vmem:[%s3 + $0x10] sm:$0xf]
  %v1155 = vld [vmem:[%s3 + $0x14] sm:$0xf]
  %v1156 = vld [vmem:[%s3 + $0x18] sm:$0xf]
  %v1157 = vld [vmem:[%s3 + $0x1c] sm:$0xf]
  %v1158 = vld [vmem:[%s3 + $0x20] sm:$0xf]
  %v1159 = vld [vmem:[%s3 + $0x24] sm:$0xf]
  %v1160 = vld [vmem:[%s3 + $0x28] sm:$0xf]
  %v1161 = vld [vmem:[%s3 + $0x2c] sm:$0xf]
  %v1162 = vld [vmem:[%s3 + $0x30] sm:$0xf]
  %v1163 = vld [vmem:[%s3 + $0x34] sm:$0xf]
  %v1164 = vld [vmem:[%s3 + $0x38] sm:$0xf]
  %v1165 = vld [vmem:[%s3 + $0x3c] sm:$0xf]
  %v1166 = vld [vmem:[%s4] sm:$0x1]
  %v1168 = vlaneseq
  %v1169 = vshrl.u32 %v1168, 7
  %v1170 = vsub.s32 0, %v1169
  %v1171 = vrot.slane %v1166, %v1170
  %v1189 = vunpack.c.l.b16 %v1150
  %v1190 = vunpack.c.l.b16 %v1151
  %v1191 = vunpack.c.l.b16 %v1152
  %v1192 = vunpack.c.l.b16 %v1153
  %v1193 = vunpack.c.l.b16 %v1154
  %v1194 = vunpack.c.l.b16 %v1155
  %v1195 = vunpack.c.l.b16 %v1156
  %v1196 = vunpack.c.l.b16 %v1157
  %v1197 = vunpack.c.l.b16 %v1158
  %v1198 = vunpack.c.l.b16 %v1159
  %v1199 = vunpack.c.l.b16 %v1160
  %v1200 = vunpack.c.l.b16 %v1161
  %v1201 = vunpack.c.l.b16 %v1162
  %v1202 = vunpack.c.l.b16 %v1163
  %v1203 = vunpack.c.l.b16 %v1164
  %v1204 = vunpack.c.l.b16 %v1165
  %v1205 = vpack.c.b16 %v1190, %v1189
  %v1206 = vpack.c.b16 %v1192, %v1191
  %v1207 = vpack.c.b16 %v1194, %v1193
  %v1208 = vpack.c.b16 %v1196, %v1195
  %v1209 = vpack.c.b16 %v1198, %v1197
  %v1210 = vpack.c.b16 %v1200, %v1199
  %v1211 = vpack.c.b16 %v1202, %v1201
  %v1212 = vpack.c.b16 %v1204, %v1203
  %1221 = vmatprep.subr.bf16.mxu0 0
  %1222 = vmatpush1.bf16.msra.mxu0 %v1212
  %1223 = vmatprep.subr.bf16.mxu0 0
  %1224 = vmatpush1.bf16.msra.mxu0 %v1211
  %1225 = vmatprep.subr.bf16.mxu0 0
  %1226 = vmatpush1.bf16.msra.mxu0 %v1210
  %1227 = vmatprep.subr.bf16.mxu0 0
  %1228 = vmatpush1.bf16.msra.mxu0 %v1209
  %1229 = vmatprep.subr.bf16.mxu0 0
  %1230 = vmatpush1.bf16.msra.mxu0 %v1208
  %1231 = vmatprep.subr.bf16.mxu0 0
  %1232 = vmatpush1.bf16.msra.mxu0 %v1207
  %1233 = vmatprep.subr.bf16.mxu0 0
  %1234 = vmatpush1.bf16.msra.mxu0 %v1206
  %1235 = vmatprep.subr.bf16.mxu0 0
  %1236 = vmatpush1.bf16.msra.mxu0 %v1205
  %1237 = vmatprep.subr.bf16.mxu0 0
  %1238 = vmatpush2.bf16.msra.mxu0 0
  %1239 = vmatprep.subr.bf16.mxu0 0
  %1240 = vmatpush2.bf16.msra.mxu0 0
  %1241 = vmatprep.subr.bf16.mxu0 0
  %1242 = vmatpush2.bf16.msra.mxu0 0
  %1243 = vmatprep.subr.bf16.mxu0 0
  %1244 = vmatpush2.bf16.msra.mxu0 0
  %1245 = vmatprep.subr.bf16.mxu0 0
  %1246 = vmatpush2.bf16.msra.mxu0 0
  %1247 = vmatprep.subr.bf16.mxu0 0
  %1248 = vmatpush2.bf16.msra.mxu0 0
  %1249 = vmatprep.subr.bf16.mxu0 0
  %1250 = vmatpush2.bf16.msra.mxu0 0
  %1251 = vmatprep.subr.bf16.mxu0 0
  %1252 = vmatpush2.bf16.msra.mxu0 0
  %1253 = vmatprep.mubr.bf16.mxu0 0
  %1254 = vmatmul.mubr.bf16.gmra.mxu0 %v1149
  %v1255 = vpop.f32.mrf.mxu0
  %v1256 = vadd.f32 %v1171, %v1255
  %v1257 = vpop.f32.mrf.mxu0
  %v1258 = vpop.f32.mrf.mxu0
  %v1259 = vpop.f32.mrf.mxu0
  %1260 = vdwg.mxu0
  %vm1261 = vcmask 80896
  %1262 = vst.msk [vmem:[%s5] sm:$0xff] %vm1261, %v1256
  // Predicated region
  $region22: #{cnn_mnist_forward.5} parent=0 // pred_check
    _
  $region23: #{cnn_mnist_forward.5} parent=0 // pred_check_branch
    %1264 = sbr.rel (0) target = $region25
  $region24: #{cnn_mnist_forward.5} parent=0 // pred_region
    _
  $region25: #{cnn_mnist_forward.5} parent=0 // pred_fallthru
    _
  // Predicated region
  $region26: #{cnn_mnist_forward.5} parent=0 // pred_check
    _
  $region27: #{cnn_mnist_forward.5} parent=0 // pred_check_branch
    %1266 = sbr.rel (0) target = $region29
  $region28: #{cnn_mnist_forward.5} parent=0 // pred_region
    _
  $region29: #{cnn_mnist_forward.5} parent=0 // pred_fallthru
    _

</llo_original>
